<compile_context>
chip_gen: v7x
topology: tpu7x:2x2x1
jax: 0.10.0
libtpu: 0.0.40
codegen_flags: <defaults>
</compile_context>

<pallas_src>
import functools

import jax
import jax.numpy as jnp
from jax import lax
from jax.experimental import pallas as pl
from jax.experimental.pallas import tpu as pltpu

BN_EPS = 1e-5


# ----------------------------------------------------------------------------
# Fused kernel: MaxPool2x2 -> [Conv3x3(pad=1) + folded-BN + ReLU] x nb_conv.
# One grid step per sample.  Each conv is 9 accumulated per-tap MXU dots.
# ----------------------------------------------------------------------------
def _downblock_kernel(*refs, nb_conv, Ho, Wo, Cin0, Cout, mm_dtype):
    x_ref = refs[0]
    p_refs = refs[1:1 + 3 * nb_conv]          # (w9, scale, bias) per layer
    o_ref = refs[1 + 3 * nb_conv]
    pad_a = refs[2 + 3 * nb_conv]             # halo scratch, Cin0 channels
    pad_b = refs[3 + 3 * nb_conv] if nb_conv > 1 else None  # halo, Cout chans

    def zero_border(pad, C):
        # Only the border is read by the taps and it is never rewritten; the
        # interior is fully overwritten below, so skip the full-scratch zero.
        rowz = jnp.zeros((Wo + 16, C), mm_dtype)
        pad[0] = rowz
        pad[Ho + 1] = rowz
        colz = jnp.zeros((Ho, 8, C), mm_dtype)      # sublane-aligned width-8
        pad[1:Ho + 1, 0:8, :] = colz                # covers left halo col 7
        pad[1:Ho + 1, 8 + Wo:16 + Wo, :] = colz     # covers right halo col 8+Wo

    def conv_bn_relu(pad, Cin, w_ref, s_ref, b_ref):
        # 9 shifted taps, each a (Ho*Wo, Cin) x (Cin, Cout) contraction
        # accumulated in f32 — no (Ho*Wo, 9*Cin) im2col buffer.
        acc = jnp.zeros((Ho * Wo, Cout), jnp.float32)
        for k in range(9):
            dy, dx = divmod(k, 3)
            tap = pad[dy:dy + Ho, 7 + dx:7 + dx + Wo, :].reshape(Ho * Wo, Cin)
            acc = acc + jnp.dot(tap, w_ref[k],
                                preferred_element_type=jnp.float32)
        # folded eval-mode BN + conv bias + ReLU (f32 epilogue)
        return jnp.maximum(acc * s_ref[...] + b_ref[...], 0.0)

    # Fused MaxPool2d(2): x_ref holds raw rows reshaped (contiguity-preserving)
    # to (1, 2*Ho, Wo, 2*Cin0): column pairs adjacent on lanes, row pairs on
    # the untiled leading dim.
    xx = x_ref[0]                                           # (2*Ho, Wo, 2*Cin0)
    cm = jnp.maximum(xx[..., :Cin0], xx[..., Cin0:])        # column-pair max
    cm = cm.reshape(Ho, 2, Wo, Cin0)
    x = jnp.maximum(cm[:, 0], cm[:, 1])                     # row-pair max -> (Ho, Wo, Cin0)

    # Layer 0: interior stored tile-aligned at sublane offset 8; taps read at
    # offsets 7/8/9 (unaligned reads are cheap).
    zero_border(pad_a, Cin0)
    pad_a[1:Ho + 1, 8:8 + Wo, :] = x.astype(mm_dtype)
    y = conv_bn_relu(pad_a, Cin0, p_refs[0], p_refs[1], p_refs[2])

    # Layers 1..nb_conv-1: intermediate stays in VMEM (no HBM round trip).
    for i in range(1, nb_conv):
        if i == 1:
            zero_border(pad_b, Cout)
        pad_b[1:Ho + 1, 8:8 + Wo, :] = y.reshape(Ho, Wo, Cout).astype(mm_dtype)
        y = conv_bn_relu(pad_b, Cout, p_refs[3 * i], p_refs[3 * i + 1],
                         p_refs[3 * i + 2])

    o_ref[0] = y.astype(o_ref.dtype)


def down_block_pallas(x_nhwc, folded_params, *, mm_dtype=jnp.float32):
    """x: (N, H, W, Cin).  Returns (N, H//2, W//2, Cout) in f32."""
    N, H, W, Cin0 = x_nhwc.shape
    assert H % 2 == 0 and W % 2 == 0, "MaxPool2d(2) path assumes even H, W"
    Ho, Wo = H // 2, W // 2
    assert Wo % 8 == 0, "Wo must be a multiple of 8 (layout-preserving reshapes)"
    nb_conv = len(folded_params)
    Cout = folded_params[0][0].shape[-1]

    # contiguity-preserving reshape (no HBM pass): column pairs -> lane dim
    xr = x_nhwc.reshape(N, H, Wo, 2 * Cin0)

    flat_in = [xr]
    in_specs = [pl.BlockSpec((1, H, Wo, 2 * Cin0), lambda n: (n, 0, 0, 0))]
    for (w9, s, b) in folded_params:
        cin_i = w9.shape[1]
        flat_in += [w9.astype(mm_dtype), s, b]
        in_specs += [
            pl.BlockSpec((9, cin_i, Cout), lambda n: (0, 0, 0)),
            pl.BlockSpec((1, Cout), lambda n: (0, 0)),
            pl.BlockSpec((1, Cout), lambda n: (0, 0)),
        ]

    scratch_shapes = [pltpu.VMEM((Ho + 2, Wo + 16, Cin0), mm_dtype)]
    if nb_conv > 1:
        scratch_shapes.append(pltpu.VMEM((Ho + 2, Wo + 16, Cout), mm_dtype))

    flops = 2 * N * Ho * Wo * 9 * (Cin0 * Cout + (nb_conv - 1) * Cout * Cout)
    bytes_accessed = int(sum(int(a.size) * a.dtype.itemsize for a in flat_in)
                         + N * Ho * Wo * Cout * 4)

    kern = functools.partial(_downblock_kernel, nb_conv=nb_conv, Ho=Ho, Wo=Wo,
                             Cin0=Cin0, Cout=Cout, mm_dtype=mm_dtype)

    out = pl.pallas_call(
        kern,
        out_shape=jax.ShapeDtypeStruct((N, Ho * Wo, Cout), jnp.float32),
        grid=(N,),
        in_specs=in_specs,
        out_specs=pl.BlockSpec((1, Ho * Wo, Cout), lambda n: (n, 0, 0)),
        scratch_shapes=scratch_shapes,
        compiler_params=pltpu.CompilerParams(dimension_semantics=("parallel",)),
        cost_estimate=pl.CostEstimate(flops=flops, transcendentals=0,
                                      bytes_accessed=bytes_accessed),
    )(*flat_in)
    return out.reshape(N, Ho, Wo, Cout)


def down_block_forward(x_nchw, folded_params, *, mm_dtype=jnp.float32):
    x = jnp.transpose(x_nchw, (0, 2, 3, 1))     # NCHW -> NHWC (boundary glue)
    y = down_block_pallas(x, folded_params, mm_dtype=mm_dtype)
    return jnp.transpose(y, (0, 3, 1, 2))       # NHWC -> NCHW


# ----------------------------------------------------------------------------
# Deterministic parameter construction (PyTorch-style raw + kernel-folded).
# ----------------------------------------------------------------------------
def make_downblock_params(key, in_channels, out_channels, nb_conv):
    raw, folded = [], []
    cin = in_channels
    for _ in range(nb_conv):
        cout = out_channels
        key, k1, k2, k3, k4 = jax.random.split(key, 5)
        w_oihw = 0.1 * jax.random.normal(k1, (cout, cin, 3, 3), jnp.float32)
        b_conv = 0.05 * jax.random.normal(k2, (cout,), jnp.float32)
        gamma = 1.0 + 0.1 * jax.random.normal(k3, (cout,), jnp.float32)
        beta = 0.1 * jax.random.normal(k4, (cout,), jnp.float32)
        r_mean = jnp.zeros((cout,), jnp.float32)
        r_var = jnp.ones((cout,), jnp.float32)
        raw.append((w_oihw, b_conv, gamma, beta, r_mean, r_var))

        # Fold BN (eval mode) + conv bias: y = conv(x) * scale + bias
        scale = gamma / jnp.sqrt(r_var + BN_EPS)
        bias = beta + (b_conv - r_mean) * scale
        # OIHW -> (ky, kx, Cin, Cout) -> (9, Cin, Cout); tap k = 3*ky + kx
        w9 = jnp.transpose(w_oihw, (2, 3, 1, 0)).reshape(9, cin, cout)
        folded.append((w9, scale.reshape(1, cout), bias.reshape(1, cout)))
        cin = cout
    return raw, folded


# ----------------------------------------------------------------------------
# Pure-JAX reference of the PyTorch module (eval-mode BN), for validation.
# ----------------------------------------------------------------------------
def reference_forward(x_nchw, raw_params):
    x = lax.reduce_window(x_nchw, -jnp.inf, lax.max,
                          (1, 1, 2, 2), (1, 1, 2, 2), "VALID")
    for (w_oihw, b, gamma, beta, mean, var) in raw_params:
        y = lax.conv_general_dilated(
            x, w_oihw, (1, 1), ((1, 1), (1, 1)),
            dimension_numbers=("NCHW", "OIHW", "NCHW"))
        y = y + b[None, :, None, None]
        y = (y - mean[None, :, None, None]) / jnp.sqrt(var[None, :, None, None] + BN_EPS)
        y = gamma[None, :, None, None] * y + beta[None, :, None, None]
        x = jnp.maximum(y, 0.0)
    return x


if __name__ == "__main__":
    key = jax.random.PRNGKey(0)
    in_channels, out_channels, nb_conv = 4, 8, 2
    N, H, W = 2, 16, 16

    key, kx = jax.random.split(key)
    x = jax.random.normal(kx, (N, in_channels, H, W), jnp.float32)

    raw_params, folded_params = make_downblock_params(
        key, in_channels, out_channels, nb_conv)

    ref = jax.block_until_ready(reference_forward(x, raw_params))

    # f32 MXU operands: must match the f32 reference tightly.
    out = jax.block_until_ready(down_block_forward(x, folded_params))
    assert out.shape == (N, out_channels, H // 2, W // 2), out.shape
    assert jnp.allclose(out, ref, rtol=1e-4, atol=1e-4), (
        float(jnp.max(jnp.abs(out - ref))))

    # bf16 MXU operands (f32 accumulation / f32 epilogue) — the production path
    # on v5e/v6e/v7x; operand rounding dominates, so the check is loose.
    out_bf16 = jax.block_until_ready(
        down_block_forward(x, folded_params, mm_dtype=jnp.bfloat16))
    assert out_bf16.shape == out.shape
    assert jnp.allclose(out_bf16, ref, rtol=1e-1, atol=1e-1), (
        float(jnp.max(jnp.abs(out_bf16 - ref))))

    print("KERNEL_OK")
</pallas_src>

<mosaic_0001>
module attributes {stable_mosaic.version = 11 : i64} {
  func.func @_downblock_kernel(%arg0: i32, %arg1: memref<1x16x8x8xf32, #tpu.memory_space<vmem>>, %arg2: memref<9x4x8xf32, #tpu.memory_space<vmem>>, %arg3: memref<1x8xf32, #tpu.memory_space<vmem>>, %arg4: memref<1x8xf32, #tpu.memory_space<vmem>>, %arg5: memref<9x8x8xf32, #tpu.memory_space<vmem>>, %arg6: memref<1x8xf32, #tpu.memory_space<vmem>>, %arg7: memref<1x8xf32, #tpu.memory_space<vmem>>, %arg8: memref<1x64x8xf32, #tpu.memory_space<vmem>>, %arg9: memref<10x24x4xf32, #tpu.memory_space<vmem>>, %arg10: memref<10x24x8xf32, #tpu.memory_space<vmem>>) attributes {dimension_semantics = [#tpu.dimension_semantics<parallel>], iteration_bounds = array<i64: 2>, scalar_prefetch = 0 : i64, scratch_operands = 2 : i64, tpu.core_type = #tpu.core_type<tc>, window_params = [{transform_indices = @transform_0, window_bounds = array<i64: 1, 16, 8, 8>}, {pipeline_mode = #tpu.pipeline_mode<synchronous>, transform_indices = @transform_1, window_bounds = array<i64: 9, 4, 8>}, {pipeline_mode = #tpu.pipeline_mode<synchronous>, transform_indices = @transform_2, window_bounds = array<i64: 1, 8>}, {pipeline_mode = #tpu.pipeline_mode<synchronous>, transform_indices = @transform_3, window_bounds = array<i64: 1, 8>}, {pipeline_mode = #tpu.pipeline_mode<synchronous>, transform_indices = @transform_4, window_bounds = array<i64: 9, 8, 8>}, {pipeline_mode = #tpu.pipeline_mode<synchronous>, transform_indices = @transform_5, window_bounds = array<i64: 1, 8>}, {pipeline_mode = #tpu.pipeline_mode<synchronous>, transform_indices = @transform_6, window_bounds = array<i64: 1, 8>}, {transform_indices = @transform_7, window_bounds = array<i64: 1, 64, 8>}]} {
    %c0 = arith.constant 0 : index
    %c0_0 = arith.constant 0 : index
    %c0_1 = arith.constant 0 : index
    %c0_2 = arith.constant 0 : index
    %0 = vector.load %arg1[%c0, %c0_0, %c0_1, %c0_2] : memref<1x16x8x8xf32, #tpu.memory_space<vmem>>, vector<1x16x8x8xf32>
    %1 = vector.shape_cast %0 : vector<1x16x8x8xf32> to vector<16x8x8xf32>
    %2 = vector.extract_strided_slice %1 {offsets = [0, 0, 0], sizes = [16, 8, 4], strides = [1, 1, 1]} : vector<16x8x8xf32> to vector<16x8x4xf32>
    %3 = vector.extract_strided_slice %1 {offsets = [0, 0, 4], sizes = [16, 8, 4], strides = [1, 1, 1]} : vector<16x8x8xf32> to vector<16x8x4xf32>
    %4 = arith.maximumf %2, %3 : vector<16x8x4xf32>
    %5 = vector.shape_cast %4 : vector<16x8x4xf32> to vector<8x2x8x4xf32>
    %6 = vector.extract_strided_slice %5 {offsets = [0, 0, 0, 0], sizes = [8, 1, 8, 4], strides = [1, 1, 1, 1]} : vector<8x2x8x4xf32> to vector<8x1x8x4xf32>
    %7 = vector.shape_cast %6 : vector<8x1x8x4xf32> to vector<8x8x4xf32>
    %8 = vector.extract_strided_slice %5 {offsets = [0, 1, 0, 0], sizes = [8, 1, 8, 4], strides = [1, 1, 1, 1]} : vector<8x2x8x4xf32> to vector<8x1x8x4xf32>
    %9 = vector.shape_cast %8 : vector<8x1x8x4xf32> to vector<8x8x4xf32>
    %10 = arith.maximumf %7, %9 : vector<8x8x4xf32>
    %cst = arith.constant 0.000000e+00 : f32
    %11 = vector.broadcast %cst : f32 to vector<24x4xf32>
    %c0_3 = arith.constant 0 : index
    %c0_4 = arith.constant 0 : index
    %c0_5 = arith.constant 0 : index
    %12 = vector.load %arg9[%c0_3, %c0_4, %c0_5] : memref<10x24x4xf32, #tpu.memory_space<vmem>>, vector<1x24x4xf32>
    %13 = vector.shape_cast %12 : vector<1x24x4xf32> to vector<24x4xf32>
    %14 = vector.shape_cast %11 : vector<24x4xf32> to vector<1x24x4xf32>
    tpu.vector_store %arg9[%c0_3, %c0_4, %c0_5], %14 {strides = array<i32>} : memref<10x24x4xf32, #tpu.memory_space<vmem>>, vector<1x24x4xf32>,
    %c9 = arith.constant 9 : index
    %c0_6 = arith.constant 0 : index
    %c0_7 = arith.constant 0 : index
    %15 = vector.load %arg9[%c9, %c0_6, %c0_7] : memref<10x24x4xf32, #tpu.memory_space<vmem>>, vector<1x24x4xf32>
    %16 = vector.shape_cast %15 : vector<1x24x4xf32> to vector<24x4xf32>
    %17 = vector.shape_cast %11 : vector<24x4xf32> to vector<1x24x4xf32>
    tpu.vector_store %arg9[%c9, %c0_6, %c0_7], %17 {strides = array<i32>} : memref<10x24x4xf32, #tpu.memory_space<vmem>>, vector<1x24x4xf32>,
    %cst_8 = arith.constant 0.000000e+00 : f32
    %18 = vector.broadcast %cst_8 : f32 to vector<8x8x4xf32>
    %c1 = arith.constant 1 : index
    %c0_9 = arith.constant 0 : index
    %c0_10 = arith.constant 0 : index
    %19 = vector.load %arg9[%c1, %c0_9, %c0_10] : memref<10x24x4xf32, #tpu.memory_space<vmem>>, vector<8x8x4xf32>
    tpu.vector_store %arg9[%c1, %c0_9, %c0_10], %18 {strides = array<i32>} : memref<10x24x4xf32, #tpu.memory_space<vmem>>, vector<8x8x4xf32>,
    %c1_11 = arith.constant 1 : index
    %c16 = arith.constant 16 : index
    %c0_12 = arith.constant 0 : index
    %20 = vector.load %arg9[%c1_11, %c16, %c0_12] : memref<10x24x4xf32, #tpu.memory_space<vmem>>, vector<8x8x4xf32>
    tpu.vector_store %arg9[%c1_11, %c16, %c0_12], %18 {strides = array<i32>} : memref<10x24x4xf32, #tpu.memory_space<vmem>>, vector<8x8x4xf32>,
    %c1_13 = arith.constant 1 : index
    %c8 = arith.constant 8 : index
    %c0_14 = arith.constant 0 : index
    %21 = vector.load %arg9[%c1_13, %c8, %c0_14] : memref<10x24x4xf32, #tpu.memory_space<vmem>>, vector<8x8x4xf32>
    tpu.vector_store %arg9[%c1_13, %c8, %c0_14], %10 {strides = array<i32>} : memref<10x24x4xf32, #tpu.memory_space<vmem>>, vector<8x8x4xf32>,
    %cst_15 = arith.constant 0.000000e+00 : f32
    %22 = vector.broadcast %cst_15 : f32 to vector<64x8xf32>
    %c0_16 = arith.constant 0 : index
    %c7 = arith.constant 7 : index
    %c0_17 = arith.constant 0 : index
    %23 = vector.load %arg9[%c0_16, %c7, %c0_17] : memref<10x24x4xf32, #tpu.memory_space<vmem>>, vector<8x8x4xf32>
    %24 = vector.shape_cast %23 : vector<8x8x4xf32> to vector<64x4xf32>
    %c0_18 = arith.constant 0 : index
    %c0_19 = arith.constant 0 : index
    %c0_20 = arith.constant 0 : index
    %25 = vector.load %arg2[%c0_18, %c0_19, %c0_20] : memref<9x4x8xf32, #tpu.memory_space<vmem>>, vector<1x4x8xf32>
    %26 = vector.shape_cast %25 : vector<1x4x8xf32> to vector<4x8xf32>
    %cst_21 = arith.constant dense<0.000000e+00> : vector<64x8xf32>
    %27 = tpu.matmul %24, %26, %cst_21 {dimension_numbers = #tpu.dot_dimension_numbers<[1], [0], [0], [1], [0, 0, 1, 1], [], []>} : vector<64x4xf32>, vector<4x8xf32>, vector<64x8xf32> -> vector<64x8xf32>
    %28 = arith.addf %22, %27 : vector<64x8xf32>
    %c0_22 = arith.constant 0 : index
    %c8_23 = arith.constant 8 : index
    %c0_24 = arith.constant 0 : index
    %29 = vector.load %arg9[%c0_22, %c8_23, %c0_24] : memref<10x24x4xf32, #tpu.memory_space<vmem>>, vector<8x8x4xf32>
    %30 = vector.shape_cast %29 : vector<8x8x4xf32> to vector<64x4xf32>
    %c1_25 = arith.constant 1 : index
    %c0_26 = arith.constant 0 : index
    %c0_27 = arith.constant 0 : index
    %31 = vector.load %arg2[%c1_25, %c0_26, %c0_27] : memref<9x4x8xf32, #tpu.memory_space<vmem>>, vector<1x4x8xf32>
    %32 = vector.shape_cast %31 : vector<1x4x8xf32> to vector<4x8xf32>
    %cst_28 = arith.constant dense<0.000000e+00> : vector<64x8xf32>
    %33 = tpu.matmul %30, %32, %cst_28 {dimension_numbers = #tpu.dot_dimension_numbers<[1], [0], [0], [1], [0, 0, 1, 1], [], []>} : vector<64x4xf32>, vector<4x8xf32>, vector<64x8xf32> -> vector<64x8xf32>
    %34 = arith.addf %28, %33 : vector<64x8xf32>
    %c0_29 = arith.constant 0 : index
    %c9_30 = arith.constant 9 : index
    %c0_31 = arith.constant 0 : index
    %35 = vector.load %arg9[%c0_29, %c9_30, %c0_31] : memref<10x24x4xf32, #tpu.memory_space<vmem>>, vector<8x8x4xf32>
    %36 = vector.shape_cast %35 : vector<8x8x4xf32> to vector<64x4xf32>
    %c2 = arith.constant 2 : index
    %c0_32 = arith.constant 0 : index
    %c0_33 = arith.constant 0 : index
    %37 = vector.load %arg2[%c2, %c0_32, %c0_33] : memref<9x4x8xf32, #tpu.memory_space<vmem>>, vector<1x4x8xf32>
    %38 = vector.shape_cast %37 : vector<1x4x8xf32> to vector<4x8xf32>
    %cst_34 = arith.constant dense<0.000000e+00> : vector<64x8xf32>
    %39 = tpu.matmul %36, %38, %cst_34 {dimension_numbers = #tpu.dot_dimension_numbers<[1], [0], [0], [1], [0, 0, 1, 1], [], []>} : vector<64x4xf32>, vector<4x8xf32>, vector<64x8xf32> -> vector<64x8xf32>
    %40 = arith.addf %34, %39 : vector<64x8xf32>
    %c1_35 = arith.constant 1 : index
    %c7_36 = arith.constant 7 : index
    %c0_37 = arith.constant 0 : index
    %41 = vector.load %arg9[%c1_35, %c7_36, %c0_37] : memref<10x24x4xf32, #tpu.memory_space<vmem>>, vector<8x8x4xf32>
    %42 = vector.shape_cast %41 : vector<8x8x4xf32> to vector<64x4xf32>
    %c3 = arith.constant 3 : index
    %c0_38 = arith.constant 0 : index
    %c0_39 = arith.constant 0 : index
    %43 = vector.load %arg2[%c3, %c0_38, %c0_39] : memref<9x4x8xf32, #tpu.memory_space<vmem>>, vector<1x4x8xf32>
    %44 = vector.shape_cast %43 : vector<1x4x8xf32> to vector<4x8xf32>
    %cst_40 = arith.constant dense<0.000000e+00> : vector<64x8xf32>
    %45 = tpu.matmul %42, %44, %cst_40 {dimension_numbers = #tpu.dot_dimension_numbers<[1], [0], [0], [1], [0, 0, 1, 1], [], []>} : vector<64x4xf32>, vector<4x8xf32>, vector<64x8xf32> -> vector<64x8xf32>
    %46 = arith.addf %40, %45 : vector<64x8xf32>
    %c1_41 = arith.constant 1 : index
    %c8_42 = arith.constant 8 : index
    %c0_43 = arith.constant 0 : index
    %47 = vector.load %arg9[%c1_41, %c8_42, %c0_43] : memref<10x24x4xf32, #tpu.memory_space<vmem>>, vector<8x8x4xf32>
    %48 = vector.shape_cast %47 : vector<8x8x4xf32> to vector<64x4xf32>
    %c4 = arith.constant 4 : index
    %c0_44 = arith.constant 0 : index
    %c0_45 = arith.constant 0 : index
    %49 = vector.load %arg2[%c4, %c0_44, %c0_45] : memref<9x4x8xf32, #tpu.memory_space<vmem>>, vector<1x4x8xf32>
    %50 = vector.shape_cast %49 : vector<1x4x8xf32> to vector<4x8xf32>
    %cst_46 = arith.constant dense<0.000000e+00> : vector<64x8xf32>
    %51 = tpu.matmul %48, %50, %cst_46 {dimension_numbers = #tpu.dot_dimension_numbers<[1], [0], [0], [1], [0, 0, 1, 1], [], []>} : vector<64x4xf32>, vector<4x8xf32>, vector<64x8xf32> -> vector<64x8xf32>
    %52 = arith.addf %46, %51 : vector<64x8xf32>
    %c1_47 = arith.constant 1 : index
    %c9_48 = arith.constant 9 : index
    %c0_49 = arith.constant 0 : index
    %53 = vector.load %arg9[%c1_47, %c9_48, %c0_49] : memref<10x24x4xf32, #tpu.memory_space<vmem>>, vector<8x8x4xf32>
    %54 = vector.shape_cast %53 : vector<8x8x4xf32> to vector<64x4xf32>
    %c5 = arith.constant 5 : index
    %c0_50 = arith.constant 0 : index
    %c0_51 = arith.constant 0 : index
    %55 = vector.load %arg2[%c5, %c0_50, %c0_51] : memref<9x4x8xf32, #tpu.memory_space<vmem>>, vector<1x4x8xf32>
    %56 = vector.shape_cast %55 : vector<1x4x8xf32> to vector<4x8xf32>
    %cst_52 = arith.constant dense<0.000000e+00> : vector<64x8xf32>
    %57 = tpu.matmul %54, %56, %cst_52 {dimension_numbers = #tpu.dot_dimension_numbers<[1], [0], [0], [1], [0, 0, 1, 1], [], []>} : vector<64x4xf32>, vector<4x8xf32>, vector<64x8xf32> -> vector<64x8xf32>
    %58 = arith.addf %52, %57 : vector<64x8xf32>
    %c2_53 = arith.constant 2 : index
    %c7_54 = arith.constant 7 : index
    %c0_55 = arith.constant 0 : index
    %59 = vector.load %arg9[%c2_53, %c7_54, %c0_55] : memref<10x24x4xf32, #tpu.memory_space<vmem>>, vector<8x8x4xf32>
    %60 = vector.shape_cast %59 : vector<8x8x4xf32> to vector<64x4xf32>
    %c6 = arith.constant 6 : index
    %c0_56 = arith.constant 0 : index
    %c0_57 = arith.constant 0 : index
    %61 = vector.load %arg2[%c6, %c0_56, %c0_57] : memref<9x4x8xf32, #tpu.memory_space<vmem>>, vector<1x4x8xf32>
    %62 = vector.shape_cast %61 : vector<1x4x8xf32> to vector<4x8xf32>
    %cst_58 = arith.constant dense<0.000000e+00> : vector<64x8xf32>
    %63 = tpu.matmul %60, %62, %cst_58 {dimension_numbers = #tpu.dot_dimension_numbers<[1], [0], [0], [1], [0, 0, 1, 1], [], []>} : vector<64x4xf32>, vector<4x8xf32>, vector<64x8xf32> -> vector<64x8xf32>
    %64 = arith.addf %58, %63 : vector<64x8xf32>
    %c2_59 = arith.constant 2 : index
    %c8_60 = arith.constant 8 : index
    %c0_61 = arith.constant 0 : index
    %65 = vector.load %arg9[%c2_59, %c8_60, %c0_61] : memref<10x24x4xf32, #tpu.memory_space<vmem>>, vector<8x8x4xf32>
    %66 = vector.shape_cast %65 : vector<8x8x4xf32> to vector<64x4xf32>
    %c7_62 = arith.constant 7 : index
    %c0_63 = arith.constant 0 : index
    %c0_64 = arith.constant 0 : index
    %67 = vector.load %arg2[%c7_62, %c0_63, %c0_64] : memref<9x4x8xf32, #tpu.memory_space<vmem>>, vector<1x4x8xf32>
    %68 = vector.shape_cast %67 : vector<1x4x8xf32> to vector<4x8xf32>
    %cst_65 = arith.constant dense<0.000000e+00> : vector<64x8xf32>
    %69 = tpu.matmul %66, %68, %cst_65 {dimension_numbers = #tpu.dot_dimension_numbers<[1], [0], [0], [1], [0, 0, 1, 1], [], []>} : vector<64x4xf32>, vector<4x8xf32>, vector<64x8xf32> -> vector<64x8xf32>
    %70 = arith.addf %64, %69 : vector<64x8xf32>
    %c2_66 = arith.constant 2 : index
    %c9_67 = arith.constant 9 : index
    %c0_68 = arith.constant 0 : index
    %71 = vector.load %arg9[%c2_66, %c9_67, %c0_68] : memref<10x24x4xf32, #tpu.memory_space<vmem>>, vector<8x8x4xf32>
    %72 = vector.shape_cast %71 : vector<8x8x4xf32> to vector<64x4xf32>
    %c8_69 = arith.constant 8 : index
    %c0_70 = arith.constant 0 : index
    %c0_71 = arith.constant 0 : index
    %73 = vector.load %arg2[%c8_69, %c0_70, %c0_71] : memref<9x4x8xf32, #tpu.memory_space<vmem>>, vector<1x4x8xf32>
    %74 = vector.shape_cast %73 : vector<1x4x8xf32> to vector<4x8xf32>
    %cst_72 = arith.constant dense<0.000000e+00> : vector<64x8xf32>
    %75 = tpu.matmul %72, %74, %cst_72 {dimension_numbers = #tpu.dot_dimension_numbers<[1], [0], [0], [1], [0, 0, 1, 1], [], []>} : vector<64x4xf32>, vector<4x8xf32>, vector<64x8xf32> -> vector<64x8xf32>
    %76 = arith.addf %70, %75 : vector<64x8xf32>
    %c0_73 = arith.constant 0 : index
    %c0_74 = arith.constant 0 : index
    %77 = vector.load %arg3[%c0_73, %c0_74] : memref<1x8xf32, #tpu.memory_space<vmem>>, vector<1x8xf32>
    %78 = vector.broadcast %77 : vector<1x8xf32> to vector<64x8xf32>
    %79 = arith.mulf %76, %78 : vector<64x8xf32>
    %c0_75 = arith.constant 0 : index
    %c0_76 = arith.constant 0 : index
    %80 = vector.load %arg4[%c0_75, %c0_76] : memref<1x8xf32, #tpu.memory_space<vmem>>, vector<1x8xf32>
    %81 = vector.broadcast %80 : vector<1x8xf32> to vector<64x8xf32>
    %82 = arith.addf %79, %81 : vector<64x8xf32>
    %cst_77 = arith.constant 0.000000e+00 : f32
    %83 = vector.broadcast %cst_77 : f32 to vector<64x8xf32>
    %84 = arith.maximumf %82, %83 : vector<64x8xf32>
    %cst_78 = arith.constant 0.000000e+00 : f32
    %85 = vector.broadcast %cst_78 : f32 to vector<24x8xf32>
    %c0_79 = arith.constant 0 : index
    %c0_80 = arith.constant 0 : index
    %c0_81 = arith.constant 0 : index
    %86 = vector.load %arg10[%c0_79, %c0_80, %c0_81] : memref<10x24x8xf32, #tpu.memory_space<vmem>>, vector<1x24x8xf32>
    %87 = vector.shape_cast %86 : vector<1x24x8xf32> to vector<24x8xf32>
    %88 = vector.shape_cast %85 : vector<24x8xf32> to vector<1x24x8xf32>
    tpu.vector_store %arg10[%c0_79, %c0_80, %c0_81], %88 {strides = array<i32>} : memref<10x24x8xf32, #tpu.memory_space<vmem>>, vector<1x24x8xf32>,
    %c9_82 = arith.constant 9 : index
    %c0_83 = arith.constant 0 : index
    %c0_84 = arith.constant 0 : index
    %89 = vector.load %arg10[%c9_82, %c0_83, %c0_84] : memref<10x24x8xf32, #tpu.memory_space<vmem>>, vector<1x24x8xf32>
    %90 = vector.shape_cast %89 : vector<1x24x8xf32> to vector<24x8xf32>
    %91 = vector.shape_cast %85 : vector<24x8xf32> to vector<1x24x8xf32>
    tpu.vector_store %arg10[%c9_82, %c0_83, %c0_84], %91 {strides = array<i32>} : memref<10x24x8xf32, #tpu.memory_space<vmem>>, vector<1x24x8xf32>,
    %cst_85 = arith.constant 0.000000e+00 : f32
    %92 = vector.broadcast %cst_85 : f32 to vector<8x8x8xf32>
    %c1_86 = arith.constant 1 : index
    %c0_87 = arith.constant 0 : index
    %c0_88 = arith.constant 0 : index
    %93 = vector.load %arg10[%c1_86, %c0_87, %c0_88] : memref<10x24x8xf32, #tpu.memory_space<vmem>>, vector<8x8x8xf32>
    tpu.vector_store %arg10[%c1_86, %c0_87, %c0_88], %92 {strides = array<i32>} : memref<10x24x8xf32, #tpu.memory_space<vmem>>, vector<8x8x8xf32>,
    %c1_89 = arith.constant 1 : index
    %c16_90 = arith.constant 16 : index
    %c0_91 = arith.constant 0 : index
    %94 = vector.load %arg10[%c1_89, %c16_90, %c0_91] : memref<10x24x8xf32, #tpu.memory_space<vmem>>, vector<8x8x8xf32>
    tpu.vector_store %arg10[%c1_89, %c16_90, %c0_91], %92 {strides = array<i32>} : memref<10x24x8xf32, #tpu.memory_space<vmem>>, vector<8x8x8xf32>,
    %95 = vector.shape_cast %84 : vector<64x8xf32> to vector<8x8x8xf32>
    %c1_92 = arith.constant 1 : index
    %c8_93 = arith.constant 8 : index
    %c0_94 = arith.constant 0 : index
    %96 = vector.load %arg10[%c1_92, %c8_93, %c0_94] : memref<10x24x8xf32, #tpu.memory_space<vmem>>, vector<8x8x8xf32>
    tpu.vector_store %arg10[%c1_92, %c8_93, %c0_94], %95 {strides = array<i32>} : memref<10x24x8xf32, #tpu.memory_space<vmem>>, vector<8x8x8xf32>,
    %cst_95 = arith.constant 0.000000e+00 : f32
    %97 = vector.broadcast %cst_95 : f32 to vector<64x8xf32>
    %c0_96 = arith.constant 0 : index
    %c7_97 = arith.constant 7 : index
    %c0_98 = arith.constant 0 : index
    %98 = vector.load %arg10[%c0_96, %c7_97, %c0_98] : memref<10x24x8xf32, #tpu.memory_space<vmem>>, vector<8x8x8xf32>
    %99 = vector.shape_cast %98 : vector<8x8x8xf32> to vector<64x8xf32>
    %c0_99 = arith.constant 0 : index
    %c0_100 = arith.constant 0 : index
    %c0_101 = arith.constant 0 : index
    %100 = vector.load %arg5[%c0_99, %c0_100, %c0_101] : memref<9x8x8xf32, #tpu.memory_space<vmem>>, vector<1x8x8xf32>
    %101 = vector.shape_cast %100 : vector<1x8x8xf32> to vector<8x8xf32>
    %cst_102 = arith.constant dense<0.000000e+00> : vector<64x8xf32>
    %102 = tpu.matmul %99, %101, %cst_102 {dimension_numbers = #tpu.dot_dimension_numbers<[1], [0], [0], [1], [0, 0, 1, 1], [], []>} : vector<64x8xf32>, vector<8x8xf32>, vector<64x8xf32> -> vector<64x8xf32>
    %103 = arith.addf %97, %102 : vector<64x8xf32>
    %c0_103 = arith.constant 0 : index
    %c8_104 = arith.constant 8 : index
    %c0_105 = arith.constant 0 : index
    %104 = vector.load %arg10[%c0_103, %c8_104, %c0_105] : memref<10x24x8xf32, #tpu.memory_space<vmem>>, vector<8x8x8xf32>
    %105 = vector.shape_cast %104 : vector<8x8x8xf32> to vector<64x8xf32>
    %c1_106 = arith.constant 1 : index
    %c0_107 = arith.constant 0 : index
    %c0_108 = arith.constant 0 : index
    %106 = vector.load %arg5[%c1_106, %c0_107, %c0_108] : memref<9x8x8xf32, #tpu.memory_space<vmem>>, vector<1x8x8xf32>
    %107 = vector.shape_cast %106 : vector<1x8x8xf32> to vector<8x8xf32>
    %cst_109 = arith.constant dense<0.000000e+00> : vector<64x8xf32>
    %108 = tpu.matmul %105, %107, %cst_109 {dimension_numbers = #tpu.dot_dimension_numbers<[1], [0], [0], [1], [0, 0, 1, 1], [], []>} : vector<64x8xf32>, vector<8x8xf32>, vector<64x8xf32> -> vector<64x8xf32>
    %109 = arith.addf %103, %108 : vector<64x8xf32>
    %c0_110 = arith.constant 0 : index
    %c9_111 = arith.constant 9 : index
    %c0_112 = arith.constant 0 : index
    %110 = vector.load %arg10[%c0_110, %c9_111, %c0_112] : memref<10x24x8xf32, #tpu.memory_space<vmem>>, vector<8x8x8xf32>
    %111 = vector.shape_cast %110 : vector<8x8x8xf32> to vector<64x8xf32>
    %c2_113 = arith.constant 2 : index
    %c0_114 = arith.constant 0 : index
    %c0_115 = arith.constant 0 : index
    %112 = vector.load %arg5[%c2_113, %c0_114, %c0_115] : memref<9x8x8xf32, #tpu.memory_space<vmem>>, vector<1x8x8xf32>
    %113 = vector.shape_cast %112 : vector<1x8x8xf32> to vector<8x8xf32>
    %cst_116 = arith.constant dense<0.000000e+00> : vector<64x8xf32>
    %114 = tpu.matmul %111, %113, %cst_116 {dimension_numbers = #tpu.dot_dimension_numbers<[1], [0], [0], [1], [0, 0, 1, 1], [], []>} : vector<64x8xf32>, vector<8x8xf32>, vector<64x8xf32> -> vector<64x8xf32>
    %115 = arith.addf %109, %114 : vector<64x8xf32>
    %c1_117 = arith.constant 1 : index
    %c7_118 = arith.constant 7 : index
    %c0_119 = arith.constant 0 : index
    %116 = vector.load %arg10[%c1_117, %c7_118, %c0_119] : memref<10x24x8xf32, #tpu.memory_space<vmem>>, vector<8x8x8xf32>
    %117 = vector.shape_cast %116 : vector<8x8x8xf32> to vector<64x8xf32>
    %c3_120 = arith.constant 3 : index
    %c0_121 = arith.constant 0 : index
    %c0_122 = arith.constant 0 : index
    %118 = vector.load %arg5[%c3_120, %c0_121, %c0_122] : memref<9x8x8xf32, #tpu.memory_space<vmem>>, vector<1x8x8xf32>
    %119 = vector.shape_cast %118 : vector<1x8x8xf32> to vector<8x8xf32>
    %cst_123 = arith.constant dense<0.000000e+00> : vector<64x8xf32>
    %120 = tpu.matmul %117, %119, %cst_123 {dimension_numbers = #tpu.dot_dimension_numbers<[1], [0], [0], [1], [0, 0, 1, 1], [], []>} : vector<64x8xf32>, vector<8x8xf32>, vector<64x8xf32> -> vector<64x8xf32>
    %121 = arith.addf %115, %120 : vector<64x8xf32>
    %c1_124 = arith.constant 1 : index
    %c8_125 = arith.constant 8 : index
    %c0_126 = arith.constant 0 : index
    %122 = vector.load %arg10[%c1_124, %c8_125, %c0_126] : memref<10x24x8xf32, #tpu.memory_space<vmem>>, vector<8x8x8xf32>
    %123 = vector.shape_cast %122 : vector<8x8x8xf32> to vector<64x8xf32>
    %c4_127 = arith.constant 4 : index
    %c0_128 = arith.constant 0 : index
    %c0_129 = arith.constant 0 : index
    %124 = vector.load %arg5[%c4_127, %c0_128, %c0_129] : memref<9x8x8xf32, #tpu.memory_space<vmem>>, vector<1x8x8xf32>
    %125 = vector.shape_cast %124 : vector<1x8x8xf32> to vector<8x8xf32>
    %cst_130 = arith.constant dense<0.000000e+00> : vector<64x8xf32>
    %126 = tpu.matmul %123, %125, %cst_130 {dimension_numbers = #tpu.dot_dimension_numbers<[1], [0], [0], [1], [0, 0, 1, 1], [], []>} : vector<64x8xf32>, vector<8x8xf32>, vector<64x8xf32> -> vector<64x8xf32>
    %127 = arith.addf %121, %126 : vector<64x8xf32>
    %c1_131 = arith.constant 1 : index
    %c9_132 = arith.constant 9 : index
    %c0_133 = arith.constant 0 : index
    %128 = vector.load %arg10[%c1_131, %c9_132, %c0_133] : memref<10x24x8xf32, #tpu.memory_space<vmem>>, vector<8x8x8xf32>
    %129 = vector.shape_cast %128 : vector<8x8x8xf32> to vector<64x8xf32>
    %c5_134 = arith.constant 5 : index
    %c0_135 = arith.constant 0 : index
    %c0_136 = arith.constant 0 : index
    %130 = vector.load %arg5[%c5_134, %c0_135, %c0_136] : memref<9x8x8xf32, #tpu.memory_space<vmem>>, vector<1x8x8xf32>
    %131 = vector.shape_cast %130 : vector<1x8x8xf32> to vector<8x8xf32>
    %cst_137 = arith.constant dense<0.000000e+00> : vector<64x8xf32>
    %132 = tpu.matmul %129, %131, %cst_137 {dimension_numbers = #tpu.dot_dimension_numbers<[1], [0], [0], [1], [0, 0, 1, 1], [], []>} : vector<64x8xf32>, vector<8x8xf32>, vector<64x8xf32> -> vector<64x8xf32>
    %133 = arith.addf %127, %132 : vector<64x8xf32>
    %c2_138 = arith.constant 2 : index
    %c7_139 = arith.constant 7 : index
    %c0_140 = arith.constant 0 : index
    %134 = vector.load %arg10[%c2_138, %c7_139, %c0_140] : memref<10x24x8xf32, #tpu.memory_space<vmem>>, vector<8x8x8xf32>
    %135 = vector.shape_cast %134 : vector<8x8x8xf32> to vector<64x8xf32>
    %c6_141 = arith.constant 6 : index
    %c0_142 = arith.constant 0 : index
    %c0_143 = arith.constant 0 : index
    %136 = vector.load %arg5[%c6_141, %c0_142, %c0_143] : memref<9x8x8xf32, #tpu.memory_space<vmem>>, vector<1x8x8xf32>
    %137 = vector.shape_cast %136 : vector<1x8x8xf32> to vector<8x8xf32>
    %cst_144 = arith.constant dense<0.000000e+00> : vector<64x8xf32>
    %138 = tpu.matmul %135, %137, %cst_144 {dimension_numbers = #tpu.dot_dimension_numbers<[1], [0], [0], [1], [0, 0, 1, 1], [], []>} : vector<64x8xf32>, vector<8x8xf32>, vector<64x8xf32> -> vector<64x8xf32>
    %139 = arith.addf %133, %138 : vector<64x8xf32>
    %c2_145 = arith.constant 2 : index
    %c8_146 = arith.constant 8 : index
    %c0_147 = arith.constant 0 : index
    %140 = vector.load %arg10[%c2_145, %c8_146, %c0_147] : memref<10x24x8xf32, #tpu.memory_space<vmem>>, vector<8x8x8xf32>
    %141 = vector.shape_cast %140 : vector<8x8x8xf32> to vector<64x8xf32>
    %c7_148 = arith.constant 7 : index
    %c0_149 = arith.constant 0 : index
    %c0_150 = arith.constant 0 : index
    %142 = vector.load %arg5[%c7_148, %c0_149, %c0_150] : memref<9x8x8xf32, #tpu.memory_space<vmem>>, vector<1x8x8xf32>
    %143 = vector.shape_cast %142 : vector<1x8x8xf32> to vector<8x8xf32>
    %cst_151 = arith.constant dense<0.000000e+00> : vector<64x8xf32>
    %144 = tpu.matmul %141, %143, %cst_151 {dimension_numbers = #tpu.dot_dimension_numbers<[1], [0], [0], [1], [0, 0, 1, 1], [], []>} : vector<64x8xf32>, vector<8x8xf32>, vector<64x8xf32> -> vector<64x8xf32>
    %145 = arith.addf %139, %144 : vector<64x8xf32>
    %c2_152 = arith.constant 2 : index
    %c9_153 = arith.constant 9 : index
    %c0_154 = arith.constant 0 : index
    %146 = vector.load %arg10[%c2_152, %c9_153, %c0_154] : memref<10x24x8xf32, #tpu.memory_space<vmem>>, vector<8x8x8xf32>
    %147 = vector.shape_cast %146 : vector<8x8x8xf32> to vector<64x8xf32>
    %c8_155 = arith.constant 8 : index
    %c0_156 = arith.constant 0 : index
    %c0_157 = arith.constant 0 : index
    %148 = vector.load %arg5[%c8_155, %c0_156, %c0_157] : memref<9x8x8xf32, #tpu.memory_space<vmem>>, vector<1x8x8xf32>
    %149 = vector.shape_cast %148 : vector<1x8x8xf32> to vector<8x8xf32>
    %cst_158 = arith.constant dense<0.000000e+00> : vector<64x8xf32>
    %150 = tpu.matmul %147, %149, %cst_158 {dimension_numbers = #tpu.dot_dimension_numbers<[1], [0], [0], [1], [0, 0, 1, 1], [], []>} : vector<64x8xf32>, vector<8x8xf32>, vector<64x8xf32> -> vector<64x8xf32>
    %151 = arith.addf %145, %150 : vector<64x8xf32>
    %c0_159 = arith.constant 0 : index
    %c0_160 = arith.constant 0 : index
    %152 = vector.load %arg6[%c0_159, %c0_160] : memref<1x8xf32, #tpu.memory_space<vmem>>, vector<1x8xf32>
    %153 = vector.broadcast %152 : vector<1x8xf32> to vector<64x8xf32>
    %154 = arith.mulf %151, %153 : vector<64x8xf32>
    %c0_161 = arith.constant 0 : index
    %c0_162 = arith.constant 0 : index
    %155 = vector.load %arg7[%c0_161, %c0_162] : memref<1x8xf32, #tpu.memory_space<vmem>>, vector<1x8xf32>
    %156 = vector.broadcast %155 : vector<1x8xf32> to vector<64x8xf32>
    %157 = arith.addf %154, %156 : vector<64x8xf32>
    %cst_163 = arith.constant 0.000000e+00 : f32
    %158 = vector.broadcast %cst_163 : f32 to vector<64x8xf32>
    %159 = arith.maximumf %157, %158 : vector<64x8xf32>
    %c0_164 = arith.constant 0 : index
    %c0_165 = arith.constant 0 : index
    %c0_166 = arith.constant 0 : index
    %160 = vector.load %arg8[%c0_164, %c0_165, %c0_166] : memref<1x64x8xf32, #tpu.memory_space<vmem>>, vector<1x64x8xf32>
    %161 = vector.shape_cast %160 : vector<1x64x8xf32> to vector<64x8xf32>
    %162 = vector.shape_cast %159 : vector<64x8xf32> to vector<1x64x8xf32>
    tpu.vector_store %arg8[%c0_164, %c0_165, %c0_166], %162 {strides = array<i32>} : memref<1x64x8xf32, #tpu.memory_space<vmem>>, vector<1x64x8xf32>,
    return
  }
  func.func @transform_0(%arg0: i32) -> (i32, i32, i32, i32) {
    %c0_i32 = arith.constant 0 : i32
    %c0_i32_0 = arith.constant 0 : i32
    %c0_i32_1 = arith.constant 0 : i32
    %c0_i32_2 = arith.constant 0 : i32
    return %arg0, %c0_i32, %c0_i32_0, %c0_i32_1 : i32, i32, i32, i32
  }
  func.func @transform_1(%arg0: i32) -> (i32, i32, i32) {
    %c0_i32 = arith.constant 0 : i32
    %c0_i32_0 = arith.constant 0 : i32
    %c0_i32_1 = arith.constant 0 : i32
    %c0_i32_2 = arith.constant 0 : i32
    return %c0_i32, %c0_i32_0, %c0_i32_1 : i32, i32, i32
  }
  func.func @transform_2(%arg0: i32) -> (i32, i32) {
    %c0_i32 = arith.constant 0 : i32
    %c0_i32_0 = arith.constant 0 : i32
    %c0_i32_1 = arith.constant 0 : i32
    return %c0_i32, %c0_i32_0 : i32, i32
  }
  func.func @transform_3(%arg0: i32) -> (i32, i32) {
    %c0_i32 = arith.constant 0 : i32
    %c0_i32_0 = arith.constant 0 : i32
    %c0_i32_1 = arith.constant 0 : i32
    return %c0_i32, %c0_i32_0 : i32, i32
  }
  func.func @transform_4(%arg0: i32) -> (i32, i32, i32) {
    %c0_i32 = arith.constant 0 : i32
    %c0_i32_0 = arith.constant 0 : i32
    %c0_i32_1 = arith.constant 0 : i32
    %c0_i32_2 = arith.constant 0 : i32
    return %c0_i32, %c0_i32_0, %c0_i32_1 : i32, i32, i32
  }
  func.func @transform_5(%arg0: i32) -> (i32, i32) {
    %c0_i32 = arith.constant 0 : i32
    %c0_i32_0 = arith.constant 0 : i32
    %c0_i32_1 = arith.constant 0 : i32
    return %c0_i32, %c0_i32_0 : i32, i32
  }
  func.func @transform_6(%arg0: i32) -> (i32, i32) {
    %c0_i32 = arith.constant 0 : i32
    %c0_i32_0 = arith.constant 0 : i32
    %c0_i32_1 = arith.constant 0 : i32
    return %c0_i32, %c0_i32_0 : i32, i32
  }
  func.func @transform_7(%arg0: i32) -> (i32, i32, i32) {
    %c0_i32 = arith.constant 0 : i32
    %c0_i32_0 = arith.constant 0 : i32
    %c0_i32_1 = arith.constant 0 : i32
    return %arg0, %c0_i32, %c0_i32_0 : i32, i32, i32
  }
}

</mosaic_0001>

<llo_original>
// kernel: tpu_custom_call.1
$region0: #{tpu_custom_call.1}
  #allocation0 [shape = 'u32[]', space=smem, size = 0x4, offset = 0x4, fixed_abs, tag = 'smem constant byte address 0x4 - core index']
  #allocation1 [shape = 'u32[144,128]{1,0:T(1,128)}', space=vmem, size = 0x12000, scoped, tag = 'internal scratch']
  #allocation2 [shape = 'f32[10,24,4]{2,1,0:T(8,128)}', space=vmem, size = 0x1e000, scoped, tag = 'scratch operand']
  #allocation3 [shape = 'f32[10,24,8]{2,1,0:T(8,128)}', space=vmem, size = 0x1e000, scoped, tag = 'scratch operand']
  %s0 = inlined_call_operand.vmem [shape: f32[2,16,8,8], index: 0, kind: input, shape index: {}]
  %s1 = inlined_call_operand.vmem [shape: f32[9,4,8], index: 1, kind: input, shape index: {}]
  %s2 = inlined_call_operand.vmem [shape: f32[1,8], index: 2, kind: input, shape index: {}]
  %s3 = inlined_call_operand.vmem [shape: f32[1,8], index: 3, kind: input, shape index: {}]
  %s4 = inlined_call_operand.vmem [shape: f32[9,8,8], index: 4, kind: input, shape index: {}]
  %s5 = inlined_call_operand.vmem [shape: f32[1,8], index: 5, kind: input, shape index: {}]
  %s6 = inlined_call_operand.vmem [shape: f32[1,8], index: 6, kind: input, shape index: {}]
  %s7 = inlined_call_operand.vmem [shape: f32[2,64,8], index: 7, kind: output, shape index: {}]
  %s8 = sld [smem:[#allocation0]]
  $region61: #{tpu_custom_call.1} parent=0
    _
  %s10 = ssub.s32 1, %s8
  %s11 = scalar_select 0, %s10, %s8
  loop: start=0, step=1, limit=4
  $region2: #{tpu_custom_call.1} parent=0 // loop_pre_header
    _
  $region3: #{tpu_custom_call.1} parent=0 // loop_header
    %s13 = sphi 0, %s17
    %p14 = scmp.ge.s32.totalorder %s13, 4
    %s23 = sphi 0, %s25
    %s26 = sphi 0, %s23
    %s27 = sphi 0, %s26
    %s43 = sphi 0, %s27
    %s47 = sphi 0, %s47
    %s49 = sphi 0, %s47
    %s50 = sphi 0, %s49
    %s64 = sphi 0, %s50
    %s68 = sphi 0, %s68
    %s70 = sphi 0, %s68
    %s71 = sphi 0, %s70
    %s85 = sphi 0, %s71
    %s89 = sphi 0, %s89
    %s91 = sphi 0, %s89
    %s92 = sphi 0, %s91
    %s106 = sphi 0, %s92
    %s110 = sphi 0, %s110
    %s112 = sphi 0, %s110
    %s113 = sphi 0, %s112
    %s127 = sphi 0, %s113
    %s131 = sphi 0, %s131
    %s133 = sphi 0, %s131
    %s134 = sphi 0, %s133
    %s148 = sphi 0, %s134
    %s152 = sphi 0, %s152
    %s154 = sphi 0, %s152
    %s155 = sphi 0, %s154
    %s169 = sphi 0, %s155
    %s175 = sphi 0, %s177
    %s178 = sphi 0, %s175
    %s179 = sphi 0, %s178
    %s195 = sphi 0, %s179
  $region4: #{tpu_custom_call.1} parent=0 // loop_header_branch
    %16 = sbr.rel (%p14) target = $region8
  $region5: #{tpu_custom_call.1} parent=0 // loop_body
    %s18 = ssub.s32 %s13, 1
    %s19 = ssub.s32 %s13, 2
    %s20 = sadd.s32 %s13, 1
    %s21 = ssub.s32 %s13, %s20
    %p22 = scmp.eq.s32.totalorder %s21, 0
    %s24 = sadd.s32 %s23, 1
    %s25 = scalar_select %p22, %s23, %s24
    %p28 = pneg %p22
    %p29 = scmp.eq.s32.totalorder %s13, 1
    %p30 = por %p28, %p29
    %p31 = scmp.ne.s32.totalorder %s23, %s26
    %p32 = scmp.eq.s32.totalorder %s13, 0
    %p33 = por %p31, %p32
    %p34 = scmp.ne.s32.totalorder %s23, %s26
    %p35 = scmp.eq.s32.totalorder %s18, 1
    %p36 = por %p34, %p35
    %p37 = scmp.ne.s32.totalorder %s26, %s27
    %p38 = scmp.eq.s32.totalorder %s18, 0
    %p39 = por %p37, %p38
    %p40 = scmp.ne.s32.totalorder %s26, %s27
    %p41 = scmp.eq.s32.totalorder %s19, 1
    %p42 = por %p40, %p41
    %p44 = scmp.ne.s32.totalorder %s27, %s43
    %p45 = scmp.eq.s32.totalorder %s19, 0
    %p46 = por %p44, %p45
    %s48 = sadd.s32 %s47, 1
    %p51 = scmp.eq.s32.totalorder %s13, 1
    %p52 = scmp.ne.s32.totalorder %s47, %s49
    %p53 = scmp.eq.s32.totalorder %s13, 0
    %p54 = por %p52, %p53
    %p55 = scmp.ne.s32.totalorder %s47, %s49
    %p56 = scmp.eq.s32.totalorder %s18, 1
    %p57 = por %p55, %p56
    %p58 = scmp.ne.s32.totalorder %s49, %s50
    %p59 = scmp.eq.s32.totalorder %s18, 0
    %p60 = por %p58, %p59
    %p61 = scmp.ne.s32.totalorder %s49, %s50
    %p62 = scmp.eq.s32.totalorder %s19, 1
    %p63 = por %p61, %p62
    %p65 = scmp.ne.s32.totalorder %s50, %s64
    %p66 = scmp.eq.s32.totalorder %s19, 0
    %p67 = por %p65, %p66
    %s69 = sadd.s32 %s68, 1
    %p72 = scmp.eq.s32.totalorder %s13, 1
    %p73 = scmp.ne.s32.totalorder %s68, %s70
    %p74 = scmp.eq.s32.totalorder %s13, 0
    %p75 = por %p73, %p74
    %p76 = scmp.ne.s32.totalorder %s68, %s70
    %p77 = scmp.eq.s32.totalorder %s18, 1
    %p78 = por %p76, %p77
    %p79 = scmp.ne.s32.totalorder %s70, %s71
    %p80 = scmp.eq.s32.totalorder %s18, 0
    %p81 = por %p79, %p80
    %p82 = scmp.ne.s32.totalorder %s70, %s71
    %p83 = scmp.eq.s32.totalorder %s19, 1
    %p84 = por %p82, %p83
    %p86 = scmp.ne.s32.totalorder %s71, %s85
    %p87 = scmp.eq.s32.totalorder %s19, 0
    %p88 = por %p86, %p87
    %s90 = sadd.s32 %s89, 1
    %p93 = scmp.eq.s32.totalorder %s13, 1
    %p94 = scmp.ne.s32.totalorder %s89, %s91
    %p95 = scmp.eq.s32.totalorder %s13, 0
    %p96 = por %p94, %p95
    %p97 = scmp.ne.s32.totalorder %s89, %s91
    %p98 = scmp.eq.s32.totalorder %s18, 1
    %p99 = por %p97, %p98
    %p100 = scmp.ne.s32.totalorder %s91, %s92
    %p101 = scmp.eq.s32.totalorder %s18, 0
    %p102 = por %p100, %p101
    %p103 = scmp.ne.s32.totalorder %s91, %s92
    %p104 = scmp.eq.s32.totalorder %s19, 1
    %p105 = por %p103, %p104
    %p107 = scmp.ne.s32.totalorder %s92, %s106
    %p108 = scmp.eq.s32.totalorder %s19, 0
    %p109 = por %p107, %p108
    %s111 = sadd.s32 %s110, 1
    %p114 = scmp.eq.s32.totalorder %s13, 1
    %p115 = scmp.ne.s32.totalorder %s110, %s112
    %p116 = scmp.eq.s32.totalorder %s13, 0
    %p117 = por %p115, %p116
    %p118 = scmp.ne.s32.totalorder %s110, %s112
    %p119 = scmp.eq.s32.totalorder %s18, 1
    %p120 = por %p118, %p119
    %p121 = scmp.ne.s32.totalorder %s112, %s113
    %p122 = scmp.eq.s32.totalorder %s18, 0
    %p123 = por %p121, %p122
    %p124 = scmp.ne.s32.totalorder %s112, %s113
    %p125 = scmp.eq.s32.totalorder %s19, 1
    %p126 = por %p124, %p125
    %p128 = scmp.ne.s32.totalorder %s113, %s127
    %p129 = scmp.eq.s32.totalorder %s19, 0
    %p130 = por %p128, %p129
    %s132 = sadd.s32 %s131, 1
    %p135 = scmp.eq.s32.totalorder %s13, 1
    %p136 = scmp.ne.s32.totalorder %s131, %s133
    %p137 = scmp.eq.s32.totalorder %s13, 0
    %p138 = por %p136, %p137
    %p139 = scmp.ne.s32.totalorder %s131, %s133
    %p140 = scmp.eq.s32.totalorder %s18, 1
    %p141 = por %p139, %p140
    %p142 = scmp.ne.s32.totalorder %s133, %s134
    %p143 = scmp.eq.s32.totalorder %s18, 0
    %p144 = por %p142, %p143
    %p145 = scmp.ne.s32.totalorder %s133, %s134
    %p146 = scmp.eq.s32.totalorder %s19, 1
    %p147 = por %p145, %p146
    %p149 = scmp.ne.s32.totalorder %s134, %s148
    %p150 = scmp.eq.s32.totalorder %s19, 0
    %p151 = por %p149, %p150
    %s153 = sadd.s32 %s152, 1
    %p156 = scmp.eq.s32.totalorder %s13, 1
    %p157 = scmp.ne.s32.totalorder %s152, %s154
    %p158 = scmp.eq.s32.totalorder %s13, 0
    %p159 = por %p157, %p158
    %p160 = scmp.ne.s32.totalorder %s152, %s154
    %p161 = scmp.eq.s32.totalorder %s18, 1
    %p162 = por %p160, %p161
    %p163 = scmp.ne.s32.totalorder %s154, %s155
    %p164 = scmp.eq.s32.totalorder %s18, 0
    %p165 = por %p163, %p164
    %p166 = scmp.ne.s32.totalorder %s154, %s155
    %p167 = scmp.eq.s32.totalorder %s19, 1
    %p168 = por %p166, %p167
    %p170 = scmp.ne.s32.totalorder %s155, %s169
    %p171 = scmp.eq.s32.totalorder %s19, 0
    %p172 = por %p170, %p171
    %s173 = ssub.s32 %s13, %s20
    %p174 = scmp.eq.s32.totalorder %s173, 0
    %s176 = sadd.s32 %s175, 1
    %s177 = scalar_select %p174, %s175, %s176
    %p180 = pneg %p174
    %p181 = scmp.eq.s32.totalorder %s13, 1
    %p182 = por %p180, %p181
    %p183 = scmp.ne.s32.totalorder %s175, %s178
    %p184 = scmp.eq.s32.totalorder %s13, 0
    %p185 = por %p183, %p184
    %p186 = scmp.ne.s32.totalorder %s175, %s178
    %p187 = scmp.eq.s32.totalorder %s18, 1
    %p188 = por %p186, %p187
    %p189 = scmp.ne.s32.totalorder %s178, %s179
    %p190 = scmp.eq.s32.totalorder %s18, 0
    %p191 = por %p189, %p190
    %p192 = scmp.ne.s32.totalorder %s178, %s179
    %p193 = scmp.eq.s32.totalorder %s19, 1
    %p194 = por %p192, %p193
    %p196 = scmp.ne.s32.totalorder %s179, %s195
    %p197 = scmp.eq.s32.totalorder %s19, 0
    %p198 = por %p196, %p197
    %p199 = scmp.le.s32.totalorder 1, %s13
    %p200 = scmp.lt.s32.totalorder %s13, 3
    %p201 = pnand %p199, %p200
    %p202 = pneg %p201
    // Predicated region
    $region9: #{tpu_custom_call.1} parent=5 // pred_check
      _
    $region10: #{tpu_custom_call.1} parent=5 // pred_check_branch
      %204 = sbr.rel (%p201) target = $region12
    $region11: #{tpu_custom_call.1} parent=5 // pred_region
      %s205 = ssub.s32 %s13, 1
      // Predicated region
      $region13: #{tpu_custom_call.1} parent=11 // pred_check
        %p206 = pneg %p60
      $region14: #{tpu_custom_call.1} parent=11 // pred_check_branch
        %208 = sbr.rel (%p206) target = $region16
      $region15: #{tpu_custom_call.1} parent=11 // pred_region
        _
      $region16: #{tpu_custom_call.1} parent=11 // pred_fallthru
        _
      // Predicated region
      $region17: #{tpu_custom_call.1} parent=11 // pred_check
        %p209 = pneg %p81
      $region18: #{tpu_custom_call.1} parent=11 // pred_check_branch
        %211 = sbr.rel (%p209) target = $region20
      $region19: #{tpu_custom_call.1} parent=11 // pred_region
        _
      $region20: #{tpu_custom_call.1} parent=11 // pred_fallthru
        _
      // Predicated region
      $region21: #{tpu_custom_call.1} parent=11 // pred_check
        %p212 = pneg %p102
      $region22: #{tpu_custom_call.1} parent=11 // pred_check_branch
        %214 = sbr.rel (%p212) target = $region24
      $region23: #{tpu_custom_call.1} parent=11 // pred_region
        _
      $region24: #{tpu_custom_call.1} parent=11 // pred_fallthru
        _
      // Predicated region
      $region25: #{tpu_custom_call.1} parent=11 // pred_check
        %p215 = pneg %p123
      $region26: #{tpu_custom_call.1} parent=11 // pred_check_branch
        %217 = sbr.rel (%p215) target = $region28
      $region27: #{tpu_custom_call.1} parent=11 // pred_region
        _
      $region28: #{tpu_custom_call.1} parent=11 // pred_fallthru
        _
      // Predicated region
      $region29: #{tpu_custom_call.1} parent=11 // pred_check
        %p218 = pneg %p144
      $region30: #{tpu_custom_call.1} parent=11 // pred_check_branch
        %220 = sbr.rel (%p218) target = $region32
      $region31: #{tpu_custom_call.1} parent=11 // pred_region
        _
      $region32: #{tpu_custom_call.1} parent=11 // pred_fallthru
        _
      // Predicated region
      $region33: #{tpu_custom_call.1} parent=11 // pred_check
        %p221 = pneg %p165
      $region34: #{tpu_custom_call.1} parent=11 // pred_check_branch
        %223 = sbr.rel (%p221) target = $region36
      $region35: #{tpu_custom_call.1} parent=11 // pred_region
        _
      $region36: #{tpu_custom_call.1} parent=11 // pred_fallthru
        _
    $region12: #{tpu_custom_call.1} parent=5 // pred_fallthru
      _
    %p224 = scmp.lt.s32.totalorder %s13, 2
    // Predicated region
    $region37: #{tpu_custom_call.1} parent=5 // pred_check
      %p225 = pneg %p224
    $region38: #{tpu_custom_call.1} parent=5 // pred_check_branch
      %227 = sbr.rel (%p225) target = $region40
    $region39: #{tpu_custom_call.1} parent=5 // pred_region
      // Predicated region
      $region41: #{tpu_custom_call.1} parent=39 // pred_check
        %p228 = pneg %p33
      $region42: #{tpu_custom_call.1} parent=39 // pred_check_branch
        %230 = sbr.rel (%p228) target = $region44
      $region43: #{tpu_custom_call.1} parent=39 // pred_region
        %p231 = scmp.lt.s32.totalorder %s13, 1
        %s232 = scalar_select %p231, %s13, 1
        %s233 = smul.addr %s232, 16
        %s234 = smul.addr %s233, 8
        %s235 = scalar_lea.vmem %s0, %s234
      $region44: #{tpu_custom_call.1} parent=39 // pred_fallthru
        _
    $region40: #{tpu_custom_call.1} parent=5 // pred_fallthru
      _
    %p236 = scmp.le.s32.totalorder 1, %s13
    %p237 = scmp.lt.s32.totalorder %s13, 3
    %p238 = pnand %p236, %p237
    %p239 = pneg %p238
    // Predicated region
    $region45: #{tpu_custom_call.1} parent=5 // pred_check
      _
    $region46: #{tpu_custom_call.1} parent=5 // pred_check_branch
      %241 = sbr.rel (%p238) target = $region48
    $region47: #{tpu_custom_call.1} parent=5 // pred_region
      %s242 = ssub.s32 %s13, 1
      %p243 = scmp.lt.s32.totalorder %s18, 1
      %s244 = scalar_select %p243, %s18, 1
      %s245 = smul.addr %s244, 16
      %s246 = smul.addr %s245, 8
      %s247 = scalar_lea.vmem %s0, %s246
      %p248 = pneg %p39
      %p249 = pneg %p36
      %p250 = pneg %p60
      %p251 = pneg %p57
      %p252 = pneg %p81
      %p253 = pneg %p78
      %p254 = pneg %p102
      %p255 = pneg %p99
      %p256 = pneg %p123
      %p257 = pneg %p120
      %p258 = pneg %p144
      %p259 = pneg %p141
      %p260 = pneg %p165
      %p261 = pneg %p162
      %p262 = pneg %p191
      %p263 = pneg %p188
      %p264 = scmp.lt.s32.totalorder %s18, 1
      %s265 = scalar_select %p264, %s18, 1
      %s266 = smul.addr %s265, 8
      %s267 = smul.addr %s266, 8
      %s268 = scalar_lea.vmem %s7, %s267
      %p269 = scmp.lt.s32.totalorder %s18, 1
      %s270 = scalar_select %p269, %s18, 1
      %s271 = smul.addr %s270, 16
      %s272 = smul.addr %s271, 8
      %s273 = scalar_lea.vmem %s0, %s272
      %p274 = scmp.lt.s32.totalorder %s18, 1
      %s275 = scalar_select %p274, %s18, 1
      %s276 = smul.addr %s275, 8
      %s277 = smul.addr %s276, 8
      %s278 = scalar_lea.vmem %s7, %s277
      %v279 = vld [vmem:[%s273] sm:$0xff]
      %v280 = vld [vmem:[%s273 + $0x8] sm:$0xff]
      %v281 = vld [vmem:[%s273 + $0x10] sm:$0xff]
      %v282 = vld [vmem:[%s273 + $0x18] sm:$0xff]
      %v283 = vld [vmem:[%s273 + $0x20] sm:$0xff]
      %v284 = vld [vmem:[%s273 + $0x28] sm:$0xff]
      %v285 = vld [vmem:[%s273 + $0x30] sm:$0xff]
      %v286 = vld [vmem:[%s273 + $0x38] sm:$0xff]
      %v287 = vld [vmem:[%s273 + $0x40] sm:$0xff]
      %v288 = vld [vmem:[%s273 + $0x48] sm:$0xff]
      %v289 = vld [vmem:[%s273 + $0x50] sm:$0xff]
      %v290 = vld [vmem:[%s273 + $0x58] sm:$0xff]
      %v291 = vld [vmem:[%s273 + $0x60] sm:$0xff]
      %v292 = vld [vmem:[%s273 + $0x68] sm:$0xff]
      %v293 = vld [vmem:[%s273 + $0x70] sm:$0xff]
      %v294 = vld [vmem:[%s273 + $0x78] sm:$0xff]
      %311 = vrot.lane.b32.xlu0 %v279, 124
      %v312 = vpop.permute.xlu0 %311
      %313 = vrot.lane.b32.xlu0 %v280, 124
      %v314 = vpop.permute.xlu0 %313
      %315 = vrot.lane.b32.xlu0 %v281, 124
      %v316 = vpop.permute.xlu0 %315
      %317 = vrot.lane.b32.xlu0 %v282, 124
      %v318 = vpop.permute.xlu0 %317
      %319 = vrot.lane.b32.xlu0 %v283, 124
      %v320 = vpop.permute.xlu0 %319
      %321 = vrot.lane.b32.xlu0 %v284, 124
      %v322 = vpop.permute.xlu0 %321
      %323 = vrot.lane.b32.xlu0 %v285, 124
      %v324 = vpop.permute.xlu0 %323
      %325 = vrot.lane.b32.xlu0 %v286, 124
      %v326 = vpop.permute.xlu0 %325
      %327 = vrot.lane.b32.xlu0 %v287, 124
      %v328 = vpop.permute.xlu0 %327
      %329 = vrot.lane.b32.xlu0 %v288, 124
      %v330 = vpop.permute.xlu0 %329
      %331 = vrot.lane.b32.xlu0 %v289, 124
      %v332 = vpop.permute.xlu0 %331
      %333 = vrot.lane.b32.xlu0 %v290, 124
      %v334 = vpop.permute.xlu0 %333
      %335 = vrot.lane.b32.xlu0 %v291, 124
      %v336 = vpop.permute.xlu0 %335
      %337 = vrot.lane.b32.xlu0 %v292, 124
      %v338 = vpop.permute.xlu0 %337
      %339 = vrot.lane.b32.xlu0 %v293, 124
      %v340 = vpop.permute.xlu0 %339
      %341 = vrot.lane.b32.xlu0 %v294, 124
      %v342 = vpop.permute.xlu0 %341
      %v359 = vmax.f32 %v279, %v312
      %v360 = vmax.f32 %v280, %v314
      %v361 = vmax.f32 %v281, %v316
      %v362 = vmax.f32 %v282, %v318
      %v363 = vmax.f32 %v283, %v320
      %v364 = vmax.f32 %v284, %v322
      %v365 = vmax.f32 %v285, %v324
      %v366 = vmax.f32 %v286, %v326
      %v367 = vmax.f32 %v287, %v328
      %v368 = vmax.f32 %v288, %v330
      %v369 = vmax.f32 %v289, %v332
      %v370 = vmax.f32 %v290, %v334
      %v371 = vmax.f32 %v291, %v336
      %v372 = vmax.f32 %v292, %v338
      %v373 = vmax.f32 %v293, %v340
      %v374 = vmax.f32 %v294, %v342
      %v375 = vmax.f32 %v359, %v360
      %v376 = vmax.f32 %v361, %v362
      %v377 = vmax.f32 %v363, %v364
      %v378 = vmax.f32 %v365, %v366
      %v379 = vmax.f32 %v367, %v368
      %v380 = vmax.f32 %v369, %v370
      %v381 = vmax.f32 %v371, %v372
      %v382 = vmax.f32 %v373, %v374
      %vm383 = vcmask 31744
      %384 = vst.msk [vmem:[#allocation2] sm:$0xff] %vm383, 0.0
      %385 = vst.msk [vmem:[#allocation2 + $0x8] sm:$0xff] %vm383, 0.0
      %386 = vst.msk [vmem:[#allocation2 + $0x10] sm:$0xff] %vm383, 0.0
      %s387 = scalar_lea.vmem [#allocation2], 216
      %388 = vst.msk [vmem:[%s387] sm:$0xff] %vm383, 0.0
      %389 = vst.msk [vmem:[%s387 + $0x8] sm:$0xff] %vm383, 0.0
      %390 = vst.msk [vmem:[%s387 + $0x10] sm:$0xff] %vm383, 0.0
      %s391 = scalar_lea.vmem [#allocation2], 24
      %392 = vst.msk [vmem:[%s391] sm:$0xff] %vm383, 0.0
      %393 = vst.msk [vmem:[%s391 + $0x18] sm:$0xff] %vm383, 0.0
      %394 = vst.msk [vmem:[%s391 + $0x30] sm:$0xff] %vm383, 0.0
      %395 = vst.msk [vmem:[%s391 + $0x48] sm:$0xff] %vm383, 0.0
      %396 = vst.msk [vmem:[%s391 + $0x60] sm:$0xff] %vm383, 0.0
      %397 = vst.msk [vmem:[%s391 + $0x78] sm:$0xff] %vm383, 0.0
      %398 = vst.msk [vmem:[%s391 + $0x90] sm:$0xff] %vm383, 0.0
      %399 = vst.msk [vmem:[%s391 + $0xa8] sm:$0xff] %vm383, 0.0
      %400 = vst.msk [vmem:[%s391 + $0x10] sm:$0xff] %vm383, 0.0
      %401 = vst.msk [vmem:[%s391 + $0x28] sm:$0xff] %vm383, 0.0
      %402 = vst.msk [vmem:[%s391 + $0x40] sm:$0xff] %vm383, 0.0
      %403 = vst.msk [vmem:[%s391 + $0x58] sm:$0xff] %vm383, 0.0
      %404 = vst.msk [vmem:[%s391 + $0x70] sm:$0xff] %vm383, 0.0
      %405 = vst.msk [vmem:[%s391 + $0x88] sm:$0xff] %vm383, 0.0
      %406 = vst.msk [vmem:[%s391 + $0xa0] sm:$0xff] %vm383, 0.0
      %407 = vst.msk [vmem:[%s391 + $0xb8] sm:$0xff] %vm383, 0.0
      %408 = vst.msk [vmem:[%s391 + $0x8] sm:$0xff] %vm383, %v375
      %409 = vst.msk [vmem:[%s391 + $0x20] sm:$0xff] %vm383, %v376
      %410 = vst.msk [vmem:[%s391 + $0x38] sm:$0xff] %vm383, %v377
      %411 = vst.msk [vmem:[%s391 + $0x50] sm:$0xff] %vm383, %v378
      %412 = vst.msk [vmem:[%s391 + $0x68] sm:$0xff] %vm383, %v379
      %413 = vst.msk [vmem:[%s391 + $0x80] sm:$0xff] %vm383, %v380
      %414 = vst.msk [vmem:[%s391 + $0x98] sm:$0xff] %vm383, %v381
      %415 = vst.msk [vmem:[%s391 + $0xb0] sm:$0xff] %vm383, %v382
      %v416 = vld [vmem:[#allocation2 + $0x7] sm:$0xff]
      %v417 = vld [vmem:[#allocation2 + $0x1f] sm:$0xff]
      %v418 = vld [vmem:[#allocation2 + $0x37] sm:$0xff]
      %v419 = vld [vmem:[#allocation2 + $0x4f] sm:$0xff]
      %v420 = vld [vmem:[#allocation2 + $0x67] sm:$0xff]
      %v421 = vld [vmem:[#allocation2 + $0x7f] sm:$0xff]
      %v422 = vld [vmem:[#allocation2 + $0x97] sm:$0xff]
      %v423 = vld [vmem:[#allocation2 + $0xaf] sm:$0xff]
      %v424 = vld [vmem:[%s1] sm:$0xf]
      %v425 = vld [vmem:[#allocation2 + $0x8] sm:$0xff]
      %v426 = vld [vmem:[#allocation2 + $0x20] sm:$0xff]
      %v427 = vld [vmem:[#allocation2 + $0x38] sm:$0xff]
      %v428 = vld [vmem:[#allocation2 + $0x50] sm:$0xff]
      %v429 = vld [vmem:[#allocation2 + $0x68] sm:$0xff]
      %v430 = vld [vmem:[#allocation2 + $0x80] sm:$0xff]
      %v431 = vld [vmem:[#allocation2 + $0x98] sm:$0xff]
      %v432 = vld [vmem:[#allocation2 + $0xb0] sm:$0xff]
      %s433 = scalar_lea.vmem %s1, 4
      %v434 = vld [vmem:[%s433] sm:$0xf]
      %v436 = vsel %vm383, %v425, 0
      %v439 = vsel %vm383, %v426, 0
      %v442 = vsel %vm383, %v427, 0
      %v445 = vsel %vm383, %v428, 0
      %v448 = vsel %vm383, %v429, 0
      %v451 = vsel %vm383, %v430, 0
      %v454 = vsel %vm383, %v431, 0
      %v457 = vsel %vm383, %v432, 0
      %vm459 = vcmask 1043456
      %v461 = vsel %vm459, %v434, 0
      %463 = vmatprep.subr.mxu0 0.0
      %464 = vmatpush1.msra.mxu0 %v461
      %465 = vmatprep.subr.mxu0 0.0
      %466 = vmatpush1.msra.mxu0 0.0
      %467 = vmatprep.subr.mxu0 0.0
      %468 = vmatpush1.msra.mxu0 0.0
      %469 = vmatprep.subr.mxu0 0.0
      %470 = vmatpush1.msra.mxu0 0.0
      %471 = vmatprep.subr.mxu0 0.0
      %472 = vmatpush1.msra.mxu0 0.0
      %473 = vmatprep.subr.mxu0 0.0
      %474 = vmatpush1.msra.mxu0 0.0
      %475 = vmatprep.subr.mxu0 0.0
      %476 = vmatpush1.msra.mxu0 0.0
      %477 = vmatprep.subr.mxu0 0.0
      %478 = vmatpush1.msra.mxu0 0.0
      %479 = vmatprep.subr.mxu0 0.0
      %480 = vmatpush1.msra.mxu0 0.0
      %481 = vmatprep.subr.mxu0 0.0
      %482 = vmatpush1.msra.mxu0 0.0
      %483 = vmatprep.subr.mxu0 0.0
      %484 = vmatpush1.msra.mxu0 0.0
      %485 = vmatprep.subr.mxu0 0.0
      %486 = vmatpush1.msra.mxu0 0.0
      %487 = vmatprep.subr.mxu0 0.0
      %488 = vmatpush1.msra.mxu0 0.0
      %489 = vmatprep.subr.mxu0 0.0
      %490 = vmatpush1.msra.mxu0 0.0
      %491 = vmatprep.subr.mxu0 0.0
      %492 = vmatpush1.msra.mxu0 0.0
      %493 = vmatprep.subr.mxu0 0.0
      %494 = vmatpush1.msra.mxu0 0.0
      %495 = vmatprep.subr.mxu0 0.0
      %496 = vmatpush1.msra.mxu0 0.0
      %497 = vmatprep.subr.mxu0 0.0
      %498 = vmatpush1.msra.mxu0 0.0
      %499 = vmatprep.subr.mxu0 0.0
      %500 = vmatpush1.msra.mxu0 0.0
      %501 = vmatprep.subr.mxu0 0.0
      %502 = vmatpush1.msra.mxu0 0.0
      %503 = vmatprep.subr.mxu0 0.0
      %504 = vmatpush1.msra.mxu0 0.0
      %505 = vmatprep.subr.mxu0 0.0
      %506 = vmatpush1.msra.mxu0 0.0
      %507 = vmatprep.subr.mxu0 0.0
      %508 = vmatpush1.msra.mxu0 0.0
      %509 = vmatprep.subr.mxu0 0.0
      %510 = vmatpush1.msra.mxu0 0.0
      %511 = vmatprep.subr.mxu0 0.0
      %512 = vmatpush1.msra.mxu0 0.0
      %513 = vmatprep.subr.mxu0 0.0
      %514 = vmatpush1.msra.mxu0 0.0
      %515 = vmatprep.subr.mxu0 0.0
      %516 = vmatpush1.msra.mxu0 0.0
      %517 = vmatprep.subr.mxu0 0.0
      %518 = vmatpush1.msra.mxu0 0.0
      %519 = vmatprep.subr.mxu0 0.0
      %520 = vmatpush1.msra.mxu0 0.0
      %521 = vmatprep.subr.mxu0 0.0
      %522 = vmatpush1.msra.mxu0 0.0
      %523 = vmatprep.subr.mxu0 0.0
      %524 = vmatpush1.msra.mxu0 0.0
      %525 = vmatprep.subr.mxu0 0.0
      %526 = vmatpush1.msra.mxu0 0.0
      %527 = vmatprep.mubr.f32.mxu0 0.0
      %528 = vmatmul.mubr.f32.gmra.mrb[0].mxu0 %v436
      %v529 = vpop.f32.mrb[0].mxu0
      %v530 = vadd.f32 0.0, %v529
      %v531 = vpop.f32.mrb[0].mxu0
      %532 = vmatprep.mubr.f32.mxu0 0.0
      %533 = vmatmul.mubr.f32.gmra.mrb[0].mxu0 %v439
      %v534 = vpop.f32.mrb[0].mxu0
      %v535 = vadd.f32 0.0, %v534
      %v536 = vpop.f32.mrb[0].mxu0
      %537 = vmatprep.mubr.f32.mxu0 0.0
      %538 = vmatmul.mubr.f32.gmra.mrb[0].mxu0 %v442
      %v539 = vpop.f32.mrb[0].mxu0
      %v540 = vadd.f32 0.0, %v539
      %v541 = vpop.f32.mrb[0].mxu0
      %542 = vmatprep.mubr.f32.mxu0 0.0
      %543 = vmatmul.mubr.f32.gmra.mrb[0].mxu0 %v445
      %v544 = vpop.f32.mrb[0].mxu0
      %v545 = vadd.f32 0.0, %v544
      %v546 = vpop.f32.mrb[0].mxu0
      %547 = vmatprep.mubr.f32.mxu0 0.0
      %548 = vmatmul.mubr.f32.gmra.mrb[0].mxu0 %v448
      %v549 = vpop.f32.mrb[0].mxu0
      %v550 = vadd.f32 0.0, %v549
      %v551 = vpop.f32.mrb[0].mxu0
      %552 = vmatprep.mubr.f32.mxu0 0.0
      %553 = vmatmul.mubr.f32.gmra.mrb[0].mxu0 %v451
      %v554 = vpop.f32.mrb[0].mxu0
      %v555 = vadd.f32 0.0, %v554
      %v556 = vpop.f32.mrb[0].mxu0
      %557 = vmatprep.mubr.f32.mxu0 0.0
      %558 = vmatmul.mubr.f32.gmra.mrb[0].mxu0 %v454
      %v559 = vpop.f32.mrb[0].mxu0
      %v560 = vadd.f32 0.0, %v559
      %v561 = vpop.f32.mrb[0].mxu0
      %562 = vmatprep.mubr.f32.mxu0 0.0
      %563 = vmatmul.mubr.f32.gmra.mrb[0].mxu0 %v457
      %v564 = vpop.f32.mrb[0].mxu0
      %v565 = vadd.f32 0.0, %v564
      %v566 = vpop.f32.mrb[0].mxu0
      %567 = vdwg.mxu0
      %v569 = vsel %vm383, %v416, 0
      %v572 = vsel %vm383, %v417, 0
      %v575 = vsel %vm383, %v418, 0
      %v578 = vsel %vm383, %v419, 0
      %v581 = vsel %vm383, %v420, 0
      %v584 = vsel %vm383, %v421, 0
      %v587 = vsel %vm383, %v422, 0
      %v590 = vsel %vm383, %v423, 0
      %v593 = vsel %vm459, %v424, 0
      %595 = vmatprep.subr.mxu0 0.0
      %596 = vmatpush1.msra.mxu0 %v593
      %597 = vmatprep.subr.mxu0 0.0
      %598 = vmatpush1.msra.mxu0 0.0
      %599 = vmatprep.subr.mxu0 0.0
      %600 = vmatpush1.msra.mxu0 0.0
      %601 = vmatprep.subr.mxu0 0.0
      %602 = vmatpush1.msra.mxu0 0.0
      %603 = vmatprep.subr.mxu0 0.0
      %604 = vmatpush1.msra.mxu0 0.0
      %605 = vmatprep.subr.mxu0 0.0
      %606 = vmatpush1.msra.mxu0 0.0
      %607 = vmatprep.subr.mxu0 0.0
      %608 = vmatpush1.msra.mxu0 0.0
      %609 = vmatprep.subr.mxu0 0.0
      %610 = vmatpush1.msra.mxu0 0.0
      %611 = vmatprep.subr.mxu0 0.0
      %612 = vmatpush1.msra.mxu0 0.0
      %613 = vmatprep.subr.mxu0 0.0
      %614 = vmatpush1.msra.mxu0 0.0
      %615 = vmatprep.subr.mxu0 0.0
      %616 = vmatpush1.msra.mxu0 0.0
      %617 = vmatprep.subr.mxu0 0.0
      %618 = vmatpush1.msra.mxu0 0.0
      %619 = vmatprep.subr.mxu0 0.0
      %620 = vmatpush1.msra.mxu0 0.0
      %621 = vmatprep.subr.mxu0 0.0
      %622 = vmatpush1.msra.mxu0 0.0
      %623 = vmatprep.subr.mxu0 0.0
      %624 = vmatpush1.msra.mxu0 0.0
      %625 = vmatprep.subr.mxu0 0.0
      %626 = vmatpush1.msra.mxu0 0.0
      %627 = vmatprep.subr.mxu0 0.0
      %628 = vmatpush1.msra.mxu0 0.0
      %629 = vmatprep.subr.mxu0 0.0
      %630 = vmatpush1.msra.mxu0 0.0
      %631 = vmatprep.subr.mxu0 0.0
      %632 = vmatpush1.msra.mxu0 0.0
      %633 = vmatprep.subr.mxu0 0.0
      %634 = vmatpush1.msra.mxu0 0.0
      %635 = vmatprep.subr.mxu0 0.0
      %636 = vmatpush1.msra.mxu0 0.0
      %637 = vmatprep.subr.mxu0 0.0
      %638 = vmatpush1.msra.mxu0 0.0
      %639 = vmatprep.subr.mxu0 0.0
      %640 = vmatpush1.msra.mxu0 0.0
      %641 = vmatprep.subr.mxu0 0.0
      %642 = vmatpush1.msra.mxu0 0.0
      %643 = vmatprep.subr.mxu0 0.0
      %644 = vmatpush1.msra.mxu0 0.0
      %645 = vmatprep.subr.mxu0 0.0
      %646 = vmatpush1.msra.mxu0 0.0
      %647 = vmatprep.subr.mxu0 0.0
      %648 = vmatpush1.msra.mxu0 0.0
      %649 = vmatprep.subr.mxu0 0.0
      %650 = vmatpush1.msra.mxu0 0.0
      %651 = vmatprep.subr.mxu0 0.0
      %652 = vmatpush1.msra.mxu0 0.0
      %653 = vmatprep.subr.mxu0 0.0
      %654 = vmatpush1.msra.mxu0 0.0
      %655 = vmatprep.subr.mxu0 0.0
      %656 = vmatpush1.msra.mxu0 0.0
      %657 = vmatprep.subr.mxu0 0.0
      %658 = vmatpush1.msra.mxu0 0.0
      %659 = vmatprep.mubr.f32.mxu0 0.0
      %660 = vmatmul.mubr.f32.gmra.mrb[0].mxu0 %v569
      %v661 = vpop.f32.mrb[0].mxu0
      %v662 = vadd.f32 %v530, %v661
      %v663 = vpop.f32.mrb[0].mxu0
      %664 = vmatprep.mubr.f32.mxu0 0.0
      %665 = vmatmul.mubr.f32.gmra.mrb[0].mxu0 %v572
      %v666 = vpop.f32.mrb[0].mxu0
      %v667 = vadd.f32 %v535, %v666
      %v668 = vpop.f32.mrb[0].mxu0
      %669 = vmatprep.mubr.f32.mxu0 0.0
      %670 = vmatmul.mubr.f32.gmra.mrb[0].mxu0 %v575
      %v671 = vpop.f32.mrb[0].mxu0
      %v672 = vadd.f32 %v540, %v671
      %v673 = vpop.f32.mrb[0].mxu0
      %674 = vmatprep.mubr.f32.mxu0 0.0
      %675 = vmatmul.mubr.f32.gmra.mrb[0].mxu0 %v578
      %v676 = vpop.f32.mrb[0].mxu0
      %v677 = vadd.f32 %v545, %v676
      %v678 = vpop.f32.mrb[0].mxu0
      %679 = vmatprep.mubr.f32.mxu0 0.0
      %680 = vmatmul.mubr.f32.gmra.mrb[0].mxu0 %v581
      %v681 = vpop.f32.mrb[0].mxu0
      %v682 = vadd.f32 %v550, %v681
      %v683 = vpop.f32.mrb[0].mxu0
      %684 = vmatprep.mubr.f32.mxu0 0.0
      %685 = vmatmul.mubr.f32.gmra.mrb[0].mxu0 %v584
      %v686 = vpop.f32.mrb[0].mxu0
      %v687 = vadd.f32 %v555, %v686
      %v688 = vpop.f32.mrb[0].mxu0
      %689 = vmatprep.mubr.f32.mxu0 0.0
      %690 = vmatmul.mubr.f32.gmra.mrb[0].mxu0 %v587
      %v691 = vpop.f32.mrb[0].mxu0
      %v692 = vadd.f32 %v560, %v691
      %v693 = vpop.f32.mrb[0].mxu0
      %694 = vmatprep.mubr.f32.mxu0 0.0
      %695 = vmatmul.mubr.f32.gmra.mrb[0].mxu0 %v590
      %v696 = vpop.f32.mrb[0].mxu0
      %v697 = vadd.f32 %v565, %v696
      %v698 = vpop.f32.mrb[0].mxu0
      %699 = vdwg.mxu0
      %v700 = vld [vmem:[#allocation2 + $0x9] sm:$0xff]
      %v701 = vld [vmem:[#allocation2 + $0x21] sm:$0xff]
      %v702 = vld [vmem:[#allocation2 + $0x39] sm:$0xff]
      %v703 = vld [vmem:[#allocation2 + $0x51] sm:$0xff]
      %v704 = vld [vmem:[#allocation2 + $0x69] sm:$0xff]
      %v705 = vld [vmem:[#allocation2 + $0x81] sm:$0xff]
      %v706 = vld [vmem:[#allocation2 + $0x99] sm:$0xff]
      %v707 = vld [vmem:[#allocation2 + $0xb1] sm:$0xff]
      %s708 = scalar_lea.vmem %s1, 8
      %v709 = vld [vmem:[%s708] sm:$0xf]
      %v711 = vsel %vm383, %v700, 0
      %v714 = vsel %vm383, %v701, 0
      %v717 = vsel %vm383, %v702, 0
      %v720 = vsel %vm383, %v703, 0
      %v723 = vsel %vm383, %v704, 0
      %v726 = vsel %vm383, %v705, 0
      %v729 = vsel %vm383, %v706, 0
      %v732 = vsel %vm383, %v707, 0
      %v735 = vsel %vm459, %v709, 0
      %737 = vmatprep.subr.mxu0 0.0
      %738 = vmatpush1.msra.mxu0 %v735
      %739 = vmatprep.subr.mxu0 0.0
      %740 = vmatpush1.msra.mxu0 0.0
      %741 = vmatprep.subr.mxu0 0.0
      %742 = vmatpush1.msra.mxu0 0.0
      %743 = vmatprep.subr.mxu0 0.0
      %744 = vmatpush1.msra.mxu0 0.0
      %745 = vmatprep.subr.mxu0 0.0
      %746 = vmatpush1.msra.mxu0 0.0
      %747 = vmatprep.subr.mxu0 0.0
      %748 = vmatpush1.msra.mxu0 0.0
      %749 = vmatprep.subr.mxu0 0.0
      %750 = vmatpush1.msra.mxu0 0.0
      %751 = vmatprep.subr.mxu0 0.0
      %752 = vmatpush1.msra.mxu0 0.0
      %753 = vmatprep.subr.mxu0 0.0
      %754 = vmatpush1.msra.mxu0 0.0
      %755 = vmatprep.subr.mxu0 0.0
      %756 = vmatpush1.msra.mxu0 0.0
      %757 = vmatprep.subr.mxu0 0.0
      %758 = vmatpush1.msra.mxu0 0.0
      %759 = vmatprep.subr.mxu0 0.0
      %760 = vmatpush1.msra.mxu0 0.0
      %761 = vmatprep.subr.mxu0 0.0
      %762 = vmatpush1.msra.mxu0 0.0
      %763 = vmatprep.subr.mxu0 0.0
      %764 = vmatpush1.msra.mxu0 0.0
      %765 = vmatprep.subr.mxu0 0.0
      %766 = vmatpush1.msra.mxu0 0.0
      %767 = vmatprep.subr.mxu0 0.0
      %768 = vmatpush1.msra.mxu0 0.0
      %769 = vmatprep.subr.mxu0 0.0
      %770 = vmatpush1.msra.mxu0 0.0
      %771 = vmatprep.subr.mxu0 0.0
      %772 = vmatpush1.msra.mxu0 0.0
      %773 = vmatprep.subr.mxu0 0.0
      %774 = vmatpush1.msra.mxu0 0.0
      %775 = vmatprep.subr.mxu0 0.0
      %776 = vmatpush1.msra.mxu0 0.0
      %777 = vmatprep.subr.mxu0 0.0
      %778 = vmatpush1.msra.mxu0 0.0
      %779 = vmatprep.subr.mxu0 0.0
      %780 = vmatpush1.msra.mxu0 0.0
      %781 = vmatprep.subr.mxu0 0.0
      %782 = vmatpush1.msra.mxu0 0.0
      %783 = vmatprep.subr.mxu0 0.0
      %784 = vmatpush1.msra.mxu0 0.0
      %785 = vmatprep.subr.mxu0 0.0
      %786 = vmatpush1.msra.mxu0 0.0
      %787 = vmatprep.subr.mxu0 0.0
      %788 = vmatpush1.msra.mxu0 0.0
      %789 = vmatprep.subr.mxu0 0.0
      %790 = vmatpush1.msra.mxu0 0.0
      %791 = vmatprep.subr.mxu0 0.0
      %792 = vmatpush1.msra.mxu0 0.0
      %793 = vmatprep.subr.mxu0 0.0
      %794 = vmatpush1.msra.mxu0 0.0
      %795 = vmatprep.subr.mxu0 0.0
      %796 = vmatpush1.msra.mxu0 0.0
      %797 = vmatprep.subr.mxu0 0.0
      %798 = vmatpush1.msra.mxu0 0.0
      %799 = vmatprep.subr.mxu0 0.0
      %800 = vmatpush1.msra.mxu0 0.0
      %801 = vmatprep.mubr.f32.mxu0 0.0
      %802 = vmatmul.mubr.f32.gmra.mrb[0].mxu0 %v711
      %v803 = vpop.f32.mrb[0].mxu0
      %v804 = vadd.f32 0.0, %v803
      %v805 = vpop.f32.mrb[0].mxu0
      %806 = vmatprep.mubr.f32.mxu0 0.0
      %807 = vmatmul.mubr.f32.gmra.mrb[0].mxu0 %v714
      %v808 = vpop.f32.mrb[0].mxu0
      %v809 = vadd.f32 0.0, %v808
      %v810 = vpop.f32.mrb[0].mxu0
      %811 = vmatprep.mubr.f32.mxu0 0.0
      %812 = vmatmul.mubr.f32.gmra.mrb[0].mxu0 %v717
      %v813 = vpop.f32.mrb[0].mxu0
      %v814 = vadd.f32 0.0, %v813
      %v815 = vpop.f32.mrb[0].mxu0
      %816 = vmatprep.mubr.f32.mxu0 0.0
      %817 = vmatmul.mubr.f32.gmra.mrb[0].mxu0 %v720
      %v818 = vpop.f32.mrb[0].mxu0
      %v819 = vadd.f32 0.0, %v818
      %v820 = vpop.f32.mrb[0].mxu0
      %821 = vmatprep.mubr.f32.mxu0 0.0
      %822 = vmatmul.mubr.f32.gmra.mrb[0].mxu0 %v723
      %v823 = vpop.f32.mrb[0].mxu0
      %v824 = vadd.f32 0.0, %v823
      %v825 = vpop.f32.mrb[0].mxu0
      %826 = vmatprep.mubr.f32.mxu0 0.0
      %827 = vmatmul.mubr.f32.gmra.mrb[0].mxu0 %v726
      %v828 = vpop.f32.mrb[0].mxu0
      %v829 = vadd.f32 0.0, %v828
      %v830 = vpop.f32.mrb[0].mxu0
      %831 = vmatprep.mubr.f32.mxu0 0.0
      %832 = vmatmul.mubr.f32.gmra.mrb[0].mxu0 %v729
      %v833 = vpop.f32.mrb[0].mxu0
      %v834 = vadd.f32 0.0, %v833
      %v835 = vpop.f32.mrb[0].mxu0
      %836 = vmatprep.mubr.f32.mxu0 0.0
      %837 = vmatmul.mubr.f32.gmra.mrb[0].mxu0 %v732
      %v838 = vpop.f32.mrb[0].mxu0
      %v839 = vadd.f32 0.0, %v838
      %v840 = vpop.f32.mrb[0].mxu0
      %841 = vdwg.mxu0
      %v842 = vadd.f32 %v662, %v804
      %v843 = vadd.f32 %v667, %v809
      %v844 = vadd.f32 %v672, %v814
      %v845 = vadd.f32 %v677, %v819
      %v846 = vadd.f32 %v682, %v824
      %v847 = vadd.f32 %v687, %v829
      %v848 = vadd.f32 %v692, %v834
      %v849 = vadd.f32 %v697, %v839
      %v850 = vld [vmem:[%s391 + $0x7] sm:$0xff]
      %v851 = vld [vmem:[%s391 + $0x1f] sm:$0xff]
      %v852 = vld [vmem:[%s391 + $0x37] sm:$0xff]
      %v853 = vld [vmem:[%s391 + $0x4f] sm:$0xff]
      %v854 = vld [vmem:[%s391 + $0x67] sm:$0xff]
      %v855 = vld [vmem:[%s391 + $0x7f] sm:$0xff]
      %v856 = vld [vmem:[%s391 + $0x97] sm:$0xff]
      %v857 = vld [vmem:[%s391 + $0xaf] sm:$0xff]
      %s858 = scalar_lea.vmem %s1, 12
      %v859 = vld [vmem:[%s858] sm:$0xf]
      %v861 = vsel %vm383, %v850, 0
      %v864 = vsel %vm383, %v851, 0
      %v867 = vsel %vm383, %v852, 0
      %v870 = vsel %vm383, %v853, 0
      %v873 = vsel %vm383, %v854, 0
      %v876 = vsel %vm383, %v855, 0
      %v879 = vsel %vm383, %v856, 0
      %v882 = vsel %vm383, %v857, 0
      %v885 = vsel %vm459, %v859, 0
      %887 = vmatprep.subr.mxu0 0.0
      %888 = vmatpush1.msra.mxu0 %v885
      %889 = vmatprep.subr.mxu0 0.0
      %890 = vmatpush1.msra.mxu0 0.0
      %891 = vmatprep.subr.mxu0 0.0
      %892 = vmatpush1.msra.mxu0 0.0
      %893 = vmatprep.subr.mxu0 0.0
      %894 = vmatpush1.msra.mxu0 0.0
      %895 = vmatprep.subr.mxu0 0.0
      %896 = vmatpush1.msra.mxu0 0.0
      %897 = vmatprep.subr.mxu0 0.0
      %898 = vmatpush1.msra.mxu0 0.0
      %899 = vmatprep.subr.mxu0 0.0
      %900 = vmatpush1.msra.mxu0 0.0
      %901 = vmatprep.subr.mxu0 0.0
      %902 = vmatpush1.msra.mxu0 0.0
      %903 = vmatprep.subr.mxu0 0.0
      %904 = vmatpush1.msra.mxu0 0.0
      %905 = vmatprep.subr.mxu0 0.0
      %906 = vmatpush1.msra.mxu0 0.0
      %907 = vmatprep.subr.mxu0 0.0
      %908 = vmatpush1.msra.mxu0 0.0
      %909 = vmatprep.subr.mxu0 0.0
      %910 = vmatpush1.msra.mxu0 0.0
      %911 = vmatprep.subr.mxu0 0.0
      %912 = vmatpush1.msra.mxu0 0.0
      %913 = vmatprep.subr.mxu0 0.0
      %914 = vmatpush1.msra.mxu0 0.0
      %915 = vmatprep.subr.mxu0 0.0
      %916 = vmatpush1.msra.mxu0 0.0
      %917 = vmatprep.subr.mxu0 0.0
      %918 = vmatpush1.msra.mxu0 0.0
      %919 = vmatprep.subr.mxu0 0.0
      %920 = vmatpush1.msra.mxu0 0.0
      %921 = vmatprep.subr.mxu0 0.0
      %922 = vmatpush1.msra.mxu0 0.0
      %923 = vmatprep.subr.mxu0 0.0
      %924 = vmatpush1.msra.mxu0 0.0
      %925 = vmatprep.subr.mxu0 0.0
      %926 = vmatpush1.msra.mxu0 0.0
      %927 = vmatprep.subr.mxu0 0.0
      %928 = vmatpush1.msra.mxu0 0.0
      %929 = vmatprep.subr.mxu0 0.0
      %930 = vmatpush1.msra.mxu0 0.0
      %931 = vmatprep.subr.mxu0 0.0
      %932 = vmatpush1.msra.mxu0 0.0
      %933 = vmatprep.subr.mxu0 0.0
      %934 = vmatpush1.msra.mxu0 0.0
      %935 = vmatprep.subr.mxu0 0.0
      %936 = vmatpush1.msra.mxu0 0.0
      %937 = vmatprep.subr.mxu0 0.0
      %938 = vmatpush1.msra.mxu0 0.0
      %939 = vmatprep.subr.mxu0 0.0
      %940 = vmatpush1.msra.mxu0 0.0
      %941 = vmatprep.subr.mxu0 0.0
      %942 = vmatpush1.msra.mxu0 0.0
      %943 = vmatprep.subr.mxu0 0.0
      %944 = vmatpush1.msra.mxu0 0.0
      %945 = vmatprep.subr.mxu0 0.0
      %946 = vmatpush1.msra.mxu0 0.0
      %947 = vmatprep.subr.mxu0 0.0
      %948 = vmatpush1.msra.mxu0 0.0
      %949 = vmatprep.subr.mxu0 0.0
      %950 = vmatpush1.msra.mxu0 0.0
      %951 = vmatprep.mubr.f32.mxu0 0.0
      %952 = vmatmul.mubr.f32.gmra.mrb[0].mxu0 %v861
      %v953 = vpop.f32.mrb[0].mxu0
      %v954 = vadd.f32 0.0, %v953
      %v955 = vpop.f32.mrb[0].mxu0
      %956 = vmatprep.mubr.f32.mxu0 0.0
      %957 = vmatmul.mubr.f32.gmra.mrb[0].mxu0 %v864
      %v958 = vpop.f32.mrb[0].mxu0
      %v959 = vadd.f32 0.0, %v958
      %v960 = vpop.f32.mrb[0].mxu0
      %961 = vmatprep.mubr.f32.mxu0 0.0
      %962 = vmatmul.mubr.f32.gmra.mrb[0].mxu0 %v867
      %v963 = vpop.f32.mrb[0].mxu0
      %v964 = vadd.f32 0.0, %v963
      %v965 = vpop.f32.mrb[0].mxu0
      %966 = vmatprep.mubr.f32.mxu0 0.0
      %967 = vmatmul.mubr.f32.gmra.mrb[0].mxu0 %v870
      %v968 = vpop.f32.mrb[0].mxu0
      %v969 = vadd.f32 0.0, %v968
      %v970 = vpop.f32.mrb[0].mxu0
      %971 = vmatprep.mubr.f32.mxu0 0.0
      %972 = vmatmul.mubr.f32.gmra.mrb[0].mxu0 %v873
      %v973 = vpop.f32.mrb[0].mxu0
      %v974 = vadd.f32 0.0, %v973
      %v975 = vpop.f32.mrb[0].mxu0
      %976 = vmatprep.mubr.f32.mxu0 0.0
      %977 = vmatmul.mubr.f32.gmra.mrb[0].mxu0 %v876
      %v978 = vpop.f32.mrb[0].mxu0
      %v979 = vadd.f32 0.0, %v978
      %v980 = vpop.f32.mrb[0].mxu0
      %981 = vmatprep.mubr.f32.mxu0 0.0
      %982 = vmatmul.mubr.f32.gmra.mrb[0].mxu0 %v879
      %v983 = vpop.f32.mrb[0].mxu0
      %v984 = vadd.f32 0.0, %v983
      %v985 = vpop.f32.mrb[0].mxu0
      %986 = vmatprep.mubr.f32.mxu0 0.0
      %987 = vmatmul.mubr.f32.gmra.mrb[0].mxu0 %v882
      %v988 = vpop.f32.mrb[0].mxu0
      %v989 = vadd.f32 0.0, %v988
      %v990 = vpop.f32.mrb[0].mxu0
      %991 = vdwg.mxu0
      %v992 = vadd.f32 %v842, %v954
      %v993 = vadd.f32 %v843, %v959
      %v994 = vadd.f32 %v844, %v964
      %v995 = vadd.f32 %v845, %v969
      %v996 = vadd.f32 %v846, %v974
      %v997 = vadd.f32 %v847, %v979
      %v998 = vadd.f32 %v848, %v984
      %v999 = vadd.f32 %v849, %v989
      %v1000 = vld [vmem:[%s391 + $0x8] sm:$0xff]
      %v1001 = vld [vmem:[%s391 + $0x20] sm:$0xff]
      %v1002 = vld [vmem:[%s391 + $0x38] sm:$0xff]
      %v1003 = vld [vmem:[%s391 + $0x50] sm:$0xff]
      %v1004 = vld [vmem:[%s391 + $0x68] sm:$0xff]
      %v1005 = vld [vmem:[%s391 + $0x80] sm:$0xff]
      %v1006 = vld [vmem:[%s391 + $0x98] sm:$0xff]
      %v1007 = vld [vmem:[%s391 + $0xb0] sm:$0xff]
      %s1008 = scalar_lea.vmem %s1, 16
      %v1009 = vld [vmem:[%s1008] sm:$0xf]
      %v1011 = vsel %vm383, %v1000, 0
      %v1014 = vsel %vm383, %v1001, 0
      %v1017 = vsel %vm383, %v1002, 0
      %v1020 = vsel %vm383, %v1003, 0
      %v1023 = vsel %vm383, %v1004, 0
      %v1026 = vsel %vm383, %v1005, 0
      %v1029 = vsel %vm383, %v1006, 0
      %v1032 = vsel %vm383, %v1007, 0
      %v1035 = vsel %vm459, %v1009, 0
      %1037 = vmatprep.subr.mxu0 0.0
      %1038 = vmatpush1.msra.mxu0 %v1035
      %1039 = vmatprep.subr.mxu0 0.0
      %1040 = vmatpush1.msra.mxu0 0.0
      %1041 = vmatprep.subr.mxu0 0.0
      %1042 = vmatpush1.msra.mxu0 0.0
      %1043 = vmatprep.subr.mxu0 0.0
      %1044 = vmatpush1.msra.mxu0 0.0
      %1045 = vmatprep.subr.mxu0 0.0
      %1046 = vmatpush1.msra.mxu0 0.0
      %1047 = vmatprep.subr.mxu0 0.0
      %1048 = vmatpush1.msra.mxu0 0.0
      %1049 = vmatprep.subr.mxu0 0.0
      %1050 = vmatpush1.msra.mxu0 0.0
      %1051 = vmatprep.subr.mxu0 0.0
      %1052 = vmatpush1.msra.mxu0 0.0
      %1053 = vmatprep.subr.mxu0 0.0
      %1054 = vmatpush1.msra.mxu0 0.0
      %1055 = vmatprep.subr.mxu0 0.0
      %1056 = vmatpush1.msra.mxu0 0.0
      %1057 = vmatprep.subr.mxu0 0.0
      %1058 = vmatpush1.msra.mxu0 0.0
      %1059 = vmatprep.subr.mxu0 0.0
      %1060 = vmatpush1.msra.mxu0 0.0
      %1061 = vmatprep.subr.mxu0 0.0
      %1062 = vmatpush1.msra.mxu0 0.0
      %1063 = vmatprep.subr.mxu0 0.0
      %1064 = vmatpush1.msra.mxu0 0.0
      %1065 = vmatprep.subr.mxu0 0.0
      %1066 = vmatpush1.msra.mxu0 0.0
      %1067 = vmatprep.subr.mxu0 0.0
      %1068 = vmatpush1.msra.mxu0 0.0
      %1069 = vmatprep.subr.mxu0 0.0
      %1070 = vmatpush1.msra.mxu0 0.0
      %1071 = vmatprep.subr.mxu0 0.0
      %1072 = vmatpush1.msra.mxu0 0.0
      %1073 = vmatprep.subr.mxu0 0.0
      %1074 = vmatpush1.msra.mxu0 0.0
      %1075 = vmatprep.subr.mxu0 0.0
      %1076 = vmatpush1.msra.mxu0 0.0
      %1077 = vmatprep.subr.mxu0 0.0
      %1078 = vmatpush1.msra.mxu0 0.0
      %1079 = vmatprep.subr.mxu0 0.0
      %1080 = vmatpush1.msra.mxu0 0.0
      %1081 = vmatprep.subr.mxu0 0.0
      %1082 = vmatpush1.msra.mxu0 0.0
      %1083 = vmatprep.subr.mxu0 0.0
      %1084 = vmatpush1.msra.mxu0 0.0
      %1085 = vmatprep.subr.mxu0 0.0
      %1086 = vmatpush1.msra.mxu0 0.0
      %1087 = vmatprep.subr.mxu0 0.0
      %1088 = vmatpush1.msra.mxu0 0.0
      %1089 = vmatprep.subr.mxu0 0.0
      %1090 = vmatpush1.msra.mxu0 0.0
      %1091 = vmatprep.subr.mxu0 0.0
      %1092 = vmatpush1.msra.mxu0 0.0
      %1093 = vmatprep.subr.mxu0 0.0
      %1094 = vmatpush1.msra.mxu0 0.0
      %1095 = vmatprep.subr.mxu0 0.0
      %1096 = vmatpush1.msra.mxu0 0.0
      %1097 = vmatprep.subr.mxu0 0.0
      %1098 = vmatpush1.msra.mxu0 0.0
      %1099 = vmatprep.subr.mxu0 0.0
      %1100 = vmatpush1.msra.mxu0 0.0
      %1101 = vmatprep.mubr.f32.mxu0 0.0
      %1102 = vmatmul.mubr.f32.gmra.mrb[0].mxu0 %v1011
      %v1103 = vpop.f32.mrb[0].mxu0
      %v1104 = vadd.f32 0.0, %v1103
      %v1105 = vpop.f32.mrb[0].mxu0
      %1106 = vmatprep.mubr.f32.mxu0 0.0
      %1107 = vmatmul.mubr.f32.gmra.mrb[0].mxu0 %v1014
      %v1108 = vpop.f32.mrb[0].mxu0
      %v1109 = vadd.f32 0.0, %v1108
      %v1110 = vpop.f32.mrb[0].mxu0
      %1111 = vmatprep.mubr.f32.mxu0 0.0
      %1112 = vmatmul.mubr.f32.gmra.mrb[0].mxu0 %v1017
      %v1113 = vpop.f32.mrb[0].mxu0
      %v1114 = vadd.f32 0.0, %v1113
      %v1115 = vpop.f32.mrb[0].mxu0
      %1116 = vmatprep.mubr.f32.mxu0 0.0
      %1117 = vmatmul.mubr.f32.gmra.mrb[0].mxu0 %v1020
      %v1118 = vpop.f32.mrb[0].mxu0
      %v1119 = vadd.f32 0.0, %v1118
      %v1120 = vpop.f32.mrb[0].mxu0
      %1121 = vmatprep.mubr.f32.mxu0 0.0
      %1122 = vmatmul.mubr.f32.gmra.mrb[0].mxu0 %v1023
      %v1123 = vpop.f32.mrb[0].mxu0
      %v1124 = vadd.f32 0.0, %v1123
      %v1125 = vpop.f32.mrb[0].mxu0
      %1126 = vmatprep.mubr.f32.mxu0 0.0
      %1127 = vmatmul.mubr.f32.gmra.mrb[0].mxu0 %v1026
      %v1128 = vpop.f32.mrb[0].mxu0
      %v1129 = vadd.f32 0.0, %v1128
      %v1130 = vpop.f32.mrb[0].mxu0
      %1131 = vmatprep.mubr.f32.mxu0 0.0
      %1132 = vmatmul.mubr.f32.gmra.mrb[0].mxu0 %v1029
      %v1133 = vpop.f32.mrb[0].mxu0
      %v1134 = vadd.f32 0.0, %v1133
      %v1135 = vpop.f32.mrb[0].mxu0
      %1136 = vmatprep.mubr.f32.mxu0 0.0
      %1137 = vmatmul.mubr.f32.gmra.mrb[0].mxu0 %v1032
      %v1138 = vpop.f32.mrb[0].mxu0
      %v1139 = vadd.f32 0.0, %v1138
      %v1140 = vpop.f32.mrb[0].mxu0
      %1141 = vdwg.mxu0
      %v1142 = vadd.f32 %v992, %v1104
      %v1143 = vadd.f32 %v993, %v1109
      %v1144 = vadd.f32 %v994, %v1114
      %v1145 = vadd.f32 %v995, %v1119
      %v1146 = vadd.f32 %v996, %v1124
      %v1147 = vadd.f32 %v997, %v1129
      %v1148 = vadd.f32 %v998, %v1134
      %v1149 = vadd.f32 %v999, %v1139
      %v1150 = vld [vmem:[%s391 + $0x9] sm:$0xff]
      %v1151 = vld [vmem:[%s391 + $0x21] sm:$0xff]
      %v1152 = vld [vmem:[%s391 + $0x39] sm:$0xff]
      %v1153 = vld [vmem:[%s391 + $0x51] sm:$0xff]
      %v1154 = vld [vmem:[%s391 + $0x69] sm:$0xff]
      %v1155 = vld [vmem:[%s391 + $0x81] sm:$0xff]
      %v1156 = vld [vmem:[%s391 + $0x99] sm:$0xff]
      %v1157 = vld [vmem:[%s391 + $0xb1] sm:$0xff]
      %s1158 = scalar_lea.vmem %s1, 20
      %v1159 = vld [vmem:[%s1158] sm:$0xf]
      %v1161 = vsel %vm383, %v1150, 0
      %v1164 = vsel %vm383, %v1151, 0
      %v1167 = vsel %vm383, %v1152, 0
      %v1170 = vsel %vm383, %v1153, 0
      %v1173 = vsel %vm383, %v1154, 0
      %v1176 = vsel %vm383, %v1155, 0
      %v1179 = vsel %vm383, %v1156, 0
      %v1182 = vsel %vm383, %v1157, 0
      %v1185 = vsel %vm459, %v1159, 0
      %1187 = vmatprep.subr.mxu0 0.0
      %1188 = vmatpush1.msra.mxu0 %v1185
      %1189 = vmatprep.subr.mxu0 0.0
      %1190 = vmatpush1.msra.mxu0 0.0
      %1191 = vmatprep.subr.mxu0 0.0
      %1192 = vmatpush1.msra.mxu0 0.0
      %1193 = vmatprep.subr.mxu0 0.0
      %1194 = vmatpush1.msra.mxu0 0.0
      %1195 = vmatprep.subr.mxu0 0.0
      %1196 = vmatpush1.msra.mxu0 0.0
      %1197 = vmatprep.subr.mxu0 0.0
      %1198 = vmatpush1.msra.mxu0 0.0
      %1199 = vmatprep.subr.mxu0 0.0
      %1200 = vmatpush1.msra.mxu0 0.0
      %1201 = vmatprep.subr.mxu0 0.0
      %1202 = vmatpush1.msra.mxu0 0.0
      %1203 = vmatprep.subr.mxu0 0.0
      %1204 = vmatpush1.msra.mxu0 0.0
      %1205 = vmatprep.subr.mxu0 0.0
      %1206 = vmatpush1.msra.mxu0 0.0
      %1207 = vmatprep.subr.mxu0 0.0
      %1208 = vmatpush1.msra.mxu0 0.0
      %1209 = vmatprep.subr.mxu0 0.0
      %1210 = vmatpush1.msra.mxu0 0.0
      %1211 = vmatprep.subr.mxu0 0.0
      %1212 = vmatpush1.msra.mxu0 0.0
      %1213 = vmatprep.subr.mxu0 0.0
      %1214 = vmatpush1.msra.mxu0 0.0
      %1215 = vmatprep.subr.mxu0 0.0
      %1216 = vmatpush1.msra.mxu0 0.0
      %1217 = vmatprep.subr.mxu0 0.0
      %1218 = vmatpush1.msra.mxu0 0.0
      %1219 = vmatprep.subr.mxu0 0.0
      %1220 = vmatpush1.msra.mxu0 0.0
      %1221 = vmatprep.subr.mxu0 0.0
      %1222 = vmatpush1.msra.mxu0 0.0
      %1223 = vmatprep.subr.mxu0 0.0
      %1224 = vmatpush1.msra.mxu0 0.0
      %1225 = vmatprep.subr.mxu0 0.0
      %1226 = vmatpush1.msra.mxu0 0.0
      %1227 = vmatprep.subr.mxu0 0.0
      %1228 = vmatpush1.msra.mxu0 0.0
      %1229 = vmatprep.subr.mxu0 0.0
      %1230 = vmatpush1.msra.mxu0 0.0
      %1231 = vmatprep.subr.mxu0 0.0
      %1232 = vmatpush1.msra.mxu0 0.0
      %1233 = vmatprep.subr.mxu0 0.0
      %1234 = vmatpush1.msra.mxu0 0.0
      %1235 = vmatprep.subr.mxu0 0.0
      %1236 = vmatpush1.msra.mxu0 0.0
      %1237 = vmatprep.subr.mxu0 0.0
      %1238 = vmatpush1.msra.mxu0 0.0
      %1239 = vmatprep.subr.mxu0 0.0
      %1240 = vmatpush1.msra.mxu0 0.0
      %1241 = vmatprep.subr.mxu0 0.0
      %1242 = vmatpush1.msra.mxu0 0.0
      %1243 = vmatprep.subr.mxu0 0.0
      %1244 = vmatpush1.msra.mxu0 0.0
      %1245 = vmatprep.subr.mxu0 0.0
      %1246 = vmatpush1.msra.mxu0 0.0
      %1247 = vmatprep.subr.mxu0 0.0
      %1248 = vmatpush1.msra.mxu0 0.0
      %1249 = vmatprep.subr.mxu0 0.0
      %1250 = vmatpush1.msra.mxu0 0.0
      %1251 = vmatprep.mubr.f32.mxu0 0.0
      %1252 = vmatmul.mubr.f32.gmra.mrb[0].mxu0 %v1161
      %v1253 = vpop.f32.mrb[0].mxu0
      %v1254 = vadd.f32 0.0, %v1253
      %v1255 = vpop.f32.mrb[0].mxu0
      %1256 = vmatprep.mubr.f32.mxu0 0.0
      %1257 = vmatmul.mubr.f32.gmra.mrb[0].mxu0 %v1164
      %v1258 = vpop.f32.mrb[0].mxu0
      %v1259 = vadd.f32 0.0, %v1258
      %v1260 = vpop.f32.mrb[0].mxu0
      %1261 = vmatprep.mubr.f32.mxu0 0.0
      %1262 = vmatmul.mubr.f32.gmra.mrb[0].mxu0 %v1167
      %v1263 = vpop.f32.mrb[0].mxu0
      %v1264 = vadd.f32 0.0, %v1263
      %v1265 = vpop.f32.mrb[0].mxu0
      %1266 = vmatprep.mubr.f32.mxu0 0.0
      %1267 = vmatmul.mubr.f32.gmra.mrb[0].mxu0 %v1170
      %v1268 = vpop.f32.mrb[0].mxu0
      %v1269 = vadd.f32 0.0, %v1268
      %v1270 = vpop.f32.mrb[0].mxu0
      %1271 = vmatprep.mubr.f32.mxu0 0.0
      %1272 = vmatmul.mubr.f32.gmra.mrb[0].mxu0 %v1173
      %v1273 = vpop.f32.mrb[0].mxu0
      %v1274 = vadd.f32 0.0, %v1273
      %v1275 = vpop.f32.mrb[0].mxu0
      %1276 = vmatprep.mubr.f32.mxu0 0.0
      %1277 = vmatmul.mubr.f32.gmra.mrb[0].mxu0 %v1176
      %v1278 = vpop.f32.mrb[0].mxu0
      %v1279 = vadd.f32 0.0, %v1278
      %v1280 = vpop.f32.mrb[0].mxu0
      %1281 = vmatprep.mubr.f32.mxu0 0.0
      %1282 = vmatmul.mubr.f32.gmra.mrb[0].mxu0 %v1179
      %v1283 = vpop.f32.mrb[0].mxu0
      %v1284 = vadd.f32 0.0, %v1283
      %v1285 = vpop.f32.mrb[0].mxu0
      %1286 = vmatprep.mubr.f32.mxu0 0.0
      %1287 = vmatmul.mubr.f32.gmra.mrb[0].mxu0 %v1182
      %v1288 = vpop.f32.mrb[0].mxu0
      %v1289 = vadd.f32 0.0, %v1288
      %v1290 = vpop.f32.mrb[0].mxu0
      %1291 = vdwg.mxu0
      %v1292 = vadd.f32 %v1142, %v1254
      %v1293 = vadd.f32 %v1143, %v1259
      %v1294 = vadd.f32 %v1144, %v1264
      %v1295 = vadd.f32 %v1145, %v1269
      %v1296 = vadd.f32 %v1146, %v1274
      %v1297 = vadd.f32 %v1147, %v1279
      %v1298 = vadd.f32 %v1148, %v1284
      %v1299 = vadd.f32 %v1149, %v1289
      %s1300 = scalar_lea.vmem [#allocation2], 48
      %v1301 = vld [vmem:[%s1300 + $0x7] sm:$0xff]
      %v1302 = vld [vmem:[%s1300 + $0x1f] sm:$0xff]
      %v1303 = vld [vmem:[%s1300 + $0x37] sm:$0xff]
      %v1304 = vld [vmem:[%s1300 + $0x4f] sm:$0xff]
      %v1305 = vld [vmem:[%s1300 + $0x67] sm:$0xff]
      %v1306 = vld [vmem:[%s1300 + $0x7f] sm:$0xff]
      %v1307 = vld [vmem:[%s1300 + $0x97] sm:$0xff]
      %v1308 = vld [vmem:[%s1300 + $0xaf] sm:$0xff]
      %s1309 = scalar_lea.vmem %s1, 24
      %v1310 = vld [vmem:[%s1309] sm:$0xf]
      %v1312 = vsel %vm383, %v1301, 0
      %v1315 = vsel %vm383, %v1302, 0
      %v1318 = vsel %vm383, %v1303, 0
      %v1321 = vsel %vm383, %v1304, 0
      %v1324 = vsel %vm383, %v1305, 0
      %v1327 = vsel %vm383, %v1306, 0
      %v1330 = vsel %vm383, %v1307, 0
      %v1333 = vsel %vm383, %v1308, 0
      %v1336 = vsel %vm459, %v1310, 0
      %1338 = vmatprep.subr.mxu0 0.0
      %1339 = vmatpush1.msra.mxu0 %v1336
      %1340 = vmatprep.subr.mxu0 0.0
      %1341 = vmatpush1.msra.mxu0 0.0
      %1342 = vmatprep.subr.mxu0 0.0
      %1343 = vmatpush1.msra.mxu0 0.0
      %1344 = vmatprep.subr.mxu0 0.0
      %1345 = vmatpush1.msra.mxu0 0.0
      %1346 = vmatprep.subr.mxu0 0.0
      %1347 = vmatpush1.msra.mxu0 0.0
      %1348 = vmatprep.subr.mxu0 0.0
      %1349 = vmatpush1.msra.mxu0 0.0
      %1350 = vmatprep.subr.mxu0 0.0
      %1351 = vmatpush1.msra.mxu0 0.0
      %1352 = vmatprep.subr.mxu0 0.0
      %1353 = vmatpush1.msra.mxu0 0.0
      %1354 = vmatprep.subr.mxu0 0.0
      %1355 = vmatpush1.msra.mxu0 0.0
      %1356 = vmatprep.subr.mxu0 0.0
      %1357 = vmatpush1.msra.mxu0 0.0
      %1358 = vmatprep.subr.mxu0 0.0
      %1359 = vmatpush1.msra.mxu0 0.0
      %1360 = vmatprep.subr.mxu0 0.0
      %1361 = vmatpush1.msra.mxu0 0.0
      %1362 = vmatprep.subr.mxu0 0.0
      %1363 = vmatpush1.msra.mxu0 0.0
      %1364 = vmatprep.subr.mxu0 0.0
      %1365 = vmatpush1.msra.mxu0 0.0
      %1366 = vmatprep.subr.mxu0 0.0
      %1367 = vmatpush1.msra.mxu0 0.0
      %1368 = vmatprep.subr.mxu0 0.0
      %1369 = vmatpush1.msra.mxu0 0.0
      %1370 = vmatprep.subr.mxu0 0.0
      %1371 = vmatpush1.msra.mxu0 0.0
      %1372 = vmatprep.subr.mxu0 0.0
      %1373 = vmatpush1.msra.mxu0 0.0
      %1374 = vmatprep.subr.mxu0 0.0
      %1375 = vmatpush1.msra.mxu0 0.0
      %1376 = vmatprep.subr.mxu0 0.0
      %1377 = vmatpush1.msra.mxu0 0.0
      %1378 = vmatprep.subr.mxu0 0.0
      %1379 = vmatpush1.msra.mxu0 0.0
      %1380 = vmatprep.subr.mxu0 0.0
      %1381 = vmatpush1.msra.mxu0 0.0
      %1382 = vmatprep.subr.mxu0 0.0
      %1383 = vmatpush1.msra.mxu0 0.0
      %1384 = vmatprep.subr.mxu0 0.0
      %1385 = vmatpush1.msra.mxu0 0.0
      %1386 = vmatprep.subr.mxu0 0.0
      %1387 = vmatpush1.msra.mxu0 0.0
      %1388 = vmatprep.subr.mxu0 0.0
      %1389 = vmatpush1.msra.mxu0 0.0
      %1390 = vmatprep.subr.mxu0 0.0
      %1391 = vmatpush1.msra.mxu0 0.0
      %1392 = vmatprep.subr.mxu0 0.0
      %1393 = vmatpush1.msra.mxu0 0.0
      %1394 = vmatprep.subr.mxu0 0.0
      %1395 = vmatpush1.msra.mxu0 0.0
      %1396 = vmatprep.subr.mxu0 0.0
      %1397 = vmatpush1.msra.mxu0 0.0
      %1398 = vmatprep.subr.mxu0 0.0
      %1399 = vmatpush1.msra.mxu0 0.0
      %1400 = vmatprep.subr.mxu0 0.0
      %1401 = vmatpush1.msra.mxu0 0.0
      %1402 = vmatprep.mubr.f32.mxu0 0.0
      %1403 = vmatmul.mubr.f32.gmra.mrb[0].mxu0 %v1312
      %v1404 = vpop.f32.mrb[0].mxu0
      %v1405 = vadd.f32 0.0, %v1404
      %v1406 = vpop.f32.mrb[0].mxu0
      %1407 = vmatprep.mubr.f32.mxu0 0.0
      %1408 = vmatmul.mubr.f32.gmra.mrb[0].mxu0 %v1315
      %v1409 = vpop.f32.mrb[0].mxu0
      %v1410 = vadd.f32 0.0, %v1409
      %v1411 = vpop.f32.mrb[0].mxu0
      %1412 = vmatprep.mubr.f32.mxu0 0.0
      %1413 = vmatmul.mubr.f32.gmra.mrb[0].mxu0 %v1318
      %v1414 = vpop.f32.mrb[0].mxu0
      %v1415 = vadd.f32 0.0, %v1414
      %v1416 = vpop.f32.mrb[0].mxu0
      %1417 = vmatprep.mubr.f32.mxu0 0.0
      %1418 = vmatmul.mubr.f32.gmra.mrb[0].mxu0 %v1321
      %v1419 = vpop.f32.mrb[0].mxu0
      %v1420 = vadd.f32 0.0, %v1419
      %v1421 = vpop.f32.mrb[0].mxu0
      %1422 = vmatprep.mubr.f32.mxu0 0.0
      %1423 = vmatmul.mubr.f32.gmra.mrb[0].mxu0 %v1324
      %v1424 = vpop.f32.mrb[0].mxu0
      %v1425 = vadd.f32 0.0, %v1424
      %v1426 = vpop.f32.mrb[0].mxu0
      %1427 = vmatprep.mubr.f32.mxu0 0.0
      %1428 = vmatmul.mubr.f32.gmra.mrb[0].mxu0 %v1327
      %v1429 = vpop.f32.mrb[0].mxu0
      %v1430 = vadd.f32 0.0, %v1429
      %v1431 = vpop.f32.mrb[0].mxu0
      %1432 = vmatprep.mubr.f32.mxu0 0.0
      %1433 = vmatmul.mubr.f32.gmra.mrb[0].mxu0 %v1330
      %v1434 = vpop.f32.mrb[0].mxu0
      %v1435 = vadd.f32 0.0, %v1434
      %v1436 = vpop.f32.mrb[0].mxu0
      %1437 = vmatprep.mubr.f32.mxu0 0.0
      %1438 = vmatmul.mubr.f32.gmra.mrb[0].mxu0 %v1333
      %v1439 = vpop.f32.mrb[0].mxu0
      %v1440 = vadd.f32 0.0, %v1439
      %v1441 = vpop.f32.mrb[0].mxu0
      %1442 = vdwg.mxu0
      %v1443 = vadd.f32 %v1292, %v1405
      %v1444 = vadd.f32 %v1293, %v1410
      %v1445 = vadd.f32 %v1294, %v1415
      %v1446 = vadd.f32 %v1295, %v1420
      %v1447 = vadd.f32 %v1296, %v1425
      %v1448 = vadd.f32 %v1297, %v1430
      %v1449 = vadd.f32 %v1298, %v1435
      %v1450 = vadd.f32 %v1299, %v1440
      %v1451 = vld [vmem:[%s1300 + $0x8] sm:$0xff]
      %v1452 = vld [vmem:[%s1300 + $0x20] sm:$0xff]
      %v1453 = vld [vmem:[%s1300 + $0x38] sm:$0xff]
      %v1454 = vld [vmem:[%s1300 + $0x50] sm:$0xff]
      %v1455 = vld [vmem:[%s1300 + $0x68] sm:$0xff]
      %v1456 = vld [vmem:[%s1300 + $0x80] sm:$0xff]
      %v1457 = vld [vmem:[%s1300 + $0x98] sm:$0xff]
      %v1458 = vld [vmem:[%s1300 + $0xb0] sm:$0xff]
      %s1459 = scalar_lea.vmem %s1, 28
      %v1460 = vld [vmem:[%s1459] sm:$0xf]
      %v1462 = vsel %vm383, %v1451, 0
      %v1465 = vsel %vm383, %v1452, 0
      %v1468 = vsel %vm383, %v1453, 0
      %v1471 = vsel %vm383, %v1454, 0
      %v1474 = vsel %vm383, %v1455, 0
      %v1477 = vsel %vm383, %v1456, 0
      %v1480 = vsel %vm383, %v1457, 0
      %v1483 = vsel %vm383, %v1458, 0
      %v1486 = vsel %vm459, %v1460, 0
      %1488 = vmatprep.subr.mxu0 0.0
      %1489 = vmatpush1.msra.mxu0 %v1486
      %1490 = vmatprep.subr.mxu0 0.0
      %1491 = vmatpush1.msra.mxu0 0.0
      %1492 = vmatprep.subr.mxu0 0.0
      %1493 = vmatpush1.msra.mxu0 0.0
      %1494 = vmatprep.subr.mxu0 0.0
      %1495 = vmatpush1.msra.mxu0 0.0
      %1496 = vmatprep.subr.mxu0 0.0
      %1497 = vmatpush1.msra.mxu0 0.0
      %1498 = vmatprep.subr.mxu0 0.0
      %1499 = vmatpush1.msra.mxu0 0.0
      %1500 = vmatprep.subr.mxu0 0.0
      %1501 = vmatpush1.msra.mxu0 0.0
      %1502 = vmatprep.subr.mxu0 0.0
      %1503 = vmatpush1.msra.mxu0 0.0
      %1504 = vmatprep.subr.mxu0 0.0
      %1505 = vmatpush1.msra.mxu0 0.0
      %1506 = vmatprep.subr.mxu0 0.0
      %1507 = vmatpush1.msra.mxu0 0.0
      %1508 = vmatprep.subr.mxu0 0.0
      %1509 = vmatpush1.msra.mxu0 0.0
      %1510 = vmatprep.subr.mxu0 0.0
      %1511 = vmatpush1.msra.mxu0 0.0
      %1512 = vmatprep.subr.mxu0 0.0
      %1513 = vmatpush1.msra.mxu0 0.0
      %1514 = vmatprep.subr.mxu0 0.0
      %1515 = vmatpush1.msra.mxu0 0.0
      %1516 = vmatprep.subr.mxu0 0.0
      %1517 = vmatpush1.msra.mxu0 0.0
      %1518 = vmatprep.subr.mxu0 0.0
      %1519 = vmatpush1.msra.mxu0 0.0
      %1520 = vmatprep.subr.mxu0 0.0
      %1521 = vmatpush1.msra.mxu0 0.0
      %1522 = vmatprep.subr.mxu0 0.0
      %1523 = vmatpush1.msra.mxu0 0.0
      %1524 = vmatprep.subr.mxu0 0.0
      %1525 = vmatpush1.msra.mxu0 0.0
      %1526 = vmatprep.subr.mxu0 0.0
      %1527 = vmatpush1.msra.mxu0 0.0
      %1528 = vmatprep.subr.mxu0 0.0
      %1529 = vmatpush1.msra.mxu0 0.0
      %1530 = vmatprep.subr.mxu0 0.0
      %1531 = vmatpush1.msra.mxu0 0.0
      %1532 = vmatprep.subr.mxu0 0.0
      %1533 = vmatpush1.msra.mxu0 0.0
      %1534 = vmatprep.subr.mxu0 0.0
      %1535 = vmatpush1.msra.mxu0 0.0
      %1536 = vmatprep.subr.mxu0 0.0
      %1537 = vmatpush1.msra.mxu0 0.0
      %1538 = vmatprep.subr.mxu0 0.0
      %1539 = vmatpush1.msra.mxu0 0.0
      %1540 = vmatprep.subr.mxu0 0.0
      %1541 = vmatpush1.msra.mxu0 0.0
      %1542 = vmatprep.subr.mxu0 0.0
      %1543 = vmatpush1.msra.mxu0 0.0
      %1544 = vmatprep.subr.mxu0 0.0
      %1545 = vmatpush1.msra.mxu0 0.0
      %1546 = vmatprep.subr.mxu0 0.0
      %1547 = vmatpush1.msra.mxu0 0.0
      %1548 = vmatprep.subr.mxu0 0.0
      %1549 = vmatpush1.msra.mxu0 0.0
      %1550 = vmatprep.subr.mxu0 0.0
      %1551 = vmatpush1.msra.mxu0 0.0
      %1552 = vmatprep.mubr.f32.mxu0 0.0
      %1553 = vmatmul.mubr.f32.gmra.mrb[0].mxu0 %v1462
      %v1554 = vpop.f32.mrb[0].mxu0
      %v1555 = vadd.f32 0.0, %v1554
      %v1556 = vpop.f32.mrb[0].mxu0
      %1557 = vmatprep.mubr.f32.mxu0 0.0
      %1558 = vmatmul.mubr.f32.gmra.mrb[0].mxu0 %v1465
      %v1559 = vpop.f32.mrb[0].mxu0
      %v1560 = vadd.f32 0.0, %v1559
      %v1561 = vpop.f32.mrb[0].mxu0
      %1562 = vmatprep.mubr.f32.mxu0 0.0
      %1563 = vmatmul.mubr.f32.gmra.mrb[0].mxu0 %v1468
      %v1564 = vpop.f32.mrb[0].mxu0
      %v1565 = vadd.f32 0.0, %v1564
      %v1566 = vpop.f32.mrb[0].mxu0
      %1567 = vmatprep.mubr.f32.mxu0 0.0
      %1568 = vmatmul.mubr.f32.gmra.mrb[0].mxu0 %v1471
      %v1569 = vpop.f32.mrb[0].mxu0
      %v1570 = vadd.f32 0.0, %v1569
      %v1571 = vpop.f32.mrb[0].mxu0
      %1572 = vmatprep.mubr.f32.mxu0 0.0
      %1573 = vmatmul.mubr.f32.gmra.mrb[0].mxu0 %v1474
      %v1574 = vpop.f32.mrb[0].mxu0
      %v1575 = vadd.f32 0.0, %v1574
      %v1576 = vpop.f32.mrb[0].mxu0
      %1577 = vmatprep.mubr.f32.mxu0 0.0
      %1578 = vmatmul.mubr.f32.gmra.mrb[0].mxu0 %v1477
      %v1579 = vpop.f32.mrb[0].mxu0
      %v1580 = vadd.f32 0.0, %v1579
      %v1581 = vpop.f32.mrb[0].mxu0
      %1582 = vmatprep.mubr.f32.mxu0 0.0
      %1583 = vmatmul.mubr.f32.gmra.mrb[0].mxu0 %v1480
      %v1584 = vpop.f32.mrb[0].mxu0
      %v1585 = vadd.f32 0.0, %v1584
      %v1586 = vpop.f32.mrb[0].mxu0
      %1587 = vmatprep.mubr.f32.mxu0 0.0
      %1588 = vmatmul.mubr.f32.gmra.mrb[0].mxu0 %v1483
      %v1589 = vpop.f32.mrb[0].mxu0
      %v1590 = vadd.f32 0.0, %v1589
      %v1591 = vpop.f32.mrb[0].mxu0
      %1592 = vdwg.mxu0
      %v1593 = vadd.f32 %v1443, %v1555
      %v1594 = vadd.f32 %v1444, %v1560
      %v1595 = vadd.f32 %v1445, %v1565
      %v1596 = vadd.f32 %v1446, %v1570
      %v1597 = vadd.f32 %v1447, %v1575
      %v1598 = vadd.f32 %v1448, %v1580
      %v1599 = vadd.f32 %v1449, %v1585
      %v1600 = vadd.f32 %v1450, %v1590
      %v1601 = vld [vmem:[%s1300 + $0x9] sm:$0xff]
      %v1602 = vld [vmem:[%s1300 + $0x21] sm:$0xff]
      %v1603 = vld [vmem:[%s1300 + $0x39] sm:$0xff]
      %v1604 = vld [vmem:[%s1300 + $0x51] sm:$0xff]
      %v1605 = vld [vmem:[%s1300 + $0x69] sm:$0xff]
      %v1606 = vld [vmem:[%s1300 + $0x81] sm:$0xff]
      %v1607 = vld [vmem:[%s1300 + $0x99] sm:$0xff]
      %v1608 = vld [vmem:[%s1300 + $0xb1] sm:$0xff]
      %s1609 = scalar_lea.vmem %s1, 32
      %v1610 = vld [vmem:[%s1609] sm:$0xf]
      %v1612 = vsel %vm383, %v1601, 0
      %v1615 = vsel %vm383, %v1602, 0
      %v1618 = vsel %vm383, %v1603, 0
      %v1621 = vsel %vm383, %v1604, 0
      %v1624 = vsel %vm383, %v1605, 0
      %v1627 = vsel %vm383, %v1606, 0
      %v1630 = vsel %vm383, %v1607, 0
      %v1633 = vsel %vm383, %v1608, 0
      %v1636 = vsel %vm459, %v1610, 0
      %1638 = vmatprep.subr.mxu0 0.0
      %1639 = vmatpush1.msra.mxu0 %v1636
      %1640 = vmatprep.subr.mxu0 0.0
      %1641 = vmatpush1.msra.mxu0 0.0
      %1642 = vmatprep.subr.mxu0 0.0
      %1643 = vmatpush1.msra.mxu0 0.0
      %1644 = vmatprep.subr.mxu0 0.0
      %1645 = vmatpush1.msra.mxu0 0.0
      %1646 = vmatprep.subr.mxu0 0.0
      %1647 = vmatpush1.msra.mxu0 0.0
      %1648 = vmatprep.subr.mxu0 0.0
      %1649 = vmatpush1.msra.mxu0 0.0
      %1650 = vmatprep.subr.mxu0 0.0
      %1651 = vmatpush1.msra.mxu0 0.0
      %1652 = vmatprep.subr.mxu0 0.0
      %1653 = vmatpush1.msra.mxu0 0.0
      %1654 = vmatprep.subr.mxu0 0.0
      %1655 = vmatpush1.msra.mxu0 0.0
      %1656 = vmatprep.subr.mxu0 0.0
      %1657 = vmatpush1.msra.mxu0 0.0
      %1658 = vmatprep.subr.mxu0 0.0
      %1659 = vmatpush1.msra.mxu0 0.0
      %1660 = vmatprep.subr.mxu0 0.0
      %1661 = vmatpush1.msra.mxu0 0.0
      %1662 = vmatprep.subr.mxu0 0.0
      %1663 = vmatpush1.msra.mxu0 0.0
      %1664 = vmatprep.subr.mxu0 0.0
      %1665 = vmatpush1.msra.mxu0 0.0
      %1666 = vmatprep.subr.mxu0 0.0
      %1667 = vmatpush1.msra.mxu0 0.0
      %1668 = vmatprep.subr.mxu0 0.0
      %1669 = vmatpush1.msra.mxu0 0.0
      %1670 = vmatprep.subr.mxu0 0.0
      %1671 = vmatpush1.msra.mxu0 0.0
      %1672 = vmatprep.subr.mxu0 0.0
      %1673 = vmatpush1.msra.mxu0 0.0
      %1674 = vmatprep.subr.mxu0 0.0
      %1675 = vmatpush1.msra.mxu0 0.0
      %1676 = vmatprep.subr.mxu0 0.0
      %1677 = vmatpush1.msra.mxu0 0.0
      %1678 = vmatprep.subr.mxu0 0.0
      %1679 = vmatpush1.msra.mxu0 0.0
      %1680 = vmatprep.subr.mxu0 0.0
      %1681 = vmatpush1.msra.mxu0 0.0
      %1682 = vmatprep.subr.mxu0 0.0
      %1683 = vmatpush1.msra.mxu0 0.0
      %1684 = vmatprep.subr.mxu0 0.0
      %1685 = vmatpush1.msra.mxu0 0.0
      %1686 = vmatprep.subr.mxu0 0.0
      %1687 = vmatpush1.msra.mxu0 0.0
      %1688 = vmatprep.subr.mxu0 0.0
      %1689 = vmatpush1.msra.mxu0 0.0
      %1690 = vmatprep.subr.mxu0 0.0
      %1691 = vmatpush1.msra.mxu0 0.0
      %1692 = vmatprep.subr.mxu0 0.0
      %1693 = vmatpush1.msra.mxu0 0.0
      %1694 = vmatprep.subr.mxu0 0.0
      %1695 = vmatpush1.msra.mxu0 0.0
      %1696 = vmatprep.subr.mxu0 0.0
      %1697 = vmatpush1.msra.mxu0 0.0
      %1698 = vmatprep.subr.mxu0 0.0
      %1699 = vmatpush1.msra.mxu0 0.0
      %1700 = vmatprep.subr.mxu0 0.0
      %1701 = vmatpush1.msra.mxu0 0.0
      %1702 = vmatprep.mubr.f32.mxu0 0.0
      %1703 = vmatmul.mubr.f32.gmra.mrb[0].mxu0 %v1612
      %v1704 = vpop.f32.mrb[0].mxu0
      %v1705 = vadd.f32 0.0, %v1704
      %v1706 = vpop.f32.mrb[0].mxu0
      %1707 = vmatprep.mubr.f32.mxu0 0.0
      %1708 = vmatmul.mubr.f32.gmra.mrb[0].mxu0 %v1615
      %v1709 = vpop.f32.mrb[0].mxu0
      %v1710 = vadd.f32 0.0, %v1709
      %v1711 = vpop.f32.mrb[0].mxu0
      %1712 = vmatprep.mubr.f32.mxu0 0.0
      %1713 = vmatmul.mubr.f32.gmra.mrb[0].mxu0 %v1618
      %v1714 = vpop.f32.mrb[0].mxu0
      %v1715 = vadd.f32 0.0, %v1714
      %v1716 = vpop.f32.mrb[0].mxu0
      %1717 = vmatprep.mubr.f32.mxu0 0.0
      %1718 = vmatmul.mubr.f32.gmra.mrb[0].mxu0 %v1621
      %v1719 = vpop.f32.mrb[0].mxu0
      %v1720 = vadd.f32 0.0, %v1719
      %v1721 = vpop.f32.mrb[0].mxu0
      %1722 = vmatprep.mubr.f32.mxu0 0.0
      %1723 = vmatmul.mubr.f32.gmra.mrb[0].mxu0 %v1624
      %v1724 = vpop.f32.mrb[0].mxu0
      %v1725 = vadd.f32 0.0, %v1724
      %v1726 = vpop.f32.mrb[0].mxu0
      %1727 = vmatprep.mubr.f32.mxu0 0.0
      %1728 = vmatmul.mubr.f32.gmra.mrb[0].mxu0 %v1627
      %v1729 = vpop.f32.mrb[0].mxu0
      %v1730 = vadd.f32 0.0, %v1729
      %v1731 = vpop.f32.mrb[0].mxu0
      %1732 = vmatprep.mubr.f32.mxu0 0.0
      %1733 = vmatmul.mubr.f32.gmra.mrb[0].mxu0 %v1630
      %v1734 = vpop.f32.mrb[0].mxu0
      %v1735 = vadd.f32 0.0, %v1734
      %v1736 = vpop.f32.mrb[0].mxu0
      %1737 = vmatprep.mubr.f32.mxu0 0.0
      %1738 = vmatmul.mubr.f32.gmra.mrb[0].mxu0 %v1633
      %v1739 = vpop.f32.mrb[0].mxu0
      %v1740 = vadd.f32 0.0, %v1739
      %v1741 = vpop.f32.mrb[0].mxu0
      %1742 = vdwg.mxu0
      %v1743 = vadd.f32 %v1593, %v1705
      %v1744 = vadd.f32 %v1594, %v1710
      %v1745 = vadd.f32 %v1595, %v1715
      %v1746 = vadd.f32 %v1596, %v1720
      %v1747 = vadd.f32 %v1597, %v1725
      %v1748 = vadd.f32 %v1598, %v1730
      %v1749 = vadd.f32 %v1599, %v1735
      %v1750 = vadd.f32 %v1600, %v1740
      %v1751 = vld [vmem:[%s2] sm:$0x1]
      %v1753 = vlaneseq
      %v1754 = vshrl.u32 %v1753, 7
      %v1755 = vsub.s32 0, %v1754
      %v1756 = vrot.slane %v1751, %v1755
      %v1758 = vmul.f32 %v1743, %v1756
      %v1759 = vmul.f32 %v1744, %v1756
      %v1760 = vmul.f32 %v1745, %v1756
      %v1761 = vmul.f32 %v1746, %v1756
      %v1762 = vmul.f32 %v1747, %v1756
      %v1763 = vmul.f32 %v1748, %v1756
      %v1764 = vmul.f32 %v1749, %v1756
      %v1765 = vmul.f32 %v1750, %v1756
      %v1766 = vld [vmem:[%s3] sm:$0x1]
      %v1768 = vlaneseq
      %v1769 = vshrl.u32 %v1768, 7
      %v1770 = vsub.s32 0, %v1769
      %v1771 = vrot.slane %v1766, %v1770
      %v1773 = vadd.f32 %v1758, %v1771
      %v1774 = vadd.f32 %v1759, %v1771
      %v1775 = vadd.f32 %v1760, %v1771
      %v1776 = vadd.f32 %v1761, %v1771
      %v1777 = vadd.f32 %v1762, %v1771
      %v1778 = vadd.f32 %v1763, %v1771
      %v1779 = vadd.f32 %v1764, %v1771
      %v1780 = vadd.f32 %v1765, %v1771
      %v1781 = vmax.f32 %v1773, 0.0
      %v1782 = vmax.f32 %v1774, 0.0
      %v1783 = vmax.f32 %v1775, 0.0
      %v1784 = vmax.f32 %v1776, 0.0
      %v1785 = vmax.f32 %v1777, 0.0
      %v1786 = vmax.f32 %v1778, 0.0
      %v1787 = vmax.f32 %v1779, 0.0
      %v1788 = vmax.f32 %v1780, 0.0
      %vm1789 = vcmask 64512
      %1790 = vst.msk [vmem:[#allocation3] sm:$0xff] %vm1789, 0.0
      %1791 = vst.msk [vmem:[#allocation3 + $0x8] sm:$0xff] %vm1789, 0.0
      %1792 = vst.msk [vmem:[#allocation3 + $0x10] sm:$0xff] %vm1789, 0.0
      %s1793 = scalar_lea.vmem [#allocation3], 216
      %1794 = vst.msk [vmem:[%s1793] sm:$0xff] %vm1789, 0.0
      %1795 = vst.msk [vmem:[%s1793 + $0x8] sm:$0xff] %vm1789, 0.0
      %1796 = vst.msk [vmem:[%s1793 + $0x10] sm:$0xff] %vm1789, 0.0
      %s1797 = scalar_lea.vmem [#allocation3], 24
      %1798 = vst.msk [vmem:[%s1797] sm:$0xff] %vm1789, 0.0
      %1799 = vst.msk [vmem:[%s1797 + $0x18] sm:$0xff] %vm1789, 0.0
      %1800 = vst.msk [vmem:[%s1797 + $0x30] sm:$0xff] %vm1789, 0.0
      %1801 = vst.msk [vmem:[%s1797 + $0x48] sm:$0xff] %vm1789, 0.0
      %1802 = vst.msk [vmem:[%s1797 + $0x60] sm:$0xff] %vm1789, 0.0
      %1803 = vst.msk [vmem:[%s1797 + $0x78] sm:$0xff] %vm1789, 0.0
      %1804 = vst.msk [vmem:[%s1797 + $0x90] sm:$0xff] %vm1789, 0.0
      %1805 = vst.msk [vmem:[%s1797 + $0xa8] sm:$0xff] %vm1789, 0.0
      %1806 = vst.msk [vmem:[%s1797 + $0x10] sm:$0xff] %vm1789, 0.0
      %1807 = vst.msk [vmem:[%s1797 + $0x28] sm:$0xff] %vm1789, 0.0
      %1808 = vst.msk [vmem:[%s1797 + $0x40] sm:$0xff] %vm1789, 0.0
      %1809 = vst.msk [vmem:[%s1797 + $0x58] sm:$0xff] %vm1789, 0.0
      %1810 = vst.msk [vmem:[%s1797 + $0x70] sm:$0xff] %vm1789, 0.0
      %1811 = vst.msk [vmem:[%s1797 + $0x88] sm:$0xff] %vm1789, 0.0
      %1812 = vst.msk [vmem:[%s1797 + $0xa0] sm:$0xff] %vm1789, 0.0
      %1813 = vst.msk [vmem:[%s1797 + $0xb8] sm:$0xff] %vm1789, 0.0
      %1814 = vst.msk [vmem:[%s1797 + $0x8] sm:$0xff] %vm1789, %v1781
      %1815 = vst.msk [vmem:[%s1797 + $0x20] sm:$0xff] %vm1789, %v1782
      %1816 = vst.msk [vmem:[%s1797 + $0x38] sm:$0xff] %vm1789, %v1783
      %1817 = vst.msk [vmem:[%s1797 + $0x50] sm:$0xff] %vm1789, %v1784
      %1818 = vst.msk [vmem:[%s1797 + $0x68] sm:$0xff] %vm1789, %v1785
      %1819 = vst.msk [vmem:[%s1797 + $0x80] sm:$0xff] %vm1789, %v1786
      %1820 = vst.msk [vmem:[%s1797 + $0x98] sm:$0xff] %vm1789, %v1787
      %1821 = vst.msk [vmem:[%s1797 + $0xb0] sm:$0xff] %vm1789, %v1788
      %v1822 = vld [vmem:[#allocation3 + $0x7] sm:$0xff]
      %v1823 = vld [vmem:[#allocation3 + $0x1f] sm:$0xff]
      %v1824 = vld [vmem:[#allocation3 + $0x37] sm:$0xff]
      %v1825 = vld [vmem:[#allocation3 + $0x4f] sm:$0xff]
      %v1826 = vld [vmem:[#allocation3 + $0x67] sm:$0xff]
      %v1827 = vld [vmem:[#allocation3 + $0x7f] sm:$0xff]
      %v1828 = vld [vmem:[#allocation3 + $0x97] sm:$0xff]
      %v1829 = vld [vmem:[#allocation3 + $0xaf] sm:$0xff]
      %v1830 = vld [vmem:[%s4] sm:$0xff]
      %v1831 = vld [vmem:[#allocation3 + $0x8] sm:$0xff]
      %v1832 = vld [vmem:[#allocation3 + $0x20] sm:$0xff]
      %v1833 = vld [vmem:[#allocation3 + $0x38] sm:$0xff]
      %v1834 = vld [vmem:[#allocation3 + $0x50] sm:$0xff]
      %v1835 = vld [vmem:[#allocation3 + $0x68] sm:$0xff]
      %v1836 = vld [vmem:[#allocation3 + $0x80] sm:$0xff]
      %v1837 = vld [vmem:[#allocation3 + $0x98] sm:$0xff]
      %v1838 = vld [vmem:[#allocation3 + $0xb0] sm:$0xff]
      %s1839 = scalar_lea.vmem %s4, 8
      %v1840 = vld [vmem:[%s1839] sm:$0xff]
      %v1842 = vsel %vm1789, %v1831, 0
      %v1845 = vsel %vm1789, %v1832, 0
      %v1848 = vsel %vm1789, %v1833, 0
      %v1851 = vsel %vm1789, %v1834, 0
      %v1854 = vsel %vm1789, %v1835, 0
      %v1857 = vsel %vm1789, %v1836, 0
      %v1860 = vsel %vm1789, %v1837, 0
      %v1863 = vsel %vm1789, %v1838, 0
      %1865 = vmatprep.subr.mxu0 0.0
      %1866 = vmatpush1.msra.mxu0 %v1840
      %1867 = vmatprep.subr.mxu0 0.0
      %1868 = vmatpush1.msra.mxu0 0.0
      %1869 = vmatprep.subr.mxu0 0.0
      %1870 = vmatpush1.msra.mxu0 0.0
      %1871 = vmatprep.subr.mxu0 0.0
      %1872 = vmatpush1.msra.mxu0 0.0
      %1873 = vmatprep.subr.mxu0 0.0
      %1874 = vmatpush1.msra.mxu0 0.0
      %1875 = vmatprep.subr.mxu0 0.0
      %1876 = vmatpush1.msra.mxu0 0.0
      %1877 = vmatprep.subr.mxu0 0.0
      %1878 = vmatpush1.msra.mxu0 0.0
      %1879 = vmatprep.subr.mxu0 0.0
      %1880 = vmatpush1.msra.mxu0 0.0
      %1881 = vmatprep.subr.mxu0 0.0
      %1882 = vmatpush1.msra.mxu0 0.0
      %1883 = vmatprep.subr.mxu0 0.0
      %1884 = vmatpush1.msra.mxu0 0.0
      %1885 = vmatprep.subr.mxu0 0.0
      %1886 = vmatpush1.msra.mxu0 0.0
      %1887 = vmatprep.subr.mxu0 0.0
      %1888 = vmatpush1.msra.mxu0 0.0
      %1889 = vmatprep.subr.mxu0 0.0
      %1890 = vmatpush1.msra.mxu0 0.0
      %1891 = vmatprep.subr.mxu0 0.0
      %1892 = vmatpush1.msra.mxu0 0.0
      %1893 = vmatprep.subr.mxu0 0.0
      %1894 = vmatpush1.msra.mxu0 0.0
      %1895 = vmatprep.subr.mxu0 0.0
      %1896 = vmatpush1.msra.mxu0 0.0
      %1897 = vmatprep.subr.mxu0 0.0
      %1898 = vmatpush1.msra.mxu0 0.0
      %1899 = vmatprep.subr.mxu0 0.0
      %1900 = vmatpush1.msra.mxu0 0.0
      %1901 = vmatprep.subr.mxu0 0.0
      %1902 = vmatpush1.msra.mxu0 0.0
      %1903 = vmatprep.subr.mxu0 0.0
      %1904 = vmatpush1.msra.mxu0 0.0
      %1905 = vmatprep.subr.mxu0 0.0
      %1906 = vmatpush1.msra.mxu0 0.0
      %1907 = vmatprep.subr.mxu0 0.0
      %1908 = vmatpush1.msra.mxu0 0.0
      %1909 = vmatprep.subr.mxu0 0.0
      %1910 = vmatpush1.msra.mxu0 0.0
      %1911 = vmatprep.subr.mxu0 0.0
      %1912 = vmatpush1.msra.mxu0 0.0
      %1913 = vmatprep.subr.mxu0 0.0
      %1914 = vmatpush1.msra.mxu0 0.0
      %1915 = vmatprep.subr.mxu0 0.0
      %1916 = vmatpush1.msra.mxu0 0.0
      %1917 = vmatprep.subr.mxu0 0.0
      %1918 = vmatpush1.msra.mxu0 0.0
      %1919 = vmatprep.subr.mxu0 0.0
      %1920 = vmatpush1.msra.mxu0 0.0
      %1921 = vmatprep.subr.mxu0 0.0
      %1922 = vmatpush1.msra.mxu0 0.0
      %1923 = vmatprep.subr.mxu0 0.0
      %1924 = vmatpush1.msra.mxu0 0.0
      %1925 = vmatprep.subr.mxu0 0.0
      %1926 = vmatpush1.msra.mxu0 0.0
      %1927 = vmatprep.subr.mxu0 0.0
      %1928 = vmatpush1.msra.mxu0 0.0
      %1929 = vmatprep.mubr.f32.mxu0 0.0
      %1930 = vmatmul.mubr.f32.gmra.mrb[0].mxu0 %v1842
      %v1931 = vpop.f32.mrb[0].mxu0
      %v1932 = vadd.f32 0.0, %v1931
      %v1933 = vpop.f32.mrb[0].mxu0
      %1934 = vmatprep.mubr.f32.mxu0 0.0
      %1935 = vmatmul.mubr.f32.gmra.mrb[0].mxu0 %v1845
      %v1936 = vpop.f32.mrb[0].mxu0
      %v1937 = vadd.f32 0.0, %v1936
      %v1938 = vpop.f32.mrb[0].mxu0
      %1939 = vmatprep.mubr.f32.mxu0 0.0
      %1940 = vmatmul.mubr.f32.gmra.mrb[0].mxu0 %v1848
      %v1941 = vpop.f32.mrb[0].mxu0
      %v1942 = vadd.f32 0.0, %v1941
      %v1943 = vpop.f32.mrb[0].mxu0
      %1944 = vmatprep.mubr.f32.mxu0 0.0
      %1945 = vmatmul.mubr.f32.gmra.mrb[0].mxu0 %v1851
      %v1946 = vpop.f32.mrb[0].mxu0
      %v1947 = vadd.f32 0.0, %v1946
      %v1948 = vpop.f32.mrb[0].mxu0
      %1949 = vmatprep.mubr.f32.mxu0 0.0
      %1950 = vmatmul.mubr.f32.gmra.mrb[0].mxu0 %v1854
      %v1951 = vpop.f32.mrb[0].mxu0
      %v1952 = vadd.f32 0.0, %v1951
      %v1953 = vpop.f32.mrb[0].mxu0
      %1954 = vmatprep.mubr.f32.mxu0 0.0
      %1955 = vmatmul.mubr.f32.gmra.mrb[0].mxu0 %v1857
      %v1956 = vpop.f32.mrb[0].mxu0
      %v1957 = vadd.f32 0.0, %v1956
      %v1958 = vpop.f32.mrb[0].mxu0
      %1959 = vmatprep.mubr.f32.mxu0 0.0
      %1960 = vmatmul.mubr.f32.gmra.mrb[0].mxu0 %v1860
      %v1961 = vpop.f32.mrb[0].mxu0
      %v1962 = vadd.f32 0.0, %v1961
      %v1963 = vpop.f32.mrb[0].mxu0
      %1964 = vmatprep.mubr.f32.mxu0 0.0
      %1965 = vmatmul.mubr.f32.gmra.mrb[0].mxu0 %v1863
      %v1966 = vpop.f32.mrb[0].mxu0
      %v1967 = vadd.f32 0.0, %v1966
      %v1968 = vpop.f32.mrb[0].mxu0
      %1969 = vdwg.mxu0
      %v1971 = vsel %vm1789, %v1822, 0
      %v1974 = vsel %vm1789, %v1823, 0
      %v1977 = vsel %vm1789, %v1824, 0
      %v1980 = vsel %vm1789, %v1825, 0
      %v1983 = vsel %vm1789, %v1826, 0
      %v1986 = vsel %vm1789, %v1827, 0
      %v1989 = vsel %vm1789, %v1828, 0
      %v1992 = vsel %vm1789, %v1829, 0
      %1994 = vmatprep.subr.mxu0 0.0
      %1995 = vmatpush1.msra.mxu0 %v1830
      %1996 = vmatprep.subr.mxu0 0.0
      %1997 = vmatpush1.msra.mxu0 0.0
      %1998 = vmatprep.subr.mxu0 0.0
      %1999 = vmatpush1.msra.mxu0 0.0
      %2000 = vmatprep.subr.mxu0 0.0
      %2001 = vmatpush1.msra.mxu0 0.0
      %2002 = vmatprep.subr.mxu0 0.0
      %2003 = vmatpush1.msra.mxu0 0.0
      %2004 = vmatprep.subr.mxu0 0.0
      %2005 = vmatpush1.msra.mxu0 0.0
      %2006 = vmatprep.subr.mxu0 0.0
      %2007 = vmatpush1.msra.mxu0 0.0
      %2008 = vmatprep.subr.mxu0 0.0
      %2009 = vmatpush1.msra.mxu0 0.0
      %2010 = vmatprep.subr.mxu0 0.0
      %2011 = vmatpush1.msra.mxu0 0.0
      %2012 = vmatprep.subr.mxu0 0.0
      %2013 = vmatpush1.msra.mxu0 0.0
      %2014 = vmatprep.subr.mxu0 0.0
      %2015 = vmatpush1.msra.mxu0 0.0
      %2016 = vmatprep.subr.mxu0 0.0
      %2017 = vmatpush1.msra.mxu0 0.0
      %2018 = vmatprep.subr.mxu0 0.0
      %2019 = vmatpush1.msra.mxu0 0.0
      %2020 = vmatprep.subr.mxu0 0.0
      %2021 = vmatpush1.msra.mxu0 0.0
      %2022 = vmatprep.subr.mxu0 0.0
      %2023 = vmatpush1.msra.mxu0 0.0
      %2024 = vmatprep.subr.mxu0 0.0
      %2025 = vmatpush1.msra.mxu0 0.0
      %2026 = vmatprep.subr.mxu0 0.0
      %2027 = vmatpush1.msra.mxu0 0.0
      %2028 = vmatprep.subr.mxu0 0.0
      %2029 = vmatpush1.msra.mxu0 0.0
      %2030 = vmatprep.subr.mxu0 0.0
      %2031 = vmatpush1.msra.mxu0 0.0
      %2032 = vmatprep.subr.mxu0 0.0
      %2033 = vmatpush1.msra.mxu0 0.0
      %2034 = vmatprep.subr.mxu0 0.0
      %2035 = vmatpush1.msra.mxu0 0.0
      %2036 = vmatprep.subr.mxu0 0.0
      %2037 = vmatpush1.msra.mxu0 0.0
      %2038 = vmatprep.subr.mxu0 0.0
      %2039 = vmatpush1.msra.mxu0 0.0
      %2040 = vmatprep.subr.mxu0 0.0
      %2041 = vmatpush1.msra.mxu0 0.0
      %2042 = vmatprep.subr.mxu0 0.0
      %2043 = vmatpush1.msra.mxu0 0.0
      %2044 = vmatprep.subr.mxu0 0.0
      %2045 = vmatpush1.msra.mxu0 0.0
      %2046 = vmatprep.subr.mxu0 0.0
      %2047 = vmatpush1.msra.mxu0 0.0
      %2048 = vmatprep.subr.mxu0 0.0
      %2049 = vmatpush1.msra.mxu0 0.0
      %2050 = vmatprep.subr.mxu0 0.0
      %2051 = vmatpush1.msra.mxu0 0.0
      %2052 = vmatprep.subr.mxu0 0.0
      %2053 = vmatpush1.msra.mxu0 0.0
      %2054 = vmatprep.subr.mxu0 0.0
      %2055 = vmatpush1.msra.mxu0 0.0
      %2056 = vmatprep.subr.mxu0 0.0
      %2057 = vmatpush1.msra.mxu0 0.0
      %2058 = vmatprep.mubr.f32.mxu0 0.0
      %2059 = vmatmul.mubr.f32.gmra.mrb[0].mxu0 %v1971
      %v2060 = vpop.f32.mrb[0].mxu0
      %v2061 = vadd.f32 %v1932, %v2060
      %v2062 = vpop.f32.mrb[0].mxu0
      %2063 = vmatprep.mubr.f32.mxu0 0.0
      %2064 = vmatmul.mubr.f32.gmra.mrb[0].mxu0 %v1974
      %v2065 = vpop.f32.mrb[0].mxu0
      %v2066 = vadd.f32 %v1937, %v2065
      %v2067 = vpop.f32.mrb[0].mxu0
      %2068 = vmatprep.mubr.f32.mxu0 0.0
      %2069 = vmatmul.mubr.f32.gmra.mrb[0].mxu0 %v1977
      %v2070 = vpop.f32.mrb[0].mxu0
      %v2071 = vadd.f32 %v1942, %v2070
      %v2072 = vpop.f32.mrb[0].mxu0
      %2073 = vmatprep.mubr.f32.mxu0 0.0
      %2074 = vmatmul.mubr.f32.gmra.mrb[0].mxu0 %v1980
      %v2075 = vpop.f32.mrb[0].mxu0
      %v2076 = vadd.f32 %v1947, %v2075
      %v2077 = vpop.f32.mrb[0].mxu0
      %2078 = vmatprep.mubr.f32.mxu0 0.0
      %2079 = vmatmul.mubr.f32.gmra.mrb[0].mxu0 %v1983
      %v2080 = vpop.f32.mrb[0].mxu0
      %v2081 = vadd.f32 %v1952, %v2080
      %v2082 = vpop.f32.mrb[0].mxu0
      %2083 = vmatprep.mubr.f32.mxu0 0.0
      %2084 = vmatmul.mubr.f32.gmra.mrb[0].mxu0 %v1986
      %v2085 = vpop.f32.mrb[0].mxu0
      %v2086 = vadd.f32 %v1957, %v2085
      %v2087 = vpop.f32.mrb[0].mxu0
      %2088 = vmatprep.mubr.f32.mxu0 0.0
      %2089 = vmatmul.mubr.f32.gmra.mrb[0].mxu0 %v1989
      %v2090 = vpop.f32.mrb[0].mxu0
      %v2091 = vadd.f32 %v1962, %v2090
      %v2092 = vpop.f32.mrb[0].mxu0
      %2093 = vmatprep.mubr.f32.mxu0 0.0
      %2094 = vmatmul.mubr.f32.gmra.mrb[0].mxu0 %v1992
      %v2095 = vpop.f32.mrb[0].mxu0
      %v2096 = vadd.f32 %v1967, %v2095
      %v2097 = vpop.f32.mrb[0].mxu0
      %2098 = vdwg.mxu0
      %v2099 = vld [vmem:[#allocation3 + $0x9] sm:$0xff]
      %v2100 = vld [vmem:[#allocation3 + $0x21] sm:$0xff]
      %v2101 = vld [vmem:[#allocation3 + $0x39] sm:$0xff]
      %v2102 = vld [vmem:[#allocation3 + $0x51] sm:$0xff]
      %v2103 = vld [vmem:[#allocation3 + $0x69] sm:$0xff]
      %v2104 = vld [vmem:[#allocation3 + $0x81] sm:$0xff]
      %v2105 = vld [vmem:[#allocation3 + $0x99] sm:$0xff]
      %v2106 = vld [vmem:[#allocation3 + $0xb1] sm:$0xff]
      %s2107 = scalar_lea.vmem %s4, 16
      %v2108 = vld [vmem:[%s2107] sm:$0xff]
      %v2110 = vsel %vm1789, %v2099, 0
      %v2113 = vsel %vm1789, %v2100, 0
      %v2116 = vsel %vm1789, %v2101, 0
      %v2119 = vsel %vm1789, %v2102, 0
      %v2122 = vsel %vm1789, %v2103, 0
      %v2125 = vsel %vm1789, %v2104, 0
      %v2128 = vsel %vm1789, %v2105, 0
      %v2131 = vsel %vm1789, %v2106, 0
      %2133 = vmatprep.subr.mxu0 0.0
      %2134 = vmatpush1.msra.mxu0 %v2108
      %2135 = vmatprep.subr.mxu0 0.0
      %2136 = vmatpush1.msra.mxu0 0.0
      %2137 = vmatprep.subr.mxu0 0.0
      %2138 = vmatpush1.msra.mxu0 0.0
      %2139 = vmatprep.subr.mxu0 0.0
      %2140 = vmatpush1.msra.mxu0 0.0
      %2141 = vmatprep.subr.mxu0 0.0
      %2142 = vmatpush1.msra.mxu0 0.0
      %2143 = vmatprep.subr.mxu0 0.0
      %2144 = vmatpush1.msra.mxu0 0.0
      %2145 = vmatprep.subr.mxu0 0.0
      %2146 = vmatpush1.msra.mxu0 0.0
      %2147 = vmatprep.subr.mxu0 0.0
      %2148 = vmatpush1.msra.mxu0 0.0
      %2149 = vmatprep.subr.mxu0 0.0
      %2150 = vmatpush1.msra.mxu0 0.0
      %2151 = vmatprep.subr.mxu0 0.0
      %2152 = vmatpush1.msra.mxu0 0.0
      %2153 = vmatprep.subr.mxu0 0.0
      %2154 = vmatpush1.msra.mxu0 0.0
      %2155 = vmatprep.subr.mxu0 0.0
      %2156 = vmatpush1.msra.mxu0 0.0
      %2157 = vmatprep.subr.mxu0 0.0
      %2158 = vmatpush1.msra.mxu0 0.0
      %2159 = vmatprep.subr.mxu0 0.0
      %2160 = vmatpush1.msra.mxu0 0.0
      %2161 = vmatprep.subr.mxu0 0.0
      %2162 = vmatpush1.msra.mxu0 0.0
      %2163 = vmatprep.subr.mxu0 0.0
      %2164 = vmatpush1.msra.mxu0 0.0
      %2165 = vmatprep.subr.mxu0 0.0
      %2166 = vmatpush1.msra.mxu0 0.0
      %2167 = vmatprep.subr.mxu0 0.0
      %2168 = vmatpush1.msra.mxu0 0.0
      %2169 = vmatprep.subr.mxu0 0.0
      %2170 = vmatpush1.msra.mxu0 0.0
      %2171 = vmatprep.subr.mxu0 0.0
      %2172 = vmatpush1.msra.mxu0 0.0
      %2173 = vmatprep.subr.mxu0 0.0
      %2174 = vmatpush1.msra.mxu0 0.0
      %2175 = vmatprep.subr.mxu0 0.0
      %2176 = vmatpush1.msra.mxu0 0.0
      %2177 = vmatprep.subr.mxu0 0.0
      %2178 = vmatpush1.msra.mxu0 0.0
      %2179 = vmatprep.subr.mxu0 0.0
      %2180 = vmatpush1.msra.mxu0 0.0
      %2181 = vmatprep.subr.mxu0 0.0
      %2182 = vmatpush1.msra.mxu0 0.0
      %2183 = vmatprep.subr.mxu0 0.0
      %2184 = vmatpush1.msra.mxu0 0.0
      %2185 = vmatprep.subr.mxu0 0.0
      %2186 = vmatpush1.msra.mxu0 0.0
      %2187 = vmatprep.subr.mxu0 0.0
      %2188 = vmatpush1.msra.mxu0 0.0
      %2189 = vmatprep.subr.mxu0 0.0
      %2190 = vmatpush1.msra.mxu0 0.0
      %2191 = vmatprep.subr.mxu0 0.0
      %2192 = vmatpush1.msra.mxu0 0.0
      %2193 = vmatprep.subr.mxu0 0.0
      %2194 = vmatpush1.msra.mxu0 0.0
      %2195 = vmatprep.subr.mxu0 0.0
      %2196 = vmatpush1.msra.mxu0 0.0
      %2197 = vmatprep.mubr.f32.mxu0 0.0
      %2198 = vmatmul.mubr.f32.gmra.mrb[0].mxu0 %v2110
      %v2199 = vpop.f32.mrb[0].mxu0
      %v2200 = vadd.f32 0.0, %v2199
      %v2201 = vpop.f32.mrb[0].mxu0
      %2202 = vmatprep.mubr.f32.mxu0 0.0
      %2203 = vmatmul.mubr.f32.gmra.mrb[0].mxu0 %v2113
      %v2204 = vpop.f32.mrb[0].mxu0
      %v2205 = vadd.f32 0.0, %v2204
      %v2206 = vpop.f32.mrb[0].mxu0
      %2207 = vmatprep.mubr.f32.mxu0 0.0
      %2208 = vmatmul.mubr.f32.gmra.mrb[0].mxu0 %v2116
      %v2209 = vpop.f32.mrb[0].mxu0
      %v2210 = vadd.f32 0.0, %v2209
      %v2211 = vpop.f32.mrb[0].mxu0
      %2212 = vmatprep.mubr.f32.mxu0 0.0
      %2213 = vmatmul.mubr.f32.gmra.mrb[0].mxu0 %v2119
      %v2214 = vpop.f32.mrb[0].mxu0
      %v2215 = vadd.f32 0.0, %v2214
      %v2216 = vpop.f32.mrb[0].mxu0
      %2217 = vmatprep.mubr.f32.mxu0 0.0
      %2218 = vmatmul.mubr.f32.gmra.mrb[0].mxu0 %v2122
      %v2219 = vpop.f32.mrb[0].mxu0
      %v2220 = vadd.f32 0.0, %v2219
      %v2221 = vpop.f32.mrb[0].mxu0
      %2222 = vmatprep.mubr.f32.mxu0 0.0
      %2223 = vmatmul.mubr.f32.gmra.mrb[0].mxu0 %v2125
      %v2224 = vpop.f32.mrb[0].mxu0
      %v2225 = vadd.f32 0.0, %v2224
      %v2226 = vpop.f32.mrb[0].mxu0
      %2227 = vmatprep.mubr.f32.mxu0 0.0
      %2228 = vmatmul.mubr.f32.gmra.mrb[0].mxu0 %v2128
      %v2229 = vpop.f32.mrb[0].mxu0
      %v2230 = vadd.f32 0.0, %v2229
      %v2231 = vpop.f32.mrb[0].mxu0
      %2232 = vmatprep.mubr.f32.mxu0 0.0
      %2233 = vmatmul.mubr.f32.gmra.mrb[0].mxu0 %v2131
      %v2234 = vpop.f32.mrb[0].mxu0
      %v2235 = vadd.f32 0.0, %v2234
      %v2236 = vpop.f32.mrb[0].mxu0
      %2237 = vdwg.mxu0
      %v2238 = vadd.f32 %v2061, %v2200
      %v2239 = vadd.f32 %v2066, %v2205
      %v2240 = vadd.f32 %v2071, %v2210
      %v2241 = vadd.f32 %v2076, %v2215
      %v2242 = vadd.f32 %v2081, %v2220
      %v2243 = vadd.f32 %v2086, %v2225
      %v2244 = vadd.f32 %v2091, %v2230
      %v2245 = vadd.f32 %v2096, %v2235
      %v2246 = vld [vmem:[%s1797 + $0x7] sm:$0xff]
      %v2247 = vld [vmem:[%s1797 + $0x1f] sm:$0xff]
      %v2248 = vld [vmem:[%s1797 + $0x37] sm:$0xff]
      %v2249 = vld [vmem:[%s1797 + $0x4f] sm:$0xff]
      %v2250 = vld [vmem:[%s1797 + $0x67] sm:$0xff]
      %v2251 = vld [vmem:[%s1797 + $0x7f] sm:$0xff]
      %v2252 = vld [vmem:[%s1797 + $0x97] sm:$0xff]
      %v2253 = vld [vmem:[%s1797 + $0xaf] sm:$0xff]
      %s2254 = scalar_lea.vmem %s4, 24
      %v2255 = vld [vmem:[%s2254] sm:$0xff]
      %v2257 = vsel %vm1789, %v2246, 0
      %v2260 = vsel %vm1789, %v2247, 0
      %v2263 = vsel %vm1789, %v2248, 0
      %v2266 = vsel %vm1789, %v2249, 0
      %v2269 = vsel %vm1789, %v2250, 0
      %v2272 = vsel %vm1789, %v2251, 0
      %v2275 = vsel %vm1789, %v2252, 0
      %v2278 = vsel %vm1789, %v2253, 0
      %2280 = vmatprep.subr.mxu0 0.0
      %2281 = vmatpush1.msra.mxu0 %v2255
      %2282 = vmatprep.subr.mxu0 0.0
      %2283 = vmatpush1.msra.mxu0 0.0
      %2284 = vmatprep.subr.mxu0 0.0
      %2285 = vmatpush1.msra.mxu0 0.0
      %2286 = vmatprep.subr.mxu0 0.0
      %2287 = vmatpush1.msra.mxu0 0.0
      %2288 = vmatprep.subr.mxu0 0.0
      %2289 = vmatpush1.msra.mxu0 0.0
      %2290 = vmatprep.subr.mxu0 0.0
      %2291 = vmatpush1.msra.mxu0 0.0
      %2292 = vmatprep.subr.mxu0 0.0
      %2293 = vmatpush1.msra.mxu0 0.0
      %2294 = vmatprep.subr.mxu0 0.0
      %2295 = vmatpush1.msra.mxu0 0.0
      %2296 = vmatprep.subr.mxu0 0.0
      %2297 = vmatpush1.msra.mxu0 0.0
      %2298 = vmatprep.subr.mxu0 0.0
      %2299 = vmatpush1.msra.mxu0 0.0
      %2300 = vmatprep.subr.mxu0 0.0
      %2301 = vmatpush1.msra.mxu0 0.0
      %2302 = vmatprep.subr.mxu0 0.0
      %2303 = vmatpush1.msra.mxu0 0.0
      %2304 = vmatprep.subr.mxu0 0.0
      %2305 = vmatpush1.msra.mxu0 0.0
      %2306 = vmatprep.subr.mxu0 0.0
      %2307 = vmatpush1.msra.mxu0 0.0
      %2308 = vmatprep.subr.mxu0 0.0
      %2309 = vmatpush1.msra.mxu0 0.0
      %2310 = vmatprep.subr.mxu0 0.0
      %2311 = vmatpush1.msra.mxu0 0.0
      %2312 = vmatprep.subr.mxu0 0.0
      %2313 = vmatpush1.msra.mxu0 0.0
      %2314 = vmatprep.subr.mxu0 0.0
      %2315 = vmatpush1.msra.mxu0 0.0
      %2316 = vmatprep.subr.mxu0 0.0
      %2317 = vmatpush1.msra.mxu0 0.0
      %2318 = vmatprep.subr.mxu0 0.0
      %2319 = vmatpush1.msra.mxu0 0.0
      %2320 = vmatprep.subr.mxu0 0.0
      %2321 = vmatpush1.msra.mxu0 0.0
      %2322 = vmatprep.subr.mxu0 0.0
      %2323 = vmatpush1.msra.mxu0 0.0
      %2324 = vmatprep.subr.mxu0 0.0
      %2325 = vmatpush1.msra.mxu0 0.0
      %2326 = vmatprep.subr.mxu0 0.0
      %2327 = vmatpush1.msra.mxu0 0.0
      %2328 = vmatprep.subr.mxu0 0.0
      %2329 = vmatpush1.msra.mxu0 0.0
      %2330 = vmatprep.subr.mxu0 0.0
      %2331 = vmatpush1.msra.mxu0 0.0
      %2332 = vmatprep.subr.mxu0 0.0
      %2333 = vmatpush1.msra.mxu0 0.0
      %2334 = vmatprep.subr.mxu0 0.0
      %2335 = vmatpush1.msra.mxu0 0.0
      %2336 = vmatprep.subr.mxu0 0.0
      %2337 = vmatpush1.msra.mxu0 0.0
      %2338 = vmatprep.subr.mxu0 0.0
      %2339 = vmatpush1.msra.mxu0 0.0
      %2340 = vmatprep.subr.mxu0 0.0
      %2341 = vmatpush1.msra.mxu0 0.0
      %2342 = vmatprep.subr.mxu0 0.0
      %2343 = vmatpush1.msra.mxu0 0.0
      %2344 = vmatprep.mubr.f32.mxu0 0.0
      %2345 = vmatmul.mubr.f32.gmra.mrb[0].mxu0 %v2257
      %v2346 = vpop.f32.mrb[0].mxu0
      %v2347 = vadd.f32 0.0, %v2346
      %v2348 = vpop.f32.mrb[0].mxu0
      %2349 = vmatprep.mubr.f32.mxu0 0.0
      %2350 = vmatmul.mubr.f32.gmra.mrb[0].mxu0 %v2260
      %v2351 = vpop.f32.mrb[0].mxu0
      %v2352 = vadd.f32 0.0, %v2351
      %v2353 = vpop.f32.mrb[0].mxu0
      %2354 = vmatprep.mubr.f32.mxu0 0.0
      %2355 = vmatmul.mubr.f32.gmra.mrb[0].mxu0 %v2263
      %v2356 = vpop.f32.mrb[0].mxu0
      %v2357 = vadd.f32 0.0, %v2356
      %v2358 = vpop.f32.mrb[0].mxu0
      %2359 = vmatprep.mubr.f32.mxu0 0.0
      %2360 = vmatmul.mubr.f32.gmra.mrb[0].mxu0 %v2266
      %v2361 = vpop.f32.mrb[0].mxu0
      %v2362 = vadd.f32 0.0, %v2361
      %v2363 = vpop.f32.mrb[0].mxu0
      %2364 = vmatprep.mubr.f32.mxu0 0.0
      %2365 = vmatmul.mubr.f32.gmra.mrb[0].mxu0 %v2269
      %v2366 = vpop.f32.mrb[0].mxu0
      %v2367 = vadd.f32 0.0, %v2366
      %v2368 = vpop.f32.mrb[0].mxu0
      %2369 = vmatprep.mubr.f32.mxu0 0.0
      %2370 = vmatmul.mubr.f32.gmra.mrb[0].mxu0 %v2272
      %v2371 = vpop.f32.mrb[0].mxu0
      %v2372 = vadd.f32 0.0, %v2371
      %v2373 = vpop.f32.mrb[0].mxu0
      %2374 = vmatprep.mubr.f32.mxu0 0.0
      %2375 = vmatmul.mubr.f32.gmra.mrb[0].mxu0 %v2275
      %v2376 = vpop.f32.mrb[0].mxu0
      %v2377 = vadd.f32 0.0, %v2376
      %v2378 = vpop.f32.mrb[0].mxu0
      %2379 = vmatprep.mubr.f32.mxu0 0.0
      %2380 = vmatmul.mubr.f32.gmra.mrb[0].mxu0 %v2278
      %v2381 = vpop.f32.mrb[0].mxu0
      %v2382 = vadd.f32 0.0, %v2381
      %v2383 = vpop.f32.mrb[0].mxu0
      %2384 = vdwg.mxu0
      %v2385 = vadd.f32 %v2238, %v2347
      %v2386 = vadd.f32 %v2239, %v2352
      %v2387 = vadd.f32 %v2240, %v2357
      %v2388 = vadd.f32 %v2241, %v2362
      %v2389 = vadd.f32 %v2242, %v2367
      %v2390 = vadd.f32 %v2243, %v2372
      %v2391 = vadd.f32 %v2244, %v2377
      %v2392 = vadd.f32 %v2245, %v2382
      %v2393 = vld [vmem:[%s1797 + $0x8] sm:$0xff]
      %v2394 = vld [vmem:[%s1797 + $0x20] sm:$0xff]
      %v2395 = vld [vmem:[%s1797 + $0x38] sm:$0xff]
      %v2396 = vld [vmem:[%s1797 + $0x50] sm:$0xff]
      %v2397 = vld [vmem:[%s1797 + $0x68] sm:$0xff]
      %v2398 = vld [vmem:[%s1797 + $0x80] sm:$0xff]
      %v2399 = vld [vmem:[%s1797 + $0x98] sm:$0xff]
      %v2400 = vld [vmem:[%s1797 + $0xb0] sm:$0xff]
      %s2401 = scalar_lea.vmem %s4, 32
      %v2402 = vld [vmem:[%s2401] sm:$0xff]
      %v2404 = vsel %vm1789, %v2393, 0
      %v2407 = vsel %vm1789, %v2394, 0
      %v2410 = vsel %vm1789, %v2395, 0
      %v2413 = vsel %vm1789, %v2396, 0
      %v2416 = vsel %vm1789, %v2397, 0
      %v2419 = vsel %vm1789, %v2398, 0
      %v2422 = vsel %vm1789, %v2399, 0
      %v2425 = vsel %vm1789, %v2400, 0
      %2427 = vmatprep.subr.mxu0 0.0
      %2428 = vmatpush1.msra.mxu0 %v2402
      %2429 = vmatprep.subr.mxu0 0.0
      %2430 = vmatpush1.msra.mxu0 0.0
      %2431 = vmatprep.subr.mxu0 0.0
      %2432 = vmatpush1.msra.mxu0 0.0
      %2433 = vmatprep.subr.mxu0 0.0
      %2434 = vmatpush1.msra.mxu0 0.0
      %2435 = vmatprep.subr.mxu0 0.0
      %2436 = vmatpush1.msra.mxu0 0.0
      %2437 = vmatprep.subr.mxu0 0.0
      %2438 = vmatpush1.msra.mxu0 0.0
      %2439 = vmatprep.subr.mxu0 0.0
      %2440 = vmatpush1.msra.mxu0 0.0
      %2441 = vmatprep.subr.mxu0 0.0
      %2442 = vmatpush1.msra.mxu0 0.0
      %2443 = vmatprep.subr.mxu0 0.0
      %2444 = vmatpush1.msra.mxu0 0.0
      %2445 = vmatprep.subr.mxu0 0.0
      %2446 = vmatpush1.msra.mxu0 0.0
      %2447 = vmatprep.subr.mxu0 0.0
      %2448 = vmatpush1.msra.mxu0 0.0
      %2449 = vmatprep.subr.mxu0 0.0
      %2450 = vmatpush1.msra.mxu0 0.0
      %2451 = vmatprep.subr.mxu0 0.0
      %2452 = vmatpush1.msra.mxu0 0.0
      %2453 = vmatprep.subr.mxu0 0.0
      %2454 = vmatpush1.msra.mxu0 0.0
      %2455 = vmatprep.subr.mxu0 0.0
      %2456 = vmatpush1.msra.mxu0 0.0
      %2457 = vmatprep.subr.mxu0 0.0
      %2458 = vmatpush1.msra.mxu0 0.0
      %2459 = vmatprep.subr.mxu0 0.0
      %2460 = vmatpush1.msra.mxu0 0.0
      %2461 = vmatprep.subr.mxu0 0.0
      %2462 = vmatpush1.msra.mxu0 0.0
      %2463 = vmatprep.subr.mxu0 0.0
      %2464 = vmatpush1.msra.mxu0 0.0
      %2465 = vmatprep.subr.mxu0 0.0
      %2466 = vmatpush1.msra.mxu0 0.0
      %2467 = vmatprep.subr.mxu0 0.0
      %2468 = vmatpush1.msra.mxu0 0.0
      %2469 = vmatprep.subr.mxu0 0.0
      %2470 = vmatpush1.msra.mxu0 0.0
      %2471 = vmatprep.subr.mxu0 0.0
      %2472 = vmatpush1.msra.mxu0 0.0
      %2473 = vmatprep.subr.mxu0 0.0
      %2474 = vmatpush1.msra.mxu0 0.0
      %2475 = vmatprep.subr.mxu0 0.0
      %2476 = vmatpush1.msra.mxu0 0.0
      %2477 = vmatprep.subr.mxu0 0.0
      %2478 = vmatpush1.msra.mxu0 0.0
      %2479 = vmatprep.subr.mxu0 0.0
      %2480 = vmatpush1.msra.mxu0 0.0
      %2481 = vmatprep.subr.mxu0 0.0
      %2482 = vmatpush1.msra.mxu0 0.0
      %2483 = vmatprep.subr.mxu0 0.0
      %2484 = vmatpush1.msra.mxu0 0.0
      %2485 = vmatprep.subr.mxu0 0.0
      %2486 = vmatpush1.msra.mxu0 0.0
      %2487 = vmatprep.subr.mxu0 0.0
      %2488 = vmatpush1.msra.mxu0 0.0
      %2489 = vmatprep.subr.mxu0 0.0
      %2490 = vmatpush1.msra.mxu0 0.0
      %2491 = vmatprep.mubr.f32.mxu0 0.0
      %2492 = vmatmul.mubr.f32.gmra.mrb[0].mxu0 %v2404
      %v2493 = vpop.f32.mrb[0].mxu0
      %v2494 = vadd.f32 0.0, %v2493
      %v2495 = vpop.f32.mrb[0].mxu0
      %2496 = vmatprep.mubr.f32.mxu0 0.0
      %2497 = vmatmul.mubr.f32.gmra.mrb[0].mxu0 %v2407
      %v2498 = vpop.f32.mrb[0].mxu0
      %v2499 = vadd.f32 0.0, %v2498
      %v2500 = vpop.f32.mrb[0].mxu0
      %2501 = vmatprep.mubr.f32.mxu0 0.0
      %2502 = vmatmul.mubr.f32.gmra.mrb[0].mxu0 %v2410
      %v2503 = vpop.f32.mrb[0].mxu0
      %v2504 = vadd.f32 0.0, %v2503
      %v2505 = vpop.f32.mrb[0].mxu0
      %2506 = vmatprep.mubr.f32.mxu0 0.0
      %2507 = vmatmul.mubr.f32.gmra.mrb[0].mxu0 %v2413
      %v2508 = vpop.f32.mrb[0].mxu0
      %v2509 = vadd.f32 0.0, %v2508
      %v2510 = vpop.f32.mrb[0].mxu0
      %2511 = vmatprep.mubr.f32.mxu0 0.0
      %2512 = vmatmul.mubr.f32.gmra.mrb[0].mxu0 %v2416
      %v2513 = vpop.f32.mrb[0].mxu0
      %v2514 = vadd.f32 0.0, %v2513
      %v2515 = vpop.f32.mrb[0].mxu0
      %2516 = vmatprep.mubr.f32.mxu0 0.0
      %2517 = vmatmul.mubr.f32.gmra.mrb[0].mxu0 %v2419
      %v2518 = vpop.f32.mrb[0].mxu0
      %v2519 = vadd.f32 0.0, %v2518
      %v2520 = vpop.f32.mrb[0].mxu0
      %2521 = vmatprep.mubr.f32.mxu0 0.0
      %2522 = vmatmul.mubr.f32.gmra.mrb[0].mxu0 %v2422
      %v2523 = vpop.f32.mrb[0].mxu0
      %v2524 = vadd.f32 0.0, %v2523
      %v2525 = vpop.f32.mrb[0].mxu0
      %2526 = vmatprep.mubr.f32.mxu0 0.0
      %2527 = vmatmul.mubr.f32.gmra.mrb[0].mxu0 %v2425
      %v2528 = vpop.f32.mrb[0].mxu0
      %v2529 = vadd.f32 0.0, %v2528
      %v2530 = vpop.f32.mrb[0].mxu0
      %2531 = vdwg.mxu0
      %v2532 = vadd.f32 %v2385, %v2494
      %v2533 = vadd.f32 %v2386, %v2499
      %v2534 = vadd.f32 %v2387, %v2504
      %v2535 = vadd.f32 %v2388, %v2509
      %v2536 = vadd.f32 %v2389, %v2514
      %v2537 = vadd.f32 %v2390, %v2519
      %v2538 = vadd.f32 %v2391, %v2524
      %v2539 = vadd.f32 %v2392, %v2529
      %v2540 = vld [vmem:[%s1797 + $0x9] sm:$0xff]
      %v2541 = vld [vmem:[%s1797 + $0x21] sm:$0xff]
      %v2542 = vld [vmem:[%s1797 + $0x39] sm:$0xff]
      %v2543 = vld [vmem:[%s1797 + $0x51] sm:$0xff]
      %v2544 = vld [vmem:[%s1797 + $0x69] sm:$0xff]
      %v2545 = vld [vmem:[%s1797 + $0x81] sm:$0xff]
      %v2546 = vld [vmem:[%s1797 + $0x99] sm:$0xff]
      %v2547 = vld [vmem:[%s1797 + $0xb1] sm:$0xff]
      %s2548 = scalar_lea.vmem %s4, 40
      %v2549 = vld [vmem:[%s2548] sm:$0xff]
      %v2551 = vsel %vm1789, %v2540, 0
      %v2554 = vsel %vm1789, %v2541, 0
      %v2557 = vsel %vm1789, %v2542, 0
      %v2560 = vsel %vm1789, %v2543, 0
      %v2563 = vsel %vm1789, %v2544, 0
      %v2566 = vsel %vm1789, %v2545, 0
      %v2569 = vsel %vm1789, %v2546, 0
      %v2572 = vsel %vm1789, %v2547, 0
      %2574 = vmatprep.subr.mxu0 0.0
      %2575 = vmatpush1.msra.mxu0 %v2549
      %2576 = vmatprep.subr.mxu0 0.0
      %2577 = vmatpush1.msra.mxu0 0.0
      %2578 = vmatprep.subr.mxu0 0.0
      %2579 = vmatpush1.msra.mxu0 0.0
      %2580 = vmatprep.subr.mxu0 0.0
      %2581 = vmatpush1.msra.mxu0 0.0
      %2582 = vmatprep.subr.mxu0 0.0
      %2583 = vmatpush1.msra.mxu0 0.0
      %2584 = vmatprep.subr.mxu0 0.0
      %2585 = vmatpush1.msra.mxu0 0.0
      %2586 = vmatprep.subr.mxu0 0.0
      %2587 = vmatpush1.msra.mxu0 0.0
      %2588 = vmatprep.subr.mxu0 0.0
      %2589 = vmatpush1.msra.mxu0 0.0
      %2590 = vmatprep.subr.mxu0 0.0
      %2591 = vmatpush1.msra.mxu0 0.0
      %2592 = vmatprep.subr.mxu0 0.0
      %2593 = vmatpush1.msra.mxu0 0.0
      %2594 = vmatprep.subr.mxu0 0.0
      %2595 = vmatpush1.msra.mxu0 0.0
      %2596 = vmatprep.subr.mxu0 0.0
      %2597 = vmatpush1.msra.mxu0 0.0
      %2598 = vmatprep.subr.mxu0 0.0
      %2599 = vmatpush1.msra.mxu0 0.0
      %2600 = vmatprep.subr.mxu0 0.0
      %2601 = vmatpush1.msra.mxu0 0.0
      %2602 = vmatprep.subr.mxu0 0.0
      %2603 = vmatpush1.msra.mxu0 0.0
      %2604 = vmatprep.subr.mxu0 0.0
      %2605 = vmatpush1.msra.mxu0 0.0
      %2606 = vmatprep.subr.mxu0 0.0
      %2607 = vmatpush1.msra.mxu0 0.0
      %2608 = vmatprep.subr.mxu0 0.0
      %2609 = vmatpush1.msra.mxu0 0.0
      %2610 = vmatprep.subr.mxu0 0.0
      %2611 = vmatpush1.msra.mxu0 0.0
      %2612 = vmatprep.subr.mxu0 0.0
      %2613 = vmatpush1.msra.mxu0 0.0
      %2614 = vmatprep.subr.mxu0 0.0
      %2615 = vmatpush1.msra.mxu0 0.0
      %2616 = vmatprep.subr.mxu0 0.0
      %2617 = vmatpush1.msra.mxu0 0.0
      %2618 = vmatprep.subr.mxu0 0.0
      %2619 = vmatpush1.msra.mxu0 0.0
      %2620 = vmatprep.subr.mxu0 0.0
      %2621 = vmatpush1.msra.mxu0 0.0
      %2622 = vmatprep.subr.mxu0 0.0
      %2623 = vmatpush1.msra.mxu0 0.0
      %2624 = vmatprep.subr.mxu0 0.0
      %2625 = vmatpush1.msra.mxu0 0.0
      %2626 = vmatprep.subr.mxu0 0.0
      %2627 = vmatpush1.msra.mxu0 0.0
      %2628 = vmatprep.subr.mxu0 0.0
      %2629 = vmatpush1.msra.mxu0 0.0
      %2630 = vmatprep.subr.mxu0 0.0
      %2631 = vmatpush1.msra.mxu0 0.0
      %2632 = vmatprep.subr.mxu0 0.0
      %2633 = vmatpush1.msra.mxu0 0.0
      %2634 = vmatprep.subr.mxu0 0.0
      %2635 = vmatpush1.msra.mxu0 0.0
      %2636 = vmatprep.subr.mxu0 0.0
      %2637 = vmatpush1.msra.mxu0 0.0
      %2638 = vmatprep.mubr.f32.mxu0 0.0
      %2639 = vmatmul.mubr.f32.gmra.mrb[0].mxu0 %v2551
      %v2640 = vpop.f32.mrb[0].mxu0
      %v2641 = vadd.f32 0.0, %v2640
      %v2642 = vpop.f32.mrb[0].mxu0
      %2643 = vmatprep.mubr.f32.mxu0 0.0
      %2644 = vmatmul.mubr.f32.gmra.mrb[0].mxu0 %v2554
      %v2645 = vpop.f32.mrb[0].mxu0
      %v2646 = vadd.f32 0.0, %v2645
      %v2647 = vpop.f32.mrb[0].mxu0
      %2648 = vmatprep.mubr.f32.mxu0 0.0
      %2649 = vmatmul.mubr.f32.gmra.mrb[0].mxu0 %v2557
      %v2650 = vpop.f32.mrb[0].mxu0
      %v2651 = vadd.f32 0.0, %v2650
      %v2652 = vpop.f32.mrb[0].mxu0
      %2653 = vmatprep.mubr.f32.mxu0 0.0
      %2654 = vmatmul.mubr.f32.gmra.mrb[0].mxu0 %v2560
      %v2655 = vpop.f32.mrb[0].mxu0
      %v2656 = vadd.f32 0.0, %v2655
      %v2657 = vpop.f32.mrb[0].mxu0
      %2658 = vmatprep.mubr.f32.mxu0 0.0
      %2659 = vmatmul.mubr.f32.gmra.mrb[0].mxu0 %v2563
      %v2660 = vpop.f32.mrb[0].mxu0
      %v2661 = vadd.f32 0.0, %v2660
      %v2662 = vpop.f32.mrb[0].mxu0
      %2663 = vmatprep.mubr.f32.mxu0 0.0
      %2664 = vmatmul.mubr.f32.gmra.mrb[0].mxu0 %v2566
      %v2665 = vpop.f32.mrb[0].mxu0
      %v2666 = vadd.f32 0.0, %v2665
      %v2667 = vpop.f32.mrb[0].mxu0
      %2668 = vmatprep.mubr.f32.mxu0 0.0
      %2669 = vmatmul.mubr.f32.gmra.mrb[0].mxu0 %v2569
      %v2670 = vpop.f32.mrb[0].mxu0
      %v2671 = vadd.f32 0.0, %v2670
      %v2672 = vpop.f32.mrb[0].mxu0
      %2673 = vmatprep.mubr.f32.mxu0 0.0
      %2674 = vmatmul.mubr.f32.gmra.mrb[0].mxu0 %v2572
      %v2675 = vpop.f32.mrb[0].mxu0
      %v2676 = vadd.f32 0.0, %v2675
      %v2677 = vpop.f32.mrb[0].mxu0
      %2678 = vdwg.mxu0
      %v2679 = vadd.f32 %v2532, %v2641
      %v2680 = vadd.f32 %v2533, %v2646
      %v2681 = vadd.f32 %v2534, %v2651
      %v2682 = vadd.f32 %v2535, %v2656
      %v2683 = vadd.f32 %v2536, %v2661
      %v2684 = vadd.f32 %v2537, %v2666
      %v2685 = vadd.f32 %v2538, %v2671
      %v2686 = vadd.f32 %v2539, %v2676
      %s2687 = scalar_lea.vmem [#allocation3], 48
      %v2688 = vld [vmem:[%s2687 + $0x7] sm:$0xff]
      %v2689 = vld [vmem:[%s2687 + $0x1f] sm:$0xff]
      %v2690 = vld [vmem:[%s2687 + $0x37] sm:$0xff]
      %v2691 = vld [vmem:[%s2687 + $0x4f] sm:$0xff]
      %v2692 = vld [vmem:[%s2687 + $0x67] sm:$0xff]
      %v2693 = vld [vmem:[%s2687 + $0x7f] sm:$0xff]
      %v2694 = vld [vmem:[%s2687 + $0x97] sm:$0xff]
      %v2695 = vld [vmem:[%s2687 + $0xaf] sm:$0xff]
      %s2696 = scalar_lea.vmem %s4, 48
      %v2697 = vld [vmem:[%s2696] sm:$0xff]
      %v2699 = vsel %vm1789, %v2688, 0
      %v2702 = vsel %vm1789, %v2689, 0
      %v2705 = vsel %vm1789, %v2690, 0
      %v2708 = vsel %vm1789, %v2691, 0
      %v2711 = vsel %vm1789, %v2692, 0
      %v2714 = vsel %vm1789, %v2693, 0
      %v2717 = vsel %vm1789, %v2694, 0
      %v2720 = vsel %vm1789, %v2695, 0
      %2722 = vmatprep.subr.mxu0 0.0
      %2723 = vmatpush1.msra.mxu0 %v2697
      %2724 = vmatprep.subr.mxu0 0.0
      %2725 = vmatpush1.msra.mxu0 0.0
      %2726 = vmatprep.subr.mxu0 0.0
      %2727 = vmatpush1.msra.mxu0 0.0
      %2728 = vmatprep.subr.mxu0 0.0
      %2729 = vmatpush1.msra.mxu0 0.0
      %2730 = vmatprep.subr.mxu0 0.0
      %2731 = vmatpush1.msra.mxu0 0.0
      %2732 = vmatprep.subr.mxu0 0.0
      %2733 = vmatpush1.msra.mxu0 0.0
      %2734 = vmatprep.subr.mxu0 0.0
      %2735 = vmatpush1.msra.mxu0 0.0
      %2736 = vmatprep.subr.mxu0 0.0
      %2737 = vmatpush1.msra.mxu0 0.0
      %2738 = vmatprep.subr.mxu0 0.0
      %2739 = vmatpush1.msra.mxu0 0.0
      %2740 = vmatprep.subr.mxu0 0.0
      %2741 = vmatpush1.msra.mxu0 0.0
      %2742 = vmatprep.subr.mxu0 0.0
      %2743 = vmatpush1.msra.mxu0 0.0
      %2744 = vmatprep.subr.mxu0 0.0
      %2745 = vmatpush1.msra.mxu0 0.0
      %2746 = vmatprep.subr.mxu0 0.0
      %2747 = vmatpush1.msra.mxu0 0.0
      %2748 = vmatprep.subr.mxu0 0.0
      %2749 = vmatpush1.msra.mxu0 0.0
      %2750 = vmatprep.subr.mxu0 0.0
      %2751 = vmatpush1.msra.mxu0 0.0
      %2752 = vmatprep.subr.mxu0 0.0
      %2753 = vmatpush1.msra.mxu0 0.0
      %2754 = vmatprep.subr.mxu0 0.0
      %2755 = vmatpush1.msra.mxu0 0.0
      %2756 = vmatprep.subr.mxu0 0.0
      %2757 = vmatpush1.msra.mxu0 0.0
      %2758 = vmatprep.subr.mxu0 0.0
      %2759 = vmatpush1.msra.mxu0 0.0
      %2760 = vmatprep.subr.mxu0 0.0
      %2761 = vmatpush1.msra.mxu0 0.0
      %2762 = vmatprep.subr.mxu0 0.0
      %2763 = vmatpush1.msra.mxu0 0.0
      %2764 = vmatprep.subr.mxu0 0.0
      %2765 = vmatpush1.msra.mxu0 0.0
      %2766 = vmatprep.subr.mxu0 0.0
      %2767 = vmatpush1.msra.mxu0 0.0
      %2768 = vmatprep.subr.mxu0 0.0
      %2769 = vmatpush1.msra.mxu0 0.0
      %2770 = vmatprep.subr.mxu0 0.0
      %2771 = vmatpush1.msra.mxu0 0.0
      %2772 = vmatprep.subr.mxu0 0.0
      %2773 = vmatpush1.msra.mxu0 0.0
      %2774 = vmatprep.subr.mxu0 0.0
      %2775 = vmatpush1.msra.mxu0 0.0
      %2776 = vmatprep.subr.mxu0 0.0
      %2777 = vmatpush1.msra.mxu0 0.0
      %2778 = vmatprep.subr.mxu0 0.0
      %2779 = vmatpush1.msra.mxu0 0.0
      %2780 = vmatprep.subr.mxu0 0.0
      %2781 = vmatpush1.msra.mxu0 0.0
      %2782 = vmatprep.subr.mxu0 0.0
      %2783 = vmatpush1.msra.mxu0 0.0
      %2784 = vmatprep.subr.mxu0 0.0
      %2785 = vmatpush1.msra.mxu0 0.0
      %2786 = vmatprep.mubr.f32.mxu0 0.0
      %2787 = vmatmul.mubr.f32.gmra.mrb[0].mxu0 %v2699
      %v2788 = vpop.f32.mrb[0].mxu0
      %v2789 = vadd.f32 0.0, %v2788
      %v2790 = vpop.f32.mrb[0].mxu0
      %2791 = vmatprep.mubr.f32.mxu0 0.0
      %2792 = vmatmul.mubr.f32.gmra.mrb[0].mxu0 %v2702
      %v2793 = vpop.f32.mrb[0].mxu0
      %v2794 = vadd.f32 0.0, %v2793
      %v2795 = vpop.f32.mrb[0].mxu0
      %2796 = vmatprep.mubr.f32.mxu0 0.0
      %2797 = vmatmul.mubr.f32.gmra.mrb[0].mxu0 %v2705
      %v2798 = vpop.f32.mrb[0].mxu0
      %v2799 = vadd.f32 0.0, %v2798
      %v2800 = vpop.f32.mrb[0].mxu0
      %2801 = vmatprep.mubr.f32.mxu0 0.0
      %2802 = vmatmul.mubr.f32.gmra.mrb[0].mxu0 %v2708
      %v2803 = vpop.f32.mrb[0].mxu0
      %v2804 = vadd.f32 0.0, %v2803
      %v2805 = vpop.f32.mrb[0].mxu0
      %2806 = vmatprep.mubr.f32.mxu0 0.0
      %2807 = vmatmul.mubr.f32.gmra.mrb[0].mxu0 %v2711
      %v2808 = vpop.f32.mrb[0].mxu0
      %v2809 = vadd.f32 0.0, %v2808
      %v2810 = vpop.f32.mrb[0].mxu0
      %2811 = vmatprep.mubr.f32.mxu0 0.0
      %2812 = vmatmul.mubr.f32.gmra.mrb[0].mxu0 %v2714
      %v2813 = vpop.f32.mrb[0].mxu0
      %v2814 = vadd.f32 0.0, %v2813
      %v2815 = vpop.f32.mrb[0].mxu0
      %2816 = vmatprep.mubr.f32.mxu0 0.0
      %2817 = vmatmul.mubr.f32.gmra.mrb[0].mxu0 %v2717
      %v2818 = vpop.f32.mrb[0].mxu0
      %v2819 = vadd.f32 0.0, %v2818
      %v2820 = vpop.f32.mrb[0].mxu0
      %2821 = vmatprep.mubr.f32.mxu0 0.0
      %2822 = vmatmul.mubr.f32.gmra.mrb[0].mxu0 %v2720
      %v2823 = vpop.f32.mrb[0].mxu0
      %v2824 = vadd.f32 0.0, %v2823
      %v2825 = vpop.f32.mrb[0].mxu0
      %2826 = vdwg.mxu0
      %v2827 = vadd.f32 %v2679, %v2789
      %v2828 = vadd.f32 %v2680, %v2794
      %v2829 = vadd.f32 %v2681, %v2799
      %v2830 = vadd.f32 %v2682, %v2804
      %v2831 = vadd.f32 %v2683, %v2809
      %v2832 = vadd.f32 %v2684, %v2814
      %v2833 = vadd.f32 %v2685, %v2819
      %v2834 = vadd.f32 %v2686, %v2824
      %v2835 = vld [vmem:[%s2687 + $0x8] sm:$0xff]
      %v2836 = vld [vmem:[%s2687 + $0x20] sm:$0xff]
      %v2837 = vld [vmem:[%s2687 + $0x38] sm:$0xff]
      %v2838 = vld [vmem:[%s2687 + $0x50] sm:$0xff]
      %v2839 = vld [vmem:[%s2687 + $0x68] sm:$0xff]
      %v2840 = vld [vmem:[%s2687 + $0x80] sm:$0xff]
      %v2841 = vld [vmem:[%s2687 + $0x98] sm:$0xff]
      %v2842 = vld [vmem:[%s2687 + $0xb0] sm:$0xff]
      %s2843 = scalar_lea.vmem %s4, 56
      %v2844 = vld [vmem:[%s2843] sm:$0xff]
      %v2846 = vsel %vm1789, %v2835, 0
      %v2849 = vsel %vm1789, %v2836, 0
      %v2852 = vsel %vm1789, %v2837, 0
      %v2855 = vsel %vm1789, %v2838, 0
      %v2858 = vsel %vm1789, %v2839, 0
      %v2861 = vsel %vm1789, %v2840, 0
      %v2864 = vsel %vm1789, %v2841, 0
      %v2867 = vsel %vm1789, %v2842, 0
      %2869 = vmatprep.subr.mxu0 0.0
      %2870 = vmatpush1.msra.mxu0 %v2844
      %2871 = vmatprep.subr.mxu0 0.0
      %2872 = vmatpush1.msra.mxu0 0.0
      %2873 = vmatprep.subr.mxu0 0.0
      %2874 = vmatpush1.msra.mxu0 0.0
      %2875 = vmatprep.subr.mxu0 0.0
      %2876 = vmatpush1.msra.mxu0 0.0
      %2877 = vmatprep.subr.mxu0 0.0
      %2878 = vmatpush1.msra.mxu0 0.0
      %2879 = vmatprep.subr.mxu0 0.0
      %2880 = vmatpush1.msra.mxu0 0.0
      %2881 = vmatprep.subr.mxu0 0.0
      %2882 = vmatpush1.msra.mxu0 0.0
      %2883 = vmatprep.subr.mxu0 0.0
      %2884 = vmatpush1.msra.mxu0 0.0
      %2885 = vmatprep.subr.mxu0 0.0
      %2886 = vmatpush1.msra.mxu0 0.0
      %2887 = vmatprep.subr.mxu0 0.0
      %2888 = vmatpush1.msra.mxu0 0.0
      %2889 = vmatprep.subr.mxu0 0.0
      %2890 = vmatpush1.msra.mxu0 0.0
      %2891 = vmatprep.subr.mxu0 0.0
      %2892 = vmatpush1.msra.mxu0 0.0
      %2893 = vmatprep.subr.mxu0 0.0
      %2894 = vmatpush1.msra.mxu0 0.0
      %2895 = vmatprep.subr.mxu0 0.0
      %2896 = vmatpush1.msra.mxu0 0.0
      %2897 = vmatprep.subr.mxu0 0.0
      %2898 = vmatpush1.msra.mxu0 0.0
      %2899 = vmatprep.subr.mxu0 0.0
      %2900 = vmatpush1.msra.mxu0 0.0
      %2901 = vmatprep.subr.mxu0 0.0
      %2902 = vmatpush1.msra.mxu0 0.0
      %2903 = vmatprep.subr.mxu0 0.0
      %2904 = vmatpush1.msra.mxu0 0.0
      %2905 = vmatprep.subr.mxu0 0.0
      %2906 = vmatpush1.msra.mxu0 0.0
      %2907 = vmatprep.subr.mxu0 0.0
      %2908 = vmatpush1.msra.mxu0 0.0
      %2909 = vmatprep.subr.mxu0 0.0
      %2910 = vmatpush1.msra.mxu0 0.0
      %2911 = vmatprep.subr.mxu0 0.0
      %2912 = vmatpush1.msra.mxu0 0.0
      %2913 = vmatprep.subr.mxu0 0.0
      %2914 = vmatpush1.msra.mxu0 0.0
      %2915 = vmatprep.subr.mxu0 0.0
      %2916 = vmatpush1.msra.mxu0 0.0
      %2917 = vmatprep.subr.mxu0 0.0
      %2918 = vmatpush1.msra.mxu0 0.0
      %2919 = vmatprep.subr.mxu0 0.0
      %2920 = vmatpush1.msra.mxu0 0.0
      %2921 = vmatprep.subr.mxu0 0.0
      %2922 = vmatpush1.msra.mxu0 0.0
      %2923 = vmatprep.subr.mxu0 0.0
      %2924 = vmatpush1.msra.mxu0 0.0
      %2925 = vmatprep.subr.mxu0 0.0
      %2926 = vmatpush1.msra.mxu0 0.0
      %2927 = vmatprep.subr.mxu0 0.0
      %2928 = vmatpush1.msra.mxu0 0.0
      %2929 = vmatprep.subr.mxu0 0.0
      %2930 = vmatpush1.msra.mxu0 0.0
      %2931 = vmatprep.subr.mxu0 0.0
      %2932 = vmatpush1.msra.mxu0 0.0
      %2933 = vmatprep.mubr.f32.mxu0 0.0
      %2934 = vmatmul.mubr.f32.gmra.mrb[0].mxu0 %v2846
      %v2935 = vpop.f32.mrb[0].mxu0
      %v2936 = vadd.f32 0.0, %v2935
      %v2937 = vpop.f32.mrb[0].mxu0
      %2938 = vmatprep.mubr.f32.mxu0 0.0
      %2939 = vmatmul.mubr.f32.gmra.mrb[0].mxu0 %v2849
      %v2940 = vpop.f32.mrb[0].mxu0
      %v2941 = vadd.f32 0.0, %v2940
      %v2942 = vpop.f32.mrb[0].mxu0
      %2943 = vmatprep.mubr.f32.mxu0 0.0
      %2944 = vmatmul.mubr.f32.gmra.mrb[0].mxu0 %v2852
      %v2945 = vpop.f32.mrb[0].mxu0
      %v2946 = vadd.f32 0.0, %v2945
      %v2947 = vpop.f32.mrb[0].mxu0
      %2948 = vmatprep.mubr.f32.mxu0 0.0
      %2949 = vmatmul.mubr.f32.gmra.mrb[0].mxu0 %v2855
      %v2950 = vpop.f32.mrb[0].mxu0
      %v2951 = vadd.f32 0.0, %v2950
      %v2952 = vpop.f32.mrb[0].mxu0
      %2953 = vmatprep.mubr.f32.mxu0 0.0
      %2954 = vmatmul.mubr.f32.gmra.mrb[0].mxu0 %v2858
      %v2955 = vpop.f32.mrb[0].mxu0
      %v2956 = vadd.f32 0.0, %v2955
      %v2957 = vpop.f32.mrb[0].mxu0
      %2958 = vmatprep.mubr.f32.mxu0 0.0
      %2959 = vmatmul.mubr.f32.gmra.mrb[0].mxu0 %v2861
      %v2960 = vpop.f32.mrb[0].mxu0
      %v2961 = vadd.f32 0.0, %v2960
      %v2962 = vpop.f32.mrb[0].mxu0
      %2963 = vmatprep.mubr.f32.mxu0 0.0
      %2964 = vmatmul.mubr.f32.gmra.mrb[0].mxu0 %v2864
      %v2965 = vpop.f32.mrb[0].mxu0
      %v2966 = vadd.f32 0.0, %v2965
      %v2967 = vpop.f32.mrb[0].mxu0
      %2968 = vmatprep.mubr.f32.mxu0 0.0
      %2969 = vmatmul.mubr.f32.gmra.mrb[0].mxu0 %v2867
      %v2970 = vpop.f32.mrb[0].mxu0
      %v2971 = vadd.f32 0.0, %v2970
      %v2972 = vpop.f32.mrb[0].mxu0
      %2973 = vdwg.mxu0
      %v2974 = vadd.f32 %v2827, %v2936
      %v2975 = vadd.f32 %v2828, %v2941
      %v2976 = vadd.f32 %v2829, %v2946
      %v2977 = vadd.f32 %v2830, %v2951
      %v2978 = vadd.f32 %v2831, %v2956
      %v2979 = vadd.f32 %v2832, %v2961
      %v2980 = vadd.f32 %v2833, %v2966
      %v2981 = vadd.f32 %v2834, %v2971
      %v2982 = vld [vmem:[%s2687 + $0x9] sm:$0xff]
      %v2983 = vld [vmem:[%s2687 + $0x21] sm:$0xff]
      %v2984 = vld [vmem:[%s2687 + $0x39] sm:$0xff]
      %v2985 = vld [vmem:[%s2687 + $0x51] sm:$0xff]
      %v2986 = vld [vmem:[%s2687 + $0x69] sm:$0xff]
      %v2987 = vld [vmem:[%s2687 + $0x81] sm:$0xff]
      %v2988 = vld [vmem:[%s2687 + $0x99] sm:$0xff]
      %v2989 = vld [vmem:[%s2687 + $0xb1] sm:$0xff]
      %s2990 = scalar_lea.vmem %s4, 64
      %v2991 = vld [vmem:[%s2990] sm:$0xff]
      %v2993 = vsel %vm1789, %v2982, 0
      %v2996 = vsel %vm1789, %v2983, 0
      %v2999 = vsel %vm1789, %v2984, 0
      %v3002 = vsel %vm1789, %v2985, 0
      %v3005 = vsel %vm1789, %v2986, 0
      %v3008 = vsel %vm1789, %v2987, 0
      %v3011 = vsel %vm1789, %v2988, 0
      %v3014 = vsel %vm1789, %v2989, 0
      %3016 = vmatprep.subr.mxu0 0.0
      %3017 = vmatpush1.msra.mxu0 %v2991
      %3018 = vmatprep.subr.mxu0 0.0
      %3019 = vmatpush1.msra.mxu0 0.0
      %3020 = vmatprep.subr.mxu0 0.0
      %3021 = vmatpush1.msra.mxu0 0.0
      %3022 = vmatprep.subr.mxu0 0.0
      %3023 = vmatpush1.msra.mxu0 0.0
      %3024 = vmatprep.subr.mxu0 0.0
      %3025 = vmatpush1.msra.mxu0 0.0
      %3026 = vmatprep.subr.mxu0 0.0
      %3027 = vmatpush1.msra.mxu0 0.0
      %3028 = vmatprep.subr.mxu0 0.0
      %3029 = vmatpush1.msra.mxu0 0.0
      %3030 = vmatprep.subr.mxu0 0.0
      %3031 = vmatpush1.msra.mxu0 0.0
      %3032 = vmatprep.subr.mxu0 0.0
      %3033 = vmatpush1.msra.mxu0 0.0
      %3034 = vmatprep.subr.mxu0 0.0
      %3035 = vmatpush1.msra.mxu0 0.0
      %3036 = vmatprep.subr.mxu0 0.0
      %3037 = vmatpush1.msra.mxu0 0.0
      %3038 = vmatprep.subr.mxu0 0.0
      %3039 = vmatpush1.msra.mxu0 0.0
      %3040 = vmatprep.subr.mxu0 0.0
      %3041 = vmatpush1.msra.mxu0 0.0
      %3042 = vmatprep.subr.mxu0 0.0
      %3043 = vmatpush1.msra.mxu0 0.0
      %3044 = vmatprep.subr.mxu0 0.0
      %3045 = vmatpush1.msra.mxu0 0.0
      %3046 = vmatprep.subr.mxu0 0.0
      %3047 = vmatpush1.msra.mxu0 0.0
      %3048 = vmatprep.subr.mxu0 0.0
      %3049 = vmatpush1.msra.mxu0 0.0
      %3050 = vmatprep.subr.mxu0 0.0
      %3051 = vmatpush1.msra.mxu0 0.0
      %3052 = vmatprep.subr.mxu0 0.0
      %3053 = vmatpush1.msra.mxu0 0.0
      %3054 = vmatprep.subr.mxu0 0.0
      %3055 = vmatpush1.msra.mxu0 0.0
      %3056 = vmatprep.subr.mxu0 0.0
      %3057 = vmatpush1.msra.mxu0 0.0
      %3058 = vmatprep.subr.mxu0 0.0
      %3059 = vmatpush1.msra.mxu0 0.0
      %3060 = vmatprep.subr.mxu0 0.0
      %3061 = vmatpush1.msra.mxu0 0.0
      %3062 = vmatprep.subr.mxu0 0.0
      %3063 = vmatpush1.msra.mxu0 0.0
      %3064 = vmatprep.subr.mxu0 0.0
      %3065 = vmatpush1.msra.mxu0 0.0
      %3066 = vmatprep.subr.mxu0 0.0
      %3067 = vmatpush1.msra.mxu0 0.0
      %3068 = vmatprep.subr.mxu0 0.0
      %3069 = vmatpush1.msra.mxu0 0.0
      %3070 = vmatprep.subr.mxu0 0.0
      %3071 = vmatpush1.msra.mxu0 0.0
      %3072 = vmatprep.subr.mxu0 0.0
      %3073 = vmatpush1.msra.mxu0 0.0
      %3074 = vmatprep.subr.mxu0 0.0
      %3075 = vmatpush1.msra.mxu0 0.0
      %3076 = vmatprep.subr.mxu0 0.0
      %3077 = vmatpush1.msra.mxu0 0.0
      %3078 = vmatprep.subr.mxu0 0.0
      %3079 = vmatpush1.msra.mxu0 0.0
      %3080 = vmatprep.mubr.f32.mxu0 0.0
      %3081 = vmatmul.mubr.f32.gmra.mrb[0].mxu0 %v2993
      %v3082 = vpop.f32.mrb[0].mxu0
      %v3083 = vadd.f32 0.0, %v3082
      %v3084 = vpop.f32.mrb[0].mxu0
      %3085 = vmatprep.mubr.f32.mxu0 0.0
      %3086 = vmatmul.mubr.f32.gmra.mrb[0].mxu0 %v2996
      %v3087 = vpop.f32.mrb[0].mxu0
      %v3088 = vadd.f32 0.0, %v3087
      %v3089 = vpop.f32.mrb[0].mxu0
      %3090 = vmatprep.mubr.f32.mxu0 0.0
      %3091 = vmatmul.mubr.f32.gmra.mrb[0].mxu0 %v2999
      %v3092 = vpop.f32.mrb[0].mxu0
      %v3093 = vadd.f32 0.0, %v3092
      %v3094 = vpop.f32.mrb[0].mxu0
      %3095 = vmatprep.mubr.f32.mxu0 0.0
      %3096 = vmatmul.mubr.f32.gmra.mrb[0].mxu0 %v3002
      %v3097 = vpop.f32.mrb[0].mxu0
      %v3098 = vadd.f32 0.0, %v3097
      %v3099 = vpop.f32.mrb[0].mxu0
      %3100 = vmatprep.mubr.f32.mxu0 0.0
      %3101 = vmatmul.mubr.f32.gmra.mrb[0].mxu0 %v3005
      %v3102 = vpop.f32.mrb[0].mxu0
      %v3103 = vadd.f32 0.0, %v3102
      %v3104 = vpop.f32.mrb[0].mxu0
      %3105 = vmatprep.mubr.f32.mxu0 0.0
      %3106 = vmatmul.mubr.f32.gmra.mrb[0].mxu0 %v3008
      %v3107 = vpop.f32.mrb[0].mxu0
      %v3108 = vadd.f32 0.0, %v3107
      %v3109 = vpop.f32.mrb[0].mxu0
      %3110 = vmatprep.mubr.f32.mxu0 0.0
      %3111 = vmatmul.mubr.f32.gmra.mrb[0].mxu0 %v3011
      %v3112 = vpop.f32.mrb[0].mxu0
      %v3113 = vadd.f32 0.0, %v3112
      %v3114 = vpop.f32.mrb[0].mxu0
      %3115 = vmatprep.mubr.f32.mxu0 0.0
      %3116 = vmatmul.mubr.f32.gmra.mrb[0].mxu0 %v3014
      %v3117 = vpop.f32.mrb[0].mxu0
      %v3118 = vadd.f32 0.0, %v3117
      %v3119 = vpop.f32.mrb[0].mxu0
      %3120 = vdwg.mxu0
      %v3121 = vadd.f32 %v2974, %v3083
      %v3122 = vadd.f32 %v2975, %v3088
      %v3123 = vadd.f32 %v2976, %v3093
      %v3124 = vadd.f32 %v2977, %v3098
      %v3125 = vadd.f32 %v2978, %v3103
      %v3126 = vadd.f32 %v2979, %v3108
      %v3127 = vadd.f32 %v2980, %v3113
      %v3128 = vadd.f32 %v2981, %v3118
      %v3129 = vld [vmem:[%s5] sm:$0x1]
      %v3131 = vlaneseq
      %v3132 = vshrl.u32 %v3131, 7
      %v3133 = vsub.s32 0, %v3132
      %v3134 = vrot.slane %v3129, %v3133
      %v3136 = vmul.f32 %v3121, %v3134
      %v3137 = vmul.f32 %v3122, %v3134
      %v3138 = vmul.f32 %v3123, %v3134
      %v3139 = vmul.f32 %v3124, %v3134
      %v3140 = vmul.f32 %v3125, %v3134
      %v3141 = vmul.f32 %v3126, %v3134
      %v3142 = vmul.f32 %v3127, %v3134
      %v3143 = vmul.f32 %v3128, %v3134
      %v3144 = vld [vmem:[%s6] sm:$0x1]
      %v3146 = vlaneseq
      %v3147 = vshrl.u32 %v3146, 7
      %v3148 = vsub.s32 0, %v3147
      %v3149 = vrot.slane %v3144, %v3148
      %v3151 = vadd.f32 %v3136, %v3149
      %v3152 = vadd.f32 %v3137, %v3149
      %v3153 = vadd.f32 %v3138, %v3149
      %v3154 = vadd.f32 %v3139, %v3149
      %v3155 = vadd.f32 %v3140, %v3149
      %v3156 = vadd.f32 %v3141, %v3149
      %v3157 = vadd.f32 %v3142, %v3149
      %v3158 = vadd.f32 %v3143, %v3149
      %v3159 = vmax.f32 %v3151, 0.0
      %v3160 = vmax.f32 %v3152, 0.0
      %v3161 = vmax.f32 %v3153, 0.0
      %v3162 = vmax.f32 %v3154, 0.0
      %v3163 = vmax.f32 %v3155, 0.0
      %v3164 = vmax.f32 %v3156, 0.0
      %v3165 = vmax.f32 %v3157, 0.0
      %v3166 = vmax.f32 %v3158, 0.0
      %3167 = vst.msk [vmem:[%s278] sm:$0xff] %vm1789, %v3159
      %3168 = vst.msk [vmem:[%s278 + $0x8] sm:$0xff] %vm1789, %v3160
      %3169 = vst.msk [vmem:[%s278 + $0x10] sm:$0xff] %vm1789, %v3161
      %3170 = vst.msk [vmem:[%s278 + $0x18] sm:$0xff] %vm1789, %v3162
      %3171 = vst.msk [vmem:[%s278 + $0x20] sm:$0xff] %vm1789, %v3163
      %3172 = vst.msk [vmem:[%s278 + $0x28] sm:$0xff] %vm1789, %v3164
      %3173 = vst.msk [vmem:[%s278 + $0x30] sm:$0xff] %vm1789, %v3165
      %3174 = vst.msk [vmem:[%s278 + $0x38] sm:$0xff] %vm1789, %v3166
      %p3175 = scmp.lt.s32.totalorder %s18, 1
      %s3176 = scalar_select %p3175, %s18, 1
      %s3177 = smul.addr %s3176, 8
      %s3178 = smul.addr %s3177, 8
      %s3179 = scalar_lea.vmem %s7, %s3178
      // Predicated region
      $region49: #{tpu_custom_call.1} parent=47 // pred_check
        %p3180 = pneg %p188
      $region50: #{tpu_custom_call.1} parent=47 // pred_check_branch
        %3182 = sbr.rel (%p3180) target = $region52
      $region51: #{tpu_custom_call.1} parent=47 // pred_region
        _
      $region52: #{tpu_custom_call.1} parent=47 // pred_fallthru
        _
    $region48: #{tpu_custom_call.1} parent=5 // pred_fallthru
      _
    %p3183 = scmp.le.s32.totalorder 2, %s13
    // Predicated region
    $region53: #{tpu_custom_call.1} parent=5 // pred_check
      %p3184 = pneg %p3183
    $region54: #{tpu_custom_call.1} parent=5 // pred_check_branch
      %3186 = sbr.rel (%p3184) target = $region56
    $region55: #{tpu_custom_call.1} parent=5 // pred_region
      %s3187 = ssub.s32 %s13, 2
      // Predicated region
      $region57: #{tpu_custom_call.1} parent=55 // pred_check
        %p3188 = pneg %p194
      $region58: #{tpu_custom_call.1} parent=55 // pred_check_branch
        %3190 = sbr.rel (%p3188) target = $region60
      $region59: #{tpu_custom_call.1} parent=55 // pred_region
        %p3191 = scmp.lt.s32.totalorder %s19, 1
        %s3192 = scalar_select %p3191, %s19, 1
        %s3193 = smul.addr %s3192, 8
        %s3194 = smul.addr %s3193, 8
        %s3195 = scalar_lea.vmem %s7, %s3194
      $region60: #{tpu_custom_call.1} parent=55 // pred_fallthru
        _
    $region56: #{tpu_custom_call.1} parent=5 // pred_fallthru
      _
  $region6: #{tpu_custom_call.1} parent=0 // loop_footer
    %s17 = sadd.s32 1, %s13
  $region7: #{tpu_custom_call.1} parent=0 // loop_footer_branch
    %12 = sbr.rel target = $region3
  $region8: #{tpu_custom_call.1} parent=0 // loop_exit
    _

</llo_original>
